<compile_context>
chip_gen: v5e
topology: v5e:2x2
jax: 0.10.0
libtpu: 0.0.40
codegen_flags: <defaults>
</compile_context>

<pallas_src>
import jax
import jax.numpy as jnp
from jax.experimental import pallas as pl
from jax.experimental.pallas import tpu as pltpu


LATENT_DIM = 64      # stand-in for args.latent_dim
OUT_DIM = 784
OUT_PAD = 896        # 7 * 128: lane-aligned padding of the 784-wide last layer
EPS = 1e-5
NEG_SLOPE = 0.2


# ----------------------------------------------------------------------------
# Kernel
# ----------------------------------------------------------------------------
def generator_kernel(z_ref,
                     w1_ref, w2_ref, w3_ref, w4_ref, w5_ref,
                     vec_ref,
                     o_ref):
    bf16 = jnp.bfloat16
    f32 = jnp.float32

    # Packed per-feature vectors, (8, 1024) f32, zero padded per row:
    #   row 0: b1 (128), row 1: g2 (256), row 2: be2 (256),
    #   row 3: g3 (512), row 4: be3 (512), row 5: g4 (1024), row 6: be4 (1024),
    #   row 7: b5 (784, zero-padded to 896)
    b1 = vec_ref[0:1, :128]
    g2 = vec_ref[1:2, :256]
    be2 = vec_ref[2:3, :256]
    g3 = vec_ref[3:4, :512]
    be3 = vec_ref[4:5, :512]
    g4 = vec_ref[5:6, :1024]
    be4 = vec_ref[6:7, :1024]
    b5 = vec_ref[7:8, :OUT_PAD]

    def dot_bf16(x, w_ref):
        # bf16 MXU operands, f32 accumulation.
        return jnp.dot(x.astype(bf16), w_ref[...], preferred_element_type=f32)

    def leaky(x):
        # slope 0.2 > 0  ->  max(x, 0.2 x) == LeakyReLU(0.2)
        return jnp.maximum(x, NEG_SLOPE * x)

    def bn(x, gamma, beta):
        # Training-mode BatchNorm1d (biased batch variance), folded into
        # one scale + one FMA; rsqrt goes to the EUP slot.
        mean = jnp.mean(x, axis=0, keepdims=True)
        c = x - mean
        var = jnp.mean(c * c, axis=0, keepdims=True)
        scale = gamma * jax.lax.rsqrt(var + EPS)
        return c * scale + beta

    z = z_ref[...]

    # Linear(latent, 128) + LeakyReLU(0.2)
    h = leaky(dot_bf16(z, w1_ref) + b1)

    # Linear(128, 256) [bias folded away] + BN(256) + LeakyReLU(0.2)
    h = leaky(bn(dot_bf16(h, w2_ref), g2, be2))

    # Linear(256, 512) [bias folded away] + BN(512) + LeakyReLU(0.2)
    h = leaky(bn(dot_bf16(h, w3_ref), g3, be3))

    # Linear(512, 1024) [bias folded away] + BN(1024) + LeakyReLU(0.2)
    h = leaky(bn(dot_bf16(h, w4_ref), g4, be4))

    # Linear(1024, 784->896 padded) + Tanh  (padded cols are exactly 0 -> 0)
    h = dot_bf16(h, w5_ref) + b5
    o_ref[...] = jnp.tanh(h)


# ----------------------------------------------------------------------------
# Wrapper
# ----------------------------------------------------------------------------
@jax.jit
def generator_forward(z, w1, w2, w3, w4, w5p, vecs):
    B = z.shape[0]
    vmem = pl.BlockSpec(memory_space=pltpu.MemorySpace.VMEM)
    out = pl.pallas_call(
        generator_kernel,
        out_shape=jax.ShapeDtypeStruct((B, OUT_PAD), jnp.float32),
        in_specs=[vmem] * 7,
        out_specs=vmem,
    )(z, w1, w2, w3, w4, w5p, vecs)
    # Strip the lane-alignment padding of the last layer.
    return out[:, :OUT_DIM]


def pack_params(params):
    """f32 PyTorch-style params -> (bf16 weights w/ padded w5, packed vecs)."""
    (w1, b1, w2, _b2, g2, be2, w3, _b3, g3, be3,
     w4, _b4, g4, be4, w5, b5) = params
    # b2/b3/b4 cancel exactly under training-mode BN mean subtraction -> drop.
    vecs = jnp.zeros((8, 1024), jnp.float32)
    vecs = vecs.at[0, :128].set(b1[0])
    vecs = vecs.at[1, :256].set(g2[0])
    vecs = vecs.at[2, :256].set(be2[0])
    vecs = vecs.at[3, :512].set(g3[0])
    vecs = vecs.at[4, :512].set(be3[0])
    vecs = vecs.at[5, :1024].set(g4[0])
    vecs = vecs.at[6, :1024].set(be4[0])
    vecs = vecs.at[7, :OUT_DIM].set(b5[0])
    # Lane-align the last layer: 784 -> 896 (= 7*128), zero-padded columns.
    w5p = jnp.zeros((w5.shape[0], OUT_PAD), jnp.float32).at[:, :OUT_DIM].set(w5)
    to_bf16 = lambda w: w.astype(jnp.bfloat16)
    return (to_bf16(w1), to_bf16(w2), to_bf16(w3), to_bf16(w4), to_bf16(w5p),
            vecs)


# ----------------------------------------------------------------------------
# Parameter init (PyTorch nn.Linear / nn.BatchNorm1d defaults)
# ----------------------------------------------------------------------------
def init_params(key):
    dims = [LATENT_DIM, 128, 256, 512, 1024, OUT_DIM]
    has_bn = [False, True, True, True, False]
    params = []
    keys = jax.random.split(key, 16)
    ki = 0
    for li in range(5):
        fan_in, fan_out = dims[li], dims[li + 1]
        bound = 1.0 / jnp.sqrt(fan_in)
        w = jax.random.uniform(keys[ki], (fan_in, fan_out),
                               minval=-bound, maxval=bound, dtype=jnp.float32)
        ki += 1
        b = jax.random.uniform(keys[ki], (1, fan_out),
                               minval=-bound, maxval=bound, dtype=jnp.float32)
        ki += 1
        params += [w, b]
        if has_bn[li]:
            params += [jnp.ones((1, fan_out), jnp.float32),
                       jnp.zeros((1, fan_out), jnp.float32)]
    return tuple(params)


# ----------------------------------------------------------------------------
# References
# ----------------------------------------------------------------------------
def _leaky(x):
    return jnp.maximum(x, NEG_SLOPE * x)


def _bn(x, g, b):
    m = x.mean(0, keepdims=True)
    c = x - m
    v = (c * c).mean(0, keepdims=True)
    return c * (g * jax.lax.rsqrt(v + EPS)) + b


def reference_bf16(z, params):
    """Mirrors the kernel numerics (bf16 MXU operands, f32 accumulate)."""
    (w1, b1, w2, _b2, g2, be2, w3, _b3, g3, be3,
     w4, _b4, g4, be4, w5, b5) = params
    bf16 = jnp.bfloat16

    def dot(x, w):
        return jnp.dot(x.astype(bf16), w.astype(bf16),
                       preferred_element_type=jnp.float32)

    h = _leaky(dot(z, w1) + b1)
    h = _leaky(_bn(dot(h, w2), g2, be2))
    h = _leaky(_bn(dot(h, w3), g3, be3))
    h = _leaky(_bn(dot(h, w4), g4, be4))
    return jnp.tanh(dot(h, w5) + b5)


def reference_f32(z, params):
    """Full-precision PyTorch-semantics forward (biases before BN included)."""
    (w1, b1, w2, b2, g2, be2, w3, b3, g3, be3,
     w4, b4, g4, be4, w5, b5) = params
    h = _leaky(z @ w1 + b1)
    h = _leaky(_bn(h @ w2 + b2, g2, be2))
    h = _leaky(_bn(h @ w3 + b3, g3, be3))
    h = _leaky(_bn(h @ w4 + b4, g4, be4))
    return jnp.tanh(h @ w5 + b5)


# ----------------------------------------------------------------------------
if __name__ == "__main__":
    key = jax.random.PRNGKey(0)
    k_param, k_z = jax.random.split(key)

    params = init_params(k_param)
    packed = pack_params(params)

    B = 8
    z = jax.random.normal(k_z, (B, LATENT_DIM), dtype=jnp.float32)

    out = generator_forward(z, *packed)
    out = jax.block_until_ready(out)
    assert out.shape == (B, OUT_DIM)

    # Tight check vs. a reference with identical (bf16-matmul) numerics.
    ref_b = reference_bf16(z, params)
    assert jnp.allclose(out, ref_b, atol=2e-3, rtol=2e-3), (
        float(jnp.max(jnp.abs(out - ref_b))))

    # Loose semantic check vs. the full f32 PyTorch-equivalent forward
    # (bf16 weights introduce ~0.2% relative error, bounded by tanh).
    ref_f = reference_f32(z, params)
    assert float(jnp.max(jnp.abs(out - ref_f))) < 0.1

    print("KERNEL_OK")
</pallas_src>

<mosaic_0001>
module attributes {stable_mosaic.version = 11 : i64} {
  func.func @generator_kernel(%arg0: memref<8x64xf32, #tpu.memory_space<vmem>>, %arg1: memref<64x128xbf16, #tpu.memory_space<vmem>>, %arg2: memref<128x256xbf16, #tpu.memory_space<vmem>>, %arg3: memref<256x512xbf16, #tpu.memory_space<vmem>>, %arg4: memref<512x1024xbf16, #tpu.memory_space<vmem>>, %arg5: memref<1024x896xbf16, #tpu.memory_space<vmem>>, %arg6: memref<8x1024xf32, #tpu.memory_space<vmem>>, %arg7: memref<8x896xf32, #tpu.memory_space<vmem>>) attributes {dimension_semantics = [], scalar_prefetch = 0 : i64, scratch_operands = 0 : i64, tpu.core_type = #tpu.core_type<tc>} {
    %c0 = arith.constant 0 : index
    %c0_0 = arith.constant 0 : index
    %0 = vector.load %arg6[%c0, %c0_0] : memref<8x1024xf32, #tpu.memory_space<vmem>>, vector<1x128xf32>
    %c1 = arith.constant 1 : index
    %c0_1 = arith.constant 0 : index
    %1 = vector.load %arg6[%c1, %c0_1] : memref<8x1024xf32, #tpu.memory_space<vmem>>, vector<1x256xf32>
    %c2 = arith.constant 2 : index
    %c0_2 = arith.constant 0 : index
    %2 = vector.load %arg6[%c2, %c0_2] : memref<8x1024xf32, #tpu.memory_space<vmem>>, vector<1x256xf32>
    %c3 = arith.constant 3 : index
    %c0_3 = arith.constant 0 : index
    %3 = vector.load %arg6[%c3, %c0_3] : memref<8x1024xf32, #tpu.memory_space<vmem>>, vector<1x512xf32>
    %c4 = arith.constant 4 : index
    %c0_4 = arith.constant 0 : index
    %4 = vector.load %arg6[%c4, %c0_4] : memref<8x1024xf32, #tpu.memory_space<vmem>>, vector<1x512xf32>
    %c5 = arith.constant 5 : index
    %c0_5 = arith.constant 0 : index
    %5 = vector.load %arg6[%c5, %c0_5] : memref<8x1024xf32, #tpu.memory_space<vmem>>, vector<1x1024xf32>
    %c6 = arith.constant 6 : index
    %c0_6 = arith.constant 0 : index
    %6 = vector.load %arg6[%c6, %c0_6] : memref<8x1024xf32, #tpu.memory_space<vmem>>, vector<1x1024xf32>
    %c7 = arith.constant 7 : index
    %c0_7 = arith.constant 0 : index
    %7 = vector.load %arg6[%c7, %c0_7] : memref<8x1024xf32, #tpu.memory_space<vmem>>, vector<1x896xf32>
    %c0_8 = arith.constant 0 : index
    %c0_9 = arith.constant 0 : index
    %8 = vector.load %arg0[%c0_8, %c0_9] : memref<8x64xf32, #tpu.memory_space<vmem>>, vector<8x64xf32>
    %9 = arith.truncf %8 : vector<8x64xf32> to vector<8x64xbf16>
    %c0_10 = arith.constant 0 : index
    %c0_11 = arith.constant 0 : index
    %10 = vector.load %arg1[%c0_10, %c0_11] : memref<64x128xbf16, #tpu.memory_space<vmem>>, vector<64x128xbf16>
    %cst = arith.constant dense<0.000000e+00> : vector<8x128xf32>
    %11 = tpu.matmul %9, %10, %cst {dimension_numbers = #tpu.dot_dimension_numbers<[1], [0], [0], [1], [0, 0, 1, 1], [], []>} : vector<8x64xbf16>, vector<64x128xbf16>, vector<8x128xf32> -> vector<8x128xf32>
    %12 = vector.broadcast %0 : vector<1x128xf32> to vector<8x128xf32>
    %13 = arith.addf %11, %12 : vector<8x128xf32>
    %cst_12 = arith.constant 2.000000e-01 : f32
    %14 = vector.broadcast %cst_12 : f32 to vector<8x128xf32>
    %15 = arith.mulf %14, %13 : vector<8x128xf32>
    %16 = arith.maximumf %13, %15 : vector<8x128xf32>
    %17 = arith.truncf %16 : vector<8x128xf32> to vector<8x128xbf16>
    %c0_13 = arith.constant 0 : index
    %c0_14 = arith.constant 0 : index
    %18 = vector.load %arg2[%c0_13, %c0_14] : memref<128x256xbf16, #tpu.memory_space<vmem>>, vector<128x256xbf16>
    %cst_15 = arith.constant dense<0.000000e+00> : vector<8x256xf32>
    %19 = tpu.matmul %17, %18, %cst_15 {dimension_numbers = #tpu.dot_dimension_numbers<[1], [0], [0], [1], [0, 0, 1, 1], [], []>} : vector<8x128xbf16>, vector<128x256xbf16>, vector<8x256xf32> -> vector<8x256xf32>
    %cst_16 = arith.constant dense<0.000000e+00> : vector<256xf32>
    %20 = vector.multi_reduction <add>, %19, %cst_16 [0] : vector<8x256xf32> to vector<256xf32>
    %21 = vector.shape_cast %20 : vector<256xf32> to vector<1x256xf32>
    %cst_17 = arith.constant 8.000000e+00 : f32
    %22 = vector.broadcast %cst_17 : f32 to vector<1x256xf32>
    %23 = arith.divf %21, %22 : vector<1x256xf32>
    %24 = vector.broadcast %23 : vector<1x256xf32> to vector<8x256xf32>
    %25 = arith.subf %19, %24 : vector<8x256xf32>
    %26 = arith.mulf %25, %25 : vector<8x256xf32>
    %cst_18 = arith.constant dense<0.000000e+00> : vector<256xf32>
    %27 = vector.multi_reduction <add>, %26, %cst_18 [0] : vector<8x256xf32> to vector<256xf32>
    %28 = vector.shape_cast %27 : vector<256xf32> to vector<1x256xf32>
    %cst_19 = arith.constant 8.000000e+00 : f32
    %29 = vector.broadcast %cst_19 : f32 to vector<1x256xf32>
    %30 = arith.divf %28, %29 : vector<1x256xf32>
    %cst_20 = arith.constant 9.99999974E-6 : f32
    %31 = vector.broadcast %cst_20 : f32 to vector<1x256xf32>
    %32 = arith.addf %30, %31 : vector<1x256xf32>
    %33 = math.rsqrt %32 : vector<1x256xf32>
    %34 = arith.mulf %1, %33 : vector<1x256xf32>
    %35 = vector.broadcast %34 : vector<1x256xf32> to vector<8x256xf32>
    %36 = arith.mulf %25, %35 : vector<8x256xf32>
    %37 = vector.broadcast %2 : vector<1x256xf32> to vector<8x256xf32>
    %38 = arith.addf %36, %37 : vector<8x256xf32>
    %cst_21 = arith.constant 2.000000e-01 : f32
    %39 = vector.broadcast %cst_21 : f32 to vector<8x256xf32>
    %40 = arith.mulf %39, %38 : vector<8x256xf32>
    %41 = arith.maximumf %38, %40 : vector<8x256xf32>
    %42 = arith.truncf %41 : vector<8x256xf32> to vector<8x256xbf16>
    %c0_22 = arith.constant 0 : index
    %c0_23 = arith.constant 0 : index
    %43 = vector.load %arg3[%c0_22, %c0_23] : memref<256x512xbf16, #tpu.memory_space<vmem>>, vector<256x512xbf16>
    %cst_24 = arith.constant dense<0.000000e+00> : vector<8x512xf32>
    %44 = tpu.matmul %42, %43, %cst_24 {dimension_numbers = #tpu.dot_dimension_numbers<[1], [0], [0], [1], [0, 0, 1, 1], [], []>} : vector<8x256xbf16>, vector<256x512xbf16>, vector<8x512xf32> -> vector<8x512xf32>
    %cst_25 = arith.constant dense<0.000000e+00> : vector<512xf32>
    %45 = vector.multi_reduction <add>, %44, %cst_25 [0] : vector<8x512xf32> to vector<512xf32>
    %46 = vector.shape_cast %45 : vector<512xf32> to vector<1x512xf32>
    %cst_26 = arith.constant 8.000000e+00 : f32
    %47 = vector.broadcast %cst_26 : f32 to vector<1x512xf32>
    %48 = arith.divf %46, %47 : vector<1x512xf32>
    %49 = vector.broadcast %48 : vector<1x512xf32> to vector<8x512xf32>
    %50 = arith.subf %44, %49 : vector<8x512xf32>
    %51 = arith.mulf %50, %50 : vector<8x512xf32>
    %cst_27 = arith.constant dense<0.000000e+00> : vector<512xf32>
    %52 = vector.multi_reduction <add>, %51, %cst_27 [0] : vector<8x512xf32> to vector<512xf32>
    %53 = vector.shape_cast %52 : vector<512xf32> to vector<1x512xf32>
    %cst_28 = arith.constant 8.000000e+00 : f32
    %54 = vector.broadcast %cst_28 : f32 to vector<1x512xf32>
    %55 = arith.divf %53, %54 : vector<1x512xf32>
    %cst_29 = arith.constant 9.99999974E-6 : f32
    %56 = vector.broadcast %cst_29 : f32 to vector<1x512xf32>
    %57 = arith.addf %55, %56 : vector<1x512xf32>
    %58 = math.rsqrt %57 : vector<1x512xf32>
    %59 = arith.mulf %3, %58 : vector<1x512xf32>
    %60 = vector.broadcast %59 : vector<1x512xf32> to vector<8x512xf32>
    %61 = arith.mulf %50, %60 : vector<8x512xf32>
    %62 = vector.broadcast %4 : vector<1x512xf32> to vector<8x512xf32>
    %63 = arith.addf %61, %62 : vector<8x512xf32>
    %cst_30 = arith.constant 2.000000e-01 : f32
    %64 = vector.broadcast %cst_30 : f32 to vector<8x512xf32>
    %65 = arith.mulf %64, %63 : vector<8x512xf32>
    %66 = arith.maximumf %63, %65 : vector<8x512xf32>
    %67 = arith.truncf %66 : vector<8x512xf32> to vector<8x512xbf16>
    %c0_31 = arith.constant 0 : index
    %c0_32 = arith.constant 0 : index
    %68 = vector.load %arg4[%c0_31, %c0_32] : memref<512x1024xbf16, #tpu.memory_space<vmem>>, vector<512x1024xbf16>
    %cst_33 = arith.constant dense<0.000000e+00> : vector<8x1024xf32>
    %69 = tpu.matmul %67, %68, %cst_33 {dimension_numbers = #tpu.dot_dimension_numbers<[1], [0], [0], [1], [0, 0, 1, 1], [], []>} : vector<8x512xbf16>, vector<512x1024xbf16>, vector<8x1024xf32> -> vector<8x1024xf32>
    %cst_34 = arith.constant dense<0.000000e+00> : vector<1024xf32>
    %70 = vector.multi_reduction <add>, %69, %cst_34 [0] : vector<8x1024xf32> to vector<1024xf32>
    %71 = vector.shape_cast %70 : vector<1024xf32> to vector<1x1024xf32>
    %cst_35 = arith.constant 8.000000e+00 : f32
    %72 = vector.broadcast %cst_35 : f32 to vector<1x1024xf32>
    %73 = arith.divf %71, %72 : vector<1x1024xf32>
    %74 = vector.broadcast %73 : vector<1x1024xf32> to vector<8x1024xf32>
    %75 = arith.subf %69, %74 : vector<8x1024xf32>
    %76 = arith.mulf %75, %75 : vector<8x1024xf32>
    %cst_36 = arith.constant dense<0.000000e+00> : vector<1024xf32>
    %77 = vector.multi_reduction <add>, %76, %cst_36 [0] : vector<8x1024xf32> to vector<1024xf32>
    %78 = vector.shape_cast %77 : vector<1024xf32> to vector<1x1024xf32>
    %cst_37 = arith.constant 8.000000e+00 : f32
    %79 = vector.broadcast %cst_37 : f32 to vector<1x1024xf32>
    %80 = arith.divf %78, %79 : vector<1x1024xf32>
    %cst_38 = arith.constant 9.99999974E-6 : f32
    %81 = vector.broadcast %cst_38 : f32 to vector<1x1024xf32>
    %82 = arith.addf %80, %81 : vector<1x1024xf32>
    %83 = math.rsqrt %82 : vector<1x1024xf32>
    %84 = arith.mulf %5, %83 : vector<1x1024xf32>
    %85 = vector.broadcast %84 : vector<1x1024xf32> to vector<8x1024xf32>
    %86 = arith.mulf %75, %85 : vector<8x1024xf32>
    %87 = vector.broadcast %6 : vector<1x1024xf32> to vector<8x1024xf32>
    %88 = arith.addf %86, %87 : vector<8x1024xf32>
    %cst_39 = arith.constant 2.000000e-01 : f32
    %89 = vector.broadcast %cst_39 : f32 to vector<8x1024xf32>
    %90 = arith.mulf %89, %88 : vector<8x1024xf32>
    %91 = arith.maximumf %88, %90 : vector<8x1024xf32>
    %92 = arith.truncf %91 : vector<8x1024xf32> to vector<8x1024xbf16>
    %c0_40 = arith.constant 0 : index
    %c0_41 = arith.constant 0 : index
    %93 = vector.load %arg5[%c0_40, %c0_41] : memref<1024x896xbf16, #tpu.memory_space<vmem>>, vector<1024x896xbf16>
    %cst_42 = arith.constant dense<0.000000e+00> : vector<8x896xf32>
    %94 = tpu.matmul %92, %93, %cst_42 {dimension_numbers = #tpu.dot_dimension_numbers<[1], [0], [0], [1], [0, 0, 1, 1], [], []>} : vector<8x1024xbf16>, vector<1024x896xbf16>, vector<8x896xf32> -> vector<8x896xf32>
    %95 = vector.broadcast %7 : vector<1x896xf32> to vector<8x896xf32>
    %96 = arith.addf %94, %95 : vector<8x896xf32>
    %97 = math.tanh %96 : vector<8x896xf32>
    %c0_43 = arith.constant 0 : index
    %c0_44 = arith.constant 0 : index
    %98 = vector.load %arg7[%c0_43, %c0_44] : memref<8x896xf32, #tpu.memory_space<vmem>>, vector<8x896xf32>
    tpu.vector_store %arg7[%c0_43, %c0_44], %97 {strides = array<i32>} : memref<8x896xf32, #tpu.memory_space<vmem>>, vector<8x896xf32>,
    return
  }
}

</mosaic_0001>

<llo_original>
// kernel: generator_forward.1
$region0: #{generator_forward.1}
  #allocation0 [shape = 'u32[]', space=smem, size = 0x4, offset = 0x4, fixed_abs, tag = 'smem constant byte address 0x4 - core index']
  #allocation1 [shape = 'u32[72,128]{1,0:T(1,128)}', space=vmem, size = 0x9000, scoped, tag = 'internal scratch']
  %s0 = inlined_call_operand.hbm [shape: f32[8,64], index: 0, kind: input, shape index: {}]
  %s1 = inlined_call_operand.hbm [shape: bf16[64,128], index: 1, kind: input, shape index: {}]
  %s2 = inlined_call_operand.hbm [shape: bf16[128,256], index: 2, kind: input, shape index: {}]
  %s3 = inlined_call_operand.hbm [shape: bf16[256,512], index: 3, kind: input, shape index: {}]
  %s4 = inlined_call_operand.hbm [shape: bf16[512,1024], index: 4, kind: input, shape index: {}]
  %s5 = inlined_call_operand.hbm [shape: bf16[1024,896], index: 5, kind: input, shape index: {}]
  %s6 = inlined_call_operand.hbm [shape: f32[8,1024], index: 6, kind: input, shape index: {}]
  %s7 = inlined_call_operand.hbm [shape: f32[8,896], index: 7, kind: output, shape index: {}]
  %s8 = sld [smem:[#allocation0]]
  $region66: #{generator_forward.1} parent=0
    _
  %s10 = ssub.s32 1, %s8
  %s11 = scalar_select 0, %s10, %s8
  $region1: #{generator_forward.1} parent=0
    #allocation2 [shape = 'u8[4096]{0}', space=vmem, size = 0x1000, scoped, tag = 'input window, operand 0, single buffered']
    #allocation3 [shape = 's32[1]{0}', space=sflag, size = 0x4, scoped, tag = 'scoped memory for generator_forward.1']
    #allocation4 [shape = 's32[1]{0}', space=sflag, size = 0x4, scoped, tag = 'scoped memory for generator_forward.1']
    #allocation5 [shape = 'u8[16384]{0}', space=vmem, size = 0x4000, scoped, tag = 'input window, operand 1, single buffered']
    #allocation6 [shape = 's32[1]{0}', space=sflag, size = 0x4, scoped, tag = 'scoped memory for generator_forward.1']
    #allocation7 [shape = 'u8[65536]{0}', space=vmem, size = 0x10000, scoped, tag = 'input window, operand 2, single buffered']
    #allocation8 [shape = 'u8[262144]{0}', space=vmem, size = 0x40000, scoped, tag = 'input window, operand 3, single buffered']
    #allocation9 [shape = 's32[1]{0}', space=sflag, size = 0x4, scoped, tag = 'scoped memory for generator_forward.1']
    #allocation10 [shape = 'u8[1048576]{0}', space=vmem, size = 0x100000, scoped, tag = 'input window, operand 4, single buffered']
    #allocation11 [shape = 'u8[1835008]{0}', space=vmem, size = 0x1c0000, scoped, tag = 'input window, operand 5, single buffered']
    #allocation12 [shape = 's32[1]{0}', space=sflag, size = 0x4, scoped, tag = 'scoped memory for generator_forward.1']
    #allocation13 [shape = 'u8[32768]{0}', space=vmem, size = 0x8000, scoped, tag = 'input window, operand 6, single buffered']
    #allocation14 [shape = 'u8[28672]{0}', space=vmem, size = 0x7000, scoped, tag = 'output window, operand 0, single buffered']
    %12 = vsyncpa [#allocation3], 0
    %13 = vsyncpa [#allocation6], 0
    %14 = vsyncpa [#allocation9], 0
    %15 = vsyncpa [#allocation12], 0
    %16 = vsyncpa [#allocation4], 0
    // Predicated region
    $region2: #{generator_forward.1} parent=1 // pred_check
      _
    $region3: #{generator_forward.1} parent=1 // pred_check_branch
      %18 = sbr.rel (0) target = $region5
    $region4: #{generator_forward.1} parent=1 // pred_region
      %20 = vsyncadd [#allocation3], 0
      %s22 = sshll.u32 %s0, 4
      %s23 = int_to_ptr.hbm [resolvable:$true] %s22
      %s24 = sshll.u32 [#allocation2], 4
      %s25 = int_to_ptr.vmem [resolvable:$true] %s24
      %27 = dma.hbm_to_vmem [thread:$0]  %s23, 128, %s25, [#allocation3]
    $region5: #{generator_forward.1} parent=1 // pred_fallthru
      _
    // Predicated region
    $region6: #{generator_forward.1} parent=1 // pred_check
      _
    $region7: #{generator_forward.1} parent=1 // pred_check_branch
      %29 = sbr.rel (0) target = $region9
    $region8: #{generator_forward.1} parent=1 // pred_region
      %31 = vsyncadd [#allocation6], 0
      %s32 = sshll.u32 %s1, 4
      %s33 = int_to_ptr.hbm [resolvable:$true] %s32
      %s34 = sshll.u32 [#allocation5], 4
      %s35 = int_to_ptr.vmem [resolvable:$true] %s34
      %40 = dma.hbm_to_vmem [thread:$0]  %s33, 512, %s35, [#allocation6], 64, 64, 4
    $region9: #{generator_forward.1} parent=1 // pred_fallthru
      _
    // Predicated region
    $region10: #{generator_forward.1} parent=1 // pred_check
      _
    $region11: #{generator_forward.1} parent=1 // pred_check_branch
      %42 = sbr.rel (0) target = $region13
    $region12: #{generator_forward.1} parent=1 // pred_region
      %44 = vsyncadd [#allocation6], 0
      %s45 = sshll.u32 %s2, 4
      %s46 = int_to_ptr.hbm [resolvable:$true] %s45
      %s47 = sshll.u32 [#allocation7], 4
      %s48 = int_to_ptr.vmem [resolvable:$true] %s47
      %53 = dma.hbm_to_vmem [thread:$0]  %s46, 2048, %s48, [#allocation6], 128, 128, 8
    $region13: #{generator_forward.1} parent=1 // pred_fallthru
      _
    // Predicated region
    $region14: #{generator_forward.1} parent=1 // pred_check
      _
    $region15: #{generator_forward.1} parent=1 // pred_check_branch
      %55 = sbr.rel (0) target = $region17
    $region16: #{generator_forward.1} parent=1 // pred_region
      %57 = vsyncadd [#allocation9], 0
      %s58 = sshll.u32 %s3, 4
      %s59 = int_to_ptr.hbm [resolvable:$true] %s58
      %s60 = sshll.u32 [#allocation8], 4
      %s61 = int_to_ptr.vmem [resolvable:$true] %s60
      %66 = dma.hbm_to_vmem [thread:$0]  %s59, 8192, %s61, [#allocation9], 256, 256, 16
    $region17: #{generator_forward.1} parent=1 // pred_fallthru
      _
    // Predicated region
    $region18: #{generator_forward.1} parent=1 // pred_check
      _
    $region19: #{generator_forward.1} parent=1 // pred_check_branch
      %68 = sbr.rel (0) target = $region21
    $region20: #{generator_forward.1} parent=1 // pred_region
      %70 = vsyncadd [#allocation9], 0
      %s71 = sshll.u32 %s4, 4
      %s72 = int_to_ptr.hbm [resolvable:$true] %s71
      %s73 = sshll.u32 [#allocation10], 4
      %s74 = int_to_ptr.vmem [resolvable:$true] %s73
      %79 = dma.hbm_to_vmem [thread:$0]  %s72, 32768, %s74, [#allocation9], 512, 512, 32
    $region21: #{generator_forward.1} parent=1 // pred_fallthru
      _
    // Predicated region
    $region22: #{generator_forward.1} parent=1 // pred_check
      _
    $region23: #{generator_forward.1} parent=1 // pred_check_branch
      %81 = sbr.rel (0) target = $region25
    $region24: #{generator_forward.1} parent=1 // pred_region
      %83 = vsyncadd [#allocation12], 0
      %s84 = sshll.u32 %s5, 4
      %s85 = int_to_ptr.hbm [resolvable:$true] %s84
      %s86 = sshll.u32 [#allocation11], 4
      %s87 = int_to_ptr.vmem [resolvable:$true] %s86
      %92 = dma.hbm_to_vmem [thread:$0]  %s85, 57344, %s87, [#allocation12], 448, 448, 28
    $region25: #{generator_forward.1} parent=1 // pred_fallthru
      _
    // Predicated region
    $region26: #{generator_forward.1} parent=1 // pred_check
      _
    $region27: #{generator_forward.1} parent=1 // pred_check_branch
      %94 = sbr.rel (0) target = $region29
    $region28: #{generator_forward.1} parent=1 // pred_region
      %96 = vsyncadd [#allocation12], 0
      %s98 = sshll.u32 %s6, 4
      %s99 = int_to_ptr.hbm [resolvable:$true] %s98
      %s100 = sshll.u32 [#allocation13], 4
      %s101 = int_to_ptr.vmem [resolvable:$true] %s100
      %103 = dma.hbm_to_vmem [thread:$0]  %s99, 1024, %s101, [#allocation12]
    $region29: #{generator_forward.1} parent=1 // pred_fallthru
      _
    // Predicated region
    $region30: #{generator_forward.1} parent=1 // pred_check
      _
    $region31: #{generator_forward.1} parent=1 // pred_check_branch
      %105 = sbr.rel (0) target = $region33
    $region32: #{generator_forward.1} parent=1 // pred_region
      %107 = dma.done [#allocation3], 128
    $region33: #{generator_forward.1} parent=1 // pred_fallthru
      _
    // Predicated region
    $region34: #{generator_forward.1} parent=1 // pred_check
      _
    $region35: #{generator_forward.1} parent=1 // pred_check_branch
      %109 = sbr.rel (0) target = $region37
    $region36: #{generator_forward.1} parent=1 // pred_region
      %111 = dma.done [#allocation6], 512
    $region37: #{generator_forward.1} parent=1 // pred_fallthru
      _
    // Predicated region
    $region38: #{generator_forward.1} parent=1 // pred_check
      _
    $region39: #{generator_forward.1} parent=1 // pred_check_branch
      %113 = sbr.rel (0) target = $region41
    $region40: #{generator_forward.1} parent=1 // pred_region
      %115 = dma.done [#allocation6], 2048
    $region41: #{generator_forward.1} parent=1 // pred_fallthru
      _
    // Predicated region
    $region42: #{generator_forward.1} parent=1 // pred_check
      _
    $region43: #{generator_forward.1} parent=1 // pred_check_branch
      %117 = sbr.rel (0) target = $region45
    $region44: #{generator_forward.1} parent=1 // pred_region
      %119 = dma.done [#allocation9], 8192
    $region45: #{generator_forward.1} parent=1 // pred_fallthru
      _
    // Predicated region
    $region46: #{generator_forward.1} parent=1 // pred_check
      _
    $region47: #{generator_forward.1} parent=1 // pred_check_branch
      %121 = sbr.rel (0) target = $region49
    $region48: #{generator_forward.1} parent=1 // pred_region
      %123 = dma.done [#allocation9], 32768
    $region49: #{generator_forward.1} parent=1 // pred_fallthru
      _
    // Predicated region
    $region50: #{generator_forward.1} parent=1 // pred_check
      _
    $region51: #{generator_forward.1} parent=1 // pred_check_branch
      %125 = sbr.rel (0) target = $region53
    $region52: #{generator_forward.1} parent=1 // pred_region
      %127 = dma.done [#allocation12], 57344
    $region53: #{generator_forward.1} parent=1 // pred_fallthru
      _
    // Predicated region
    $region54: #{generator_forward.1} parent=1 // pred_check
      _
    $region55: #{generator_forward.1} parent=1 // pred_check_branch
      %129 = sbr.rel (0) target = $region57
    $region56: #{generator_forward.1} parent=1 // pred_region
      %131 = dma.done [#allocation12], 1024
    $region57: #{generator_forward.1} parent=1 // pred_fallthru
      _
    %v133 = vld [vmem:[#allocation13] ss:$0 sm:$0xff]
    %s134 = scalar_lea.vmem [#allocation13], 1
    %v135 = vld [vmem:[%s134] ss:$8 sm:$0x3]
    %s136 = scalar_lea.vmem [#allocation13], 2
    %v137 = vld [vmem:[%s136] ss:$8 sm:$0x3]
    %s138 = scalar_lea.vmem [#allocation13], 3
    %v139 = vld [vmem:[%s138] ss:$8 sm:$0xf]
    %s140 = scalar_lea.vmem [#allocation13], 4
    %v141 = vld [vmem:[%s140] ss:$8 sm:$0xf]
    %s142 = scalar_lea.vmem [#allocation13], 5
    %v143 = vld [vmem:[%s142] ss:$8 sm:$0xf]
    %v144 = vld [vmem:[%s142] ss:$8 sm:$0xf0]
    %v145 = vor.u32 %v143, %v144
    %s146 = scalar_lea.vmem [#allocation13], 6
    %v147 = vld [vmem:[%s146] ss:$8 sm:$0xf]
    %v148 = vld [vmem:[%s146] ss:$8 sm:$0xf0]
    %v149 = vor.u32 %v147, %v148
    %s150 = scalar_lea.vmem [#allocation13], 7
    %v151 = vld [vmem:[%s150] ss:$8 sm:$0xf]
    %v152 = vld [vmem:[%s150] ss:$8 sm:$0xf0]
    %v153 = vor.u32 %v151, %v152
    %v154 = vld [vmem:[#allocation2] sm:$0xff]
    %v155 = vpack.c.bf16 %v154, %v154
    %v156 = vld [vmem:[#allocation5] sm:$0xf]
    %v157 = vld [vmem:[#allocation5 + $0x4] sm:$0xf]
    %v158 = vld [vmem:[#allocation5 + $0x8] sm:$0xf]
    %v159 = vld [vmem:[#allocation5 + $0xc] sm:$0xf]
    %v160 = vld [vmem:[#allocation5 + $0x10] sm:$0xf]
    %v161 = vld [vmem:[#allocation5 + $0x14] sm:$0xf]
    %v162 = vld [vmem:[#allocation5 + $0x18] sm:$0xf]
    %v163 = vld [vmem:[#allocation5 + $0x1c] sm:$0xf]
    %v172 = vunpack.c.l.b16 %v156
    %v173 = vunpack.c.l.b16 %v157
    %v174 = vunpack.c.l.b16 %v158
    %v175 = vunpack.c.l.b16 %v159
    %v176 = vunpack.c.l.b16 %v160
    %v177 = vunpack.c.l.b16 %v161
    %v178 = vunpack.c.l.b16 %v162
    %v179 = vunpack.c.l.b16 %v163
    %v180 = vpack.c.b16 %v173, %v172
    %v181 = vpack.c.b16 %v175, %v174
    %v182 = vpack.c.b16 %v177, %v176
    %v183 = vpack.c.b16 %v179, %v178
    %vm188 = vcmask 523264
    %v190 = vsel %vm188, %v155, 0
    %192 = vmatpush.bf16.msra.mxu0 0
    %193 = vmatpush.bf16.msra.mxu0 0
    %194 = vmatpush.bf16.msra.mxu0 0
    %195 = vmatpush.bf16.msra.mxu0 0
    %196 = vmatpush.bf16.msra.mxu0 %v183
    %197 = vmatpush.bf16.msra.mxu0 %v182
    %198 = vmatpush.bf16.msra.mxu0 %v181
    %199 = vmatpush.bf16.msra.mxu0 %v180
    %200 = vmatmul.bf16.gmra.mxu0 %v190
    %v201 = vpop.f32.mrf.mxu0
    %v202 = vadd.f32 %v133, %v201
    %v203 = vpop.f32.mrf.mxu0
    %204 = vdwg.mxu0
    %v205 = vmul.f32 %v202, 0.2
    %v206 = vmax.f32 %v202, %v205
    %v207 = vpack.c.bf16 %v206, %v206
    %v208 = vld [vmem:[#allocation7] sm:$0xff]
    %v209 = vld [vmem:[#allocation7 + $0x8] sm:$0xff]
    %v210 = vld [vmem:[#allocation7 + $0x10] sm:$0xff]
    %v211 = vld [vmem:[#allocation7 + $0x18] sm:$0xff]
    %v212 = vld [vmem:[#allocation7 + $0x20] sm:$0xff]
    %v213 = vld [vmem:[#allocation7 + $0x28] sm:$0xff]
    %v214 = vld [vmem:[#allocation7 + $0x30] sm:$0xff]
    %v215 = vld [vmem:[#allocation7 + $0x38] sm:$0xff]
    %v216 = vld [vmem:[#allocation7 + $0x40] sm:$0xff]
    %v217 = vld [vmem:[#allocation7 + $0x48] sm:$0xff]
    %v218 = vld [vmem:[#allocation7 + $0x50] sm:$0xff]
    %v219 = vld [vmem:[#allocation7 + $0x58] sm:$0xff]
    %v220 = vld [vmem:[#allocation7 + $0x60] sm:$0xff]
    %v221 = vld [vmem:[#allocation7 + $0x68] sm:$0xff]
    %v222 = vld [vmem:[#allocation7 + $0x70] sm:$0xff]
    %v223 = vld [vmem:[#allocation7 + $0x78] sm:$0xff]
    %v240 = vunpack.c.l.b16 %v208
    %v241 = vunpack.c.h.b16 %v208
    %v242 = vunpack.c.l.b16 %v209
    %v243 = vunpack.c.h.b16 %v209
    %v244 = vunpack.c.l.b16 %v210
    %v245 = vunpack.c.h.b16 %v210
    %v246 = vunpack.c.l.b16 %v211
    %v247 = vunpack.c.h.b16 %v211
    %v248 = vunpack.c.l.b16 %v212
    %v249 = vunpack.c.h.b16 %v212
    %v250 = vunpack.c.l.b16 %v213
    %v251 = vunpack.c.h.b16 %v213
    %v252 = vunpack.c.l.b16 %v214
    %v253 = vunpack.c.h.b16 %v214
    %v254 = vunpack.c.l.b16 %v215
    %v255 = vunpack.c.h.b16 %v215
    %v256 = vunpack.c.l.b16 %v216
    %v257 = vunpack.c.h.b16 %v216
    %v258 = vunpack.c.l.b16 %v217
    %v259 = vunpack.c.h.b16 %v217
    %v260 = vunpack.c.l.b16 %v218
    %v261 = vunpack.c.h.b16 %v218
    %v262 = vunpack.c.l.b16 %v219
    %v263 = vunpack.c.h.b16 %v219
    %v264 = vunpack.c.l.b16 %v220
    %v265 = vunpack.c.h.b16 %v220
    %v266 = vunpack.c.l.b16 %v221
    %v267 = vunpack.c.h.b16 %v221
    %v268 = vunpack.c.l.b16 %v222
    %v269 = vunpack.c.h.b16 %v222
    %v270 = vunpack.c.l.b16 %v223
    %v271 = vunpack.c.h.b16 %v223
    %v272 = vpack.c.b16 %v242, %v240
    %v273 = vpack.c.b16 %v243, %v241
    %v274 = vpack.c.b16 %v246, %v244
    %v275 = vpack.c.b16 %v247, %v245
    %v276 = vpack.c.b16 %v250, %v248
    %v277 = vpack.c.b16 %v251, %v249
    %v278 = vpack.c.b16 %v254, %v252
    %v279 = vpack.c.b16 %v255, %v253
    %v280 = vpack.c.b16 %v258, %v256
    %v281 = vpack.c.b16 %v259, %v257
    %v282 = vpack.c.b16 %v262, %v260
    %v283 = vpack.c.b16 %v263, %v261
    %v284 = vpack.c.b16 %v266, %v264
    %v285 = vpack.c.b16 %v267, %v265
    %v286 = vpack.c.b16 %v270, %v268
    %v287 = vpack.c.b16 %v271, %v269
    %304 = vmatpush.bf16.msra.mxu0 %v286
    %305 = vmatpush.bf16.msra.mxu0 %v284
    %306 = vmatpush.bf16.msra.mxu0 %v282
    %307 = vmatpush.bf16.msra.mxu0 %v280
    %308 = vmatpush.bf16.msra.mxu0 %v278
    %309 = vmatpush.bf16.msra.mxu0 %v276
    %310 = vmatpush.bf16.msra.mxu0 %v274
    %311 = vmatpush.bf16.msra.mxu0 %v272
    %312 = vmatmul.bf16.gmra.mxu0 %v207
    %v313 = vpop.f32.mrf.mxu0
    %v314 = vadd.f32 0.0, %v313
    %v315 = vpop.f32.mrf.mxu0
    %316 = vdwg.mxu0
    %317 = vmatpush.bf16.msra.mxu0 %v287
    %318 = vmatpush.bf16.msra.mxu0 %v285
    %319 = vmatpush.bf16.msra.mxu0 %v283
    %320 = vmatpush.bf16.msra.mxu0 %v281
    %321 = vmatpush.bf16.msra.mxu0 %v279
    %322 = vmatpush.bf16.msra.mxu0 %v277
    %323 = vmatpush.bf16.msra.mxu0 %v275
    %324 = vmatpush.bf16.msra.mxu0 %v273
    %325 = vmatmul.bf16.gmra.mxu0 %v207
    %v326 = vpop.f32.mrf.mxu0
    %v327 = vadd.f32 0.0, %v326
    %v328 = vpop.f32.mrf.mxu0
    %329 = vdwg.mxu0
    %v330 = vrot.slane %v314, 4
    %v331 = vadd.f32 %v314, %v330
    %v332 = vrot.slane %v331, 2
    %v333 = vadd.f32 %v331, %v332
    %v334 = vrot.slane %v333, 1
    %v335 = vadd.f32 %v333, %v334
    %v336 = vrot.slane %v327, 4
    %v337 = vadd.f32 %v327, %v336
    %v338 = vrot.slane %v337, 2
    %v339 = vadd.f32 %v337, %v338
    %v340 = vrot.slane %v339, 1
    %v341 = vadd.f32 %v339, %v340
    %v342 = vrcp.pop 8.0
    %v343 = vmul.f32 8.0, %v342
    %v344 = vsub.f32 1.0, %v343
    %v345 = vmul.f32 %v342, %v344
    %v346 = vadd.f32 %v342, %v345
    %vm347 = vweird.f32 %v342
    %v348 = vsel %vm347, %v342, %v346
    %v349 = vmul.f32 %v335, %v348
    %v350 = vmul.f32 %v341, %v348
    %v351 = vsub.f32 %v314, %v349
    %v352 = vsub.f32 %v327, %v350
    %v353 = vmul.f32 %v351, %v351
    %v354 = vmul.f32 %v352, %v352
    %v355 = vrot.slane %v353, 4
    %v356 = vadd.f32 %v353, %v355
    %v357 = vrot.slane %v356, 2
    %v358 = vadd.f32 %v356, %v357
    %v359 = vrot.slane %v358, 1
    %v360 = vadd.f32 %v358, %v359
    %v361 = vrot.slane %v354, 4
    %v362 = vadd.f32 %v354, %v361
    %v363 = vrot.slane %v362, 2
    %v364 = vadd.f32 %v362, %v363
    %v365 = vrot.slane %v364, 1
    %v366 = vadd.f32 %v364, %v365
    %v367 = vmul.f32 %v360, %v348
    %v368 = vmul.f32 %v366, %v348
    %v369 = vadd.f32 %v367, 1e-05
    %v370 = vadd.f32 %v368, 1e-05
    %v371 = vrsqrt.pop %v369
    %v372 = vmul.f32 %v371, %v369
    %v373 = vmul.f32 %v372, %v371
    %v374 = vmul.f32 0.5, %v373
    %v375 = vsub.f32 1.5, %v374
    %v376 = vmul.f32 %v371, %v375
    %vm377 = vweird.f32 %v369
    %vm378 = vweird.f32 %v371
    %vm379 = vmor %vm377, %vm378
    %v380 = vsel %vm379, %v371, %v376
    %v381 = vrsqrt.pop %v370
    %v382 = vmul.f32 %v381, %v370
    %v383 = vmul.f32 %v382, %v381
    %v384 = vmul.f32 0.5, %v383
    %v385 = vsub.f32 1.5, %v384
    %v386 = vmul.f32 %v381, %v385
    %vm387 = vweird.f32 %v370
    %vm388 = vweird.f32 %v381
    %vm389 = vmor %vm387, %vm388
    %v390 = vsel %vm389, %v381, %v386
    %v393 = vrot.slane %v390, 7
    %vm394 = vcmask 1040384
    %v395 = vsel %vm394, %v380, %v393
    %v397 = vmul.f32 %v135, %v395
    %v399 = vperm.slane %v397, 0
    %v400 = vperm.slane %v397, 1
    %v403 = vmul.f32 %v351, %v399
    %v404 = vmul.f32 %v352, %v400
    %v406 = vperm.slane %v137, 0
    %v407 = vperm.slane %v137, 1
    %v410 = vadd.f32 %v403, %v406
    %v411 = vadd.f32 %v404, %v407
    %v412 = vmul.f32 %v410, 0.2
    %v413 = vmul.f32 %v411, 0.2
    %v414 = vmax.f32 %v410, %v412
    %v415 = vmax.f32 %v411, %v413
    %v416 = vpack.c.bf16 %v414, %v414
    %v417 = vpack.c.bf16 %v415, %v415
    %v418 = vld [vmem:[#allocation8] sm:$0xff]
    %v419 = vld [vmem:[#allocation8 + $0x8] sm:$0xff]
    %v420 = vld [vmem:[#allocation8 + $0x10] sm:$0xff]
    %v421 = vld [vmem:[#allocation8 + $0x18] sm:$0xff]
    %v422 = vld [vmem:[#allocation8 + $0x20] sm:$0xff]
    %v423 = vld [vmem:[#allocation8 + $0x28] sm:$0xff]
    %v424 = vld [vmem:[#allocation8 + $0x30] sm:$0xff]
    %v425 = vld [vmem:[#allocation8 + $0x38] sm:$0xff]
    %v426 = vld [vmem:[#allocation8 + $0x40] sm:$0xff]
    %v427 = vld [vmem:[#allocation8 + $0x48] sm:$0xff]
    %v428 = vld [vmem:[#allocation8 + $0x50] sm:$0xff]
    %v429 = vld [vmem:[#allocation8 + $0x58] sm:$0xff]
    %v430 = vld [vmem:[#allocation8 + $0x60] sm:$0xff]
    %v431 = vld [vmem:[#allocation8 + $0x68] sm:$0xff]
    %v432 = vld [vmem:[#allocation8 + $0x70] sm:$0xff]
    %v433 = vld [vmem:[#allocation8 + $0x78] sm:$0xff]
    %v434 = vld [vmem:[#allocation8 + $0x80] sm:$0xff]
    %v435 = vld [vmem:[#allocation8 + $0x88] sm:$0xff]
    %v436 = vld [vmem:[#allocation8 + $0x90] sm:$0xff]
    %v437 = vld [vmem:[#allocation8 + $0x98] sm:$0xff]
    %v438 = vld [vmem:[#allocation8 + $0xa0] sm:$0xff]
    %v439 = vld [vmem:[#allocation8 + $0xa8] sm:$0xff]
    %v440 = vld [vmem:[#allocation8 + $0xb0] sm:$0xff]
    %v441 = vld [vmem:[#allocation8 + $0xb8] sm:$0xff]
    %v442 = vld [vmem:[#allocation8 + $0xc0] sm:$0xff]
    %v443 = vld [vmem:[#allocation8 + $0xc8] sm:$0xff]
    %v444 = vld [vmem:[#allocation8 + $0xd0] sm:$0xff]
    %v445 = vld [vmem:[#allocation8 + $0xd8] sm:$0xff]
    %v446 = vld [vmem:[#allocation8 + $0xe0] sm:$0xff]
    %v447 = vld [vmem:[#allocation8 + $0xe8] sm:$0xff]
    %v448 = vld [vmem:[#allocation8 + $0xf0] sm:$0xff]
    %v449 = vld [vmem:[#allocation8 + $0xf8] sm:$0xff]
    %v450 = vld [vmem:[#allocation8 + $0x100] sm:$0xff]
    %v451 = vld [vmem:[#allocation8 + $0x108] sm:$0xff]
    %v452 = vld [vmem:[#allocation8 + $0x110] sm:$0xff]
    %v453 = vld [vmem:[#allocation8 + $0x118] sm:$0xff]
    %v454 = vld [vmem:[#allocation8 + $0x120] sm:$0xff]
    %v455 = vld [vmem:[#allocation8 + $0x128] sm:$0xff]
    %v456 = vld [vmem:[#allocation8 + $0x130] sm:$0xff]
    %v457 = vld [vmem:[#allocation8 + $0x138] sm:$0xff]
    %v458 = vld [vmem:[#allocation8 + $0x140] sm:$0xff]
    %v459 = vld [vmem:[#allocation8 + $0x148] sm:$0xff]
    %v460 = vld [vmem:[#allocation8 + $0x150] sm:$0xff]
    %v461 = vld [vmem:[#allocation8 + $0x158] sm:$0xff]
    %v462 = vld [vmem:[#allocation8 + $0x160] sm:$0xff]
    %v463 = vld [vmem:[#allocation8 + $0x168] sm:$0xff]
    %v464 = vld [vmem:[#allocation8 + $0x170] sm:$0xff]
    %v465 = vld [vmem:[#allocation8 + $0x178] sm:$0xff]
    %v466 = vld [vmem:[#allocation8 + $0x180] sm:$0xff]
    %v467 = vld [vmem:[#allocation8 + $0x188] sm:$0xff]
    %v468 = vld [vmem:[#allocation8 + $0x190] sm:$0xff]
    %v469 = vld [vmem:[#allocation8 + $0x198] sm:$0xff]
    %v470 = vld [vmem:[#allocation8 + $0x1a0] sm:$0xff]
    %v471 = vld [vmem:[#allocation8 + $0x1a8] sm:$0xff]
    %v472 = vld [vmem:[#allocation8 + $0x1b0] sm:$0xff]
    %v473 = vld [vmem:[#allocation8 + $0x1b8] sm:$0xff]
    %v474 = vld [vmem:[#allocation8 + $0x1c0] sm:$0xff]
    %v475 = vld [vmem:[#allocation8 + $0x1c8] sm:$0xff]
    %v476 = vld [vmem:[#allocation8 + $0x1d0] sm:$0xff]
    %v477 = vld [vmem:[#allocation8 + $0x1d8] sm:$0xff]
    %v478 = vld [vmem:[#allocation8 + $0x1e0] sm:$0xff]
    %v479 = vld [vmem:[#allocation8 + $0x1e8] sm:$0xff]
    %v480 = vld [vmem:[#allocation8 + $0x1f0] sm:$0xff]
    %v481 = vld [vmem:[#allocation8 + $0x1f8] sm:$0xff]
    %v546 = vunpack.c.l.b16 %v418
    %v547 = vunpack.c.h.b16 %v418
    %v548 = vunpack.c.l.b16 %v419
    %v549 = vunpack.c.h.b16 %v419
    %v550 = vunpack.c.l.b16 %v420
    %v551 = vunpack.c.h.b16 %v420
    %v552 = vunpack.c.l.b16 %v421
    %v553 = vunpack.c.h.b16 %v421
    %v554 = vunpack.c.l.b16 %v422
    %v555 = vunpack.c.h.b16 %v422
    %v556 = vunpack.c.l.b16 %v423
    %v557 = vunpack.c.h.b16 %v423
    %v558 = vunpack.c.l.b16 %v424
    %v559 = vunpack.c.h.b16 %v424
    %v560 = vunpack.c.l.b16 %v425
    %v561 = vunpack.c.h.b16 %v425
    %v562 = vunpack.c.l.b16 %v426
    %v563 = vunpack.c.h.b16 %v426
    %v564 = vunpack.c.l.b16 %v427
    %v565 = vunpack.c.h.b16 %v427
    %v566 = vunpack.c.l.b16 %v428
    %v567 = vunpack.c.h.b16 %v428
    %v568 = vunpack.c.l.b16 %v429
    %v569 = vunpack.c.h.b16 %v429
    %v570 = vunpack.c.l.b16 %v430
    %v571 = vunpack.c.h.b16 %v430
    %v572 = vunpack.c.l.b16 %v431
    %v573 = vunpack.c.h.b16 %v431
    %v574 = vunpack.c.l.b16 %v432
    %v575 = vunpack.c.h.b16 %v432
    %v576 = vunpack.c.l.b16 %v433
    %v577 = vunpack.c.h.b16 %v433
    %v578 = vunpack.c.l.b16 %v434
    %v579 = vunpack.c.h.b16 %v434
    %v580 = vunpack.c.l.b16 %v435
    %v581 = vunpack.c.h.b16 %v435
    %v582 = vunpack.c.l.b16 %v436
    %v583 = vunpack.c.h.b16 %v436
    %v584 = vunpack.c.l.b16 %v437
    %v585 = vunpack.c.h.b16 %v437
    %v586 = vunpack.c.l.b16 %v438
    %v587 = vunpack.c.h.b16 %v438
    %v588 = vunpack.c.l.b16 %v439
    %v589 = vunpack.c.h.b16 %v439
    %v590 = vunpack.c.l.b16 %v440
    %v591 = vunpack.c.h.b16 %v440
    %v592 = vunpack.c.l.b16 %v441
    %v593 = vunpack.c.h.b16 %v441
    %v594 = vunpack.c.l.b16 %v442
    %v595 = vunpack.c.h.b16 %v442
    %v596 = vunpack.c.l.b16 %v443
    %v597 = vunpack.c.h.b16 %v443
    %v598 = vunpack.c.l.b16 %v444
    %v599 = vunpack.c.h.b16 %v444
    %v600 = vunpack.c.l.b16 %v445
    %v601 = vunpack.c.h.b16 %v445
    %v602 = vunpack.c.l.b16 %v446
    %v603 = vunpack.c.h.b16 %v446
    %v604 = vunpack.c.l.b16 %v447
    %v605 = vunpack.c.h.b16 %v447
    %v606 = vunpack.c.l.b16 %v448
    %v607 = vunpack.c.h.b16 %v448
    %v608 = vunpack.c.l.b16 %v449
    %v609 = vunpack.c.h.b16 %v449
    %v610 = vunpack.c.l.b16 %v450
    %v611 = vunpack.c.h.b16 %v450
    %v612 = vunpack.c.l.b16 %v451
    %v613 = vunpack.c.h.b16 %v451
    %v614 = vunpack.c.l.b16 %v452
    %v615 = vunpack.c.h.b16 %v452
    %v616 = vunpack.c.l.b16 %v453
    %v617 = vunpack.c.h.b16 %v453
    %v618 = vunpack.c.l.b16 %v454
    %v619 = vunpack.c.h.b16 %v454
    %v620 = vunpack.c.l.b16 %v455
    %v621 = vunpack.c.h.b16 %v455
    %v622 = vunpack.c.l.b16 %v456
    %v623 = vunpack.c.h.b16 %v456
    %v624 = vunpack.c.l.b16 %v457
    %v625 = vunpack.c.h.b16 %v457
    %v626 = vunpack.c.l.b16 %v458
    %v627 = vunpack.c.h.b16 %v458
    %v628 = vunpack.c.l.b16 %v459
    %v629 = vunpack.c.h.b16 %v459
    %v630 = vunpack.c.l.b16 %v460
    %v631 = vunpack.c.h.b16 %v460
    %v632 = vunpack.c.l.b16 %v461
    %v633 = vunpack.c.h.b16 %v461
    %v634 = vunpack.c.l.b16 %v462
    %v635 = vunpack.c.h.b16 %v462
    %v636 = vunpack.c.l.b16 %v463
    %v637 = vunpack.c.h.b16 %v463
    %v638 = vunpack.c.l.b16 %v464
    %v639 = vunpack.c.h.b16 %v464
    %v640 = vunpack.c.l.b16 %v465
    %v641 = vunpack.c.h.b16 %v465
    %v642 = vunpack.c.l.b16 %v466
    %v643 = vunpack.c.h.b16 %v466
    %v644 = vunpack.c.l.b16 %v467
    %v645 = vunpack.c.h.b16 %v467
    %v646 = vunpack.c.l.b16 %v468
    %v647 = vunpack.c.h.b16 %v468
    %v648 = vunpack.c.l.b16 %v469
    %v649 = vunpack.c.h.b16 %v469
    %v650 = vunpack.c.l.b16 %v470
    %v651 = vunpack.c.h.b16 %v470
    %v652 = vunpack.c.l.b16 %v471
    %v653 = vunpack.c.h.b16 %v471
    %v654 = vunpack.c.l.b16 %v472
    %v655 = vunpack.c.h.b16 %v472
    %v656 = vunpack.c.l.b16 %v473
    %v657 = vunpack.c.h.b16 %v473
    %v658 = vunpack.c.l.b16 %v474
    %v659 = vunpack.c.h.b16 %v474
    %v660 = vunpack.c.l.b16 %v475
    %v661 = vunpack.c.h.b16 %v475
    %v662 = vunpack.c.l.b16 %v476
    %v663 = vunpack.c.h.b16 %v476
    %v664 = vunpack.c.l.b16 %v477
    %v665 = vunpack.c.h.b16 %v477
    %v666 = vunpack.c.l.b16 %v478
    %v667 = vunpack.c.h.b16 %v478
    %v668 = vunpack.c.l.b16 %v479
    %v669 = vunpack.c.h.b16 %v479
    %v670 = vunpack.c.l.b16 %v480
    %v671 = vunpack.c.h.b16 %v480
    %v672 = vunpack.c.l.b16 %v481
    %v673 = vunpack.c.h.b16 %v481
    %v674 = vpack.c.b16 %v550, %v546
    %v675 = vpack.c.b16 %v551, %v547
    %v676 = vpack.c.b16 %v552, %v548
    %v677 = vpack.c.b16 %v553, %v549
    %v678 = vpack.c.b16 %v558, %v554
    %v679 = vpack.c.b16 %v559, %v555
    %v680 = vpack.c.b16 %v560, %v556
    %v681 = vpack.c.b16 %v561, %v557
    %v682 = vpack.c.b16 %v566, %v562
    %v683 = vpack.c.b16 %v567, %v563
    %v684 = vpack.c.b16 %v568, %v564
    %v685 = vpack.c.b16 %v569, %v565
    %v686 = vpack.c.b16 %v574, %v570
    %v687 = vpack.c.b16 %v575, %v571
    %v688 = vpack.c.b16 %v576, %v572
    %v689 = vpack.c.b16 %v577, %v573
    %v690 = vpack.c.b16 %v582, %v578
    %v691 = vpack.c.b16 %v583, %v579
    %v692 = vpack.c.b16 %v584, %v580
    %v693 = vpack.c.b16 %v585, %v581
    %v694 = vpack.c.b16 %v590, %v586
    %v695 = vpack.c.b16 %v591, %v587
    %v696 = vpack.c.b16 %v592, %v588
    %v697 = vpack.c.b16 %v593, %v589
    %v698 = vpack.c.b16 %v598, %v594
    %v699 = vpack.c.b16 %v599, %v595
    %v700 = vpack.c.b16 %v600, %v596
    %v701 = vpack.c.b16 %v601, %v597
    %v702 = vpack.c.b16 %v606, %v602
    %v703 = vpack.c.b16 %v607, %v603
    %v704 = vpack.c.b16 %v608, %v604
    %v705 = vpack.c.b16 %v609, %v605
    %v706 = vpack.c.b16 %v614, %v610
    %v707 = vpack.c.b16 %v615, %v611
    %v708 = vpack.c.b16 %v616, %v612
    %v709 = vpack.c.b16 %v617, %v613
    %v710 = vpack.c.b16 %v622, %v618
    %v711 = vpack.c.b16 %v623, %v619
    %v712 = vpack.c.b16 %v624, %v620
    %v713 = vpack.c.b16 %v625, %v621
    %v714 = vpack.c.b16 %v630, %v626
    %v715 = vpack.c.b16 %v631, %v627
    %v716 = vpack.c.b16 %v632, %v628
    %v717 = vpack.c.b16 %v633, %v629
    %v718 = vpack.c.b16 %v638, %v634
    %v719 = vpack.c.b16 %v639, %v635
    %v720 = vpack.c.b16 %v640, %v636
    %v721 = vpack.c.b16 %v641, %v637
    %v722 = vpack.c.b16 %v646, %v642
    %v723 = vpack.c.b16 %v647, %v643
    %v724 = vpack.c.b16 %v648, %v644
    %v725 = vpack.c.b16 %v649, %v645
    %v726 = vpack.c.b16 %v654, %v650
    %v727 = vpack.c.b16 %v655, %v651
    %v728 = vpack.c.b16 %v656, %v652
    %v729 = vpack.c.b16 %v657, %v653
    %v730 = vpack.c.b16 %v662, %v658
    %v731 = vpack.c.b16 %v663, %v659
    %v732 = vpack.c.b16 %v664, %v660
    %v733 = vpack.c.b16 %v665, %v661
    %v734 = vpack.c.b16 %v670, %v666
    %v735 = vpack.c.b16 %v671, %v667
    %v736 = vpack.c.b16 %v672, %v668
    %v737 = vpack.c.b16 %v673, %v669
    %802 = vmatpush.bf16.msra.mxu0 %v702
    %803 = vmatpush.bf16.msra.mxu0 %v698
    %804 = vmatpush.bf16.msra.mxu0 %v694
    %805 = vmatpush.bf16.msra.mxu0 %v690
    %806 = vmatpush.bf16.msra.mxu0 %v686
    %807 = vmatpush.bf16.msra.mxu0 %v682
    %808 = vmatpush.bf16.msra.mxu0 %v678
    %809 = vmatpush.bf16.msra.mxu0 %v674
    %810 = vmatmul.bf16.gmra.mxu0 %v416
    %v811 = vpop.f32.mrf.mxu0
    %v812 = vadd.f32 0.0, %v811
    %v813 = vpop.f32.mrf.mxu0
    %814 = vdwg.mxu0
    %815 = vmatpush.bf16.msra.mxu0 %v734
    %816 = vmatpush.bf16.msra.mxu0 %v730
    %817 = vmatpush.bf16.msra.mxu0 %v726
    %818 = vmatpush.bf16.msra.mxu0 %v722
    %819 = vmatpush.bf16.msra.mxu0 %v718
    %820 = vmatpush.bf16.msra.mxu0 %v714
    %821 = vmatpush.bf16.msra.mxu0 %v710
    %822 = vmatpush.bf16.msra.mxu0 %v706
    %823 = vmatmul.bf16.gmra.mxu0 %v417
    %v824 = vpop.f32.mrf.mxu0
    %v825 = vadd.f32 %v812, %v824
    %v826 = vpop.f32.mrf.mxu0
    %827 = vdwg.mxu0
    %828 = vmatpush.bf16.msra.mxu0 %v703
    %829 = vmatpush.bf16.msra.mxu0 %v699
    %830 = vmatpush.bf16.msra.mxu0 %v695
    %831 = vmatpush.bf16.msra.mxu0 %v691
    %832 = vmatpush.bf16.msra.mxu0 %v687
    %833 = vmatpush.bf16.msra.mxu0 %v683
    %834 = vmatpush.bf16.msra.mxu0 %v679
    %835 = vmatpush.bf16.msra.mxu0 %v675
    %836 = vmatmul.bf16.gmra.mxu0 %v416
    %v837 = vpop.f32.mrf.mxu0
    %v838 = vadd.f32 0.0, %v837
    %v839 = vpop.f32.mrf.mxu0
    %840 = vdwg.mxu0
    %841 = vmatpush.bf16.msra.mxu0 %v735
    %842 = vmatpush.bf16.msra.mxu0 %v731
    %843 = vmatpush.bf16.msra.mxu0 %v727
    %844 = vmatpush.bf16.msra.mxu0 %v723
    %845 = vmatpush.bf16.msra.mxu0 %v719
    %846 = vmatpush.bf16.msra.mxu0 %v715
    %847 = vmatpush.bf16.msra.mxu0 %v711
    %848 = vmatpush.bf16.msra.mxu0 %v707
    %849 = vmatmul.bf16.gmra.mxu0 %v417
    %v850 = vpop.f32.mrf.mxu0
    %v851 = vadd.f32 %v838, %v850
    %v852 = vpop.f32.mrf.mxu0
    %853 = vdwg.mxu0
    %854 = vmatpush.bf16.msra.mxu0 %v704
    %855 = vmatpush.bf16.msra.mxu0 %v700
    %856 = vmatpush.bf16.msra.mxu0 %v696
    %857 = vmatpush.bf16.msra.mxu0 %v692
    %858 = vmatpush.bf16.msra.mxu0 %v688
    %859 = vmatpush.bf16.msra.mxu0 %v684
    %860 = vmatpush.bf16.msra.mxu0 %v680
    %861 = vmatpush.bf16.msra.mxu0 %v676
    %862 = vmatmul.bf16.gmra.mxu0 %v416
    %v863 = vpop.f32.mrf.mxu0
    %v864 = vadd.f32 0.0, %v863
    %v865 = vpop.f32.mrf.mxu0
    %866 = vdwg.mxu0
    %867 = vmatpush.bf16.msra.mxu0 %v736
    %868 = vmatpush.bf16.msra.mxu0 %v732
    %869 = vmatpush.bf16.msra.mxu0 %v728
    %870 = vmatpush.bf16.msra.mxu0 %v724
    %871 = vmatpush.bf16.msra.mxu0 %v720
    %872 = vmatpush.bf16.msra.mxu0 %v716
    %873 = vmatpush.bf16.msra.mxu0 %v712
    %874 = vmatpush.bf16.msra.mxu0 %v708
    %875 = vmatmul.bf16.gmra.mxu0 %v417
    %v876 = vpop.f32.mrf.mxu0
    %v877 = vadd.f32 %v864, %v876
    %v878 = vpop.f32.mrf.mxu0
    %879 = vdwg.mxu0
    %880 = vmatpush.bf16.msra.mxu0 %v705
    %881 = vmatpush.bf16.msra.mxu0 %v701
    %882 = vmatpush.bf16.msra.mxu0 %v697
    %883 = vmatpush.bf16.msra.mxu0 %v693
    %884 = vmatpush.bf16.msra.mxu0 %v689
    %885 = vmatpush.bf16.msra.mxu0 %v685
    %886 = vmatpush.bf16.msra.mxu0 %v681
    %887 = vmatpush.bf16.msra.mxu0 %v677
    %888 = vmatmul.bf16.gmra.mxu0 %v416
    %v889 = vpop.f32.mrf.mxu0
    %v890 = vadd.f32 0.0, %v889
    %v891 = vpop.f32.mrf.mxu0
    %892 = vdwg.mxu0
    %893 = vmatpush.bf16.msra.mxu0 %v737
    %894 = vmatpush.bf16.msra.mxu0 %v733
    %895 = vmatpush.bf16.msra.mxu0 %v729
    %896 = vmatpush.bf16.msra.mxu0 %v725
    %897 = vmatpush.bf16.msra.mxu0 %v721
    %898 = vmatpush.bf16.msra.mxu0 %v717
    %899 = vmatpush.bf16.msra.mxu0 %v713
    %900 = vmatpush.bf16.msra.mxu0 %v709
    %901 = vmatmul.bf16.gmra.mxu0 %v417
    %v902 = vpop.f32.mrf.mxu0
    %v903 = vadd.f32 %v890, %v902
    %v904 = vpop.f32.mrf.mxu0
    %905 = vdwg.mxu0
    %v906 = vrot.slane %v825, 4
    %v907 = vadd.f32 %v825, %v906
    %v908 = vrot.slane %v907, 2
    %v909 = vadd.f32 %v907, %v908
    %v910 = vrot.slane %v909, 1
    %v911 = vadd.f32 %v909, %v910
    %v912 = vrot.slane %v851, 4
    %v913 = vadd.f32 %v851, %v912
    %v914 = vrot.slane %v913, 2
    %v915 = vadd.f32 %v913, %v914
    %v916 = vrot.slane %v915, 1
    %v917 = vadd.f32 %v915, %v916
    %v918 = vrot.slane %v877, 4
    %v919 = vadd.f32 %v877, %v918
    %v920 = vrot.slane %v919, 2
    %v921 = vadd.f32 %v919, %v920
    %v922 = vrot.slane %v921, 1
    %v923 = vadd.f32 %v921, %v922
    %v924 = vrot.slane %v903, 4
    %v925 = vadd.f32 %v903, %v924
    %v926 = vrot.slane %v925, 2
    %v927 = vadd.f32 %v925, %v926
    %v928 = vrot.slane %v927, 1
    %v929 = vadd.f32 %v927, %v928
    %v930 = vmul.f32 %v911, %v348
    %v931 = vmul.f32 %v917, %v348
    %v932 = vmul.f32 %v923, %v348
    %v933 = vmul.f32 %v929, %v348
    %v934 = vsub.f32 %v825, %v930
    %v935 = vsub.f32 %v851, %v931
    %v936 = vsub.f32 %v877, %v932
    %v937 = vsub.f32 %v903, %v933
    %v938 = vmul.f32 %v934, %v934
    %v939 = vmul.f32 %v935, %v935
    %v940 = vmul.f32 %v936, %v936
    %v941 = vmul.f32 %v937, %v937
    %v942 = vrot.slane %v938, 4
    %v943 = vadd.f32 %v938, %v942
    %v944 = vrot.slane %v943, 2
    %v945 = vadd.f32 %v943, %v944
    %v946 = vrot.slane %v945, 1
    %v947 = vadd.f32 %v945, %v946
    %v948 = vrot.slane %v939, 4
    %v949 = vadd.f32 %v939, %v948
    %v950 = vrot.slane %v949, 2
    %v951 = vadd.f32 %v949, %v950
    %v952 = vrot.slane %v951, 1
    %v953 = vadd.f32 %v951, %v952
    %v954 = vrot.slane %v940, 4
    %v955 = vadd.f32 %v940, %v954
    %v956 = vrot.slane %v955, 2
    %v957 = vadd.f32 %v955, %v956
    %v958 = vrot.slane %v957, 1
    %v959 = vadd.f32 %v957, %v958
    %v960 = vrot.slane %v941, 4
    %v961 = vadd.f32 %v941, %v960
    %v962 = vrot.slane %v961, 2
    %v963 = vadd.f32 %v961, %v962
    %v964 = vrot.slane %v963, 1
    %v965 = vadd.f32 %v963, %v964
    %v966 = vmul.f32 %v947, %v348
    %v967 = vmul.f32 %v953, %v348
    %v968 = vmul.f32 %v959, %v348
    %v969 = vmul.f32 %v965, %v348
    %v970 = vadd.f32 %v966, 1e-05
    %v971 = vadd.f32 %v967, 1e-05
    %v972 = vadd.f32 %v968, 1e-05
    %v973 = vadd.f32 %v969, 1e-05
    %v974 = vrsqrt.pop %v970
    %v975 = vmul.f32 %v974, %v970
    %v976 = vmul.f32 %v975, %v974
    %v977 = vmul.f32 0.5, %v976
    %v978 = vsub.f32 1.5, %v977
    %v979 = vmul.f32 %v974, %v978
    %vm980 = vweird.f32 %v970
    %vm981 = vweird.f32 %v974
    %vm982 = vmor %vm980, %vm981
    %v983 = vsel %vm982, %v974, %v979
    %v984 = vrsqrt.pop %v971
    %v985 = vmul.f32 %v984, %v971
    %v986 = vmul.f32 %v985, %v984
    %v987 = vmul.f32 0.5, %v986
    %v988 = vsub.f32 1.5, %v987
    %v989 = vmul.f32 %v984, %v988
    %vm990 = vweird.f32 %v971
    %vm991 = vweird.f32 %v984
    %vm992 = vmor %vm990, %vm991
    %v993 = vsel %vm992, %v984, %v989
    %v994 = vrsqrt.pop %v972
    %v995 = vmul.f32 %v994, %v972
    %v996 = vmul.f32 %v995, %v994
    %v997 = vmul.f32 0.5, %v996
    %v998 = vsub.f32 1.5, %v997
    %v999 = vmul.f32 %v994, %v998
    %vm1000 = vweird.f32 %v972
    %vm1001 = vweird.f32 %v994
    %vm1002 = vmor %vm1000, %vm1001
    %v1003 = vsel %vm1002, %v994, %v999
    %v1004 = vrsqrt.pop %v973
    %v1005 = vmul.f32 %v1004, %v973
    %v1006 = vmul.f32 %v1005, %v1004
    %v1007 = vmul.f32 0.5, %v1006
    %v1008 = vsub.f32 1.5, %v1007
    %v1009 = vmul.f32 %v1004, %v1008
    %vm1010 = vweird.f32 %v973
    %vm1011 = vweird.f32 %v1004
    %vm1012 = vmor %vm1010, %vm1011
    %v1013 = vsel %vm1012, %v1004, %v1009
    %v1018 = vrot.slane %v993, 7
    %v1019 = vrot.slane %v1003, 6
    %v1020 = vrot.slane %v1013, 5
    %v1021 = vsel %vm394, %v983, %v1018
    %vm1022 = vcmask 1042434
    %v1023 = vsel %vm1022, %v1019, %v1020
    %vm1024 = vcmask 1041408
    %v1025 = vsel %vm1024, %v1021, %v1023
    %v1027 = vmul.f32 %v139, %v1025
    %v1029 = vperm.slane %v1027, 0
    %v1030 = vperm.slane %v1027, 1
    %v1031 = vperm.slane %v1027, 2
    %v1032 = vperm.slane %v1027, 3
    %v1037 = vmul.f32 %v934, %v1029
    %v1038 = vmul.f32 %v935, %v1030
    %v1039 = vmul.f32 %v936, %v1031
    %v1040 = vmul.f32 %v937, %v1032
    %v1042 = vperm.slane %v141, 0
    %v1043 = vperm.slane %v141, 1
    %v1044 = vperm.slane %v141, 2
    %v1045 = vperm.slane %v141, 3
    %v1050 = vadd.f32 %v1037, %v1042
    %v1051 = vadd.f32 %v1038, %v1043
    %v1052 = vadd.f32 %v1039, %v1044
    %v1053 = vadd.f32 %v1040, %v1045
    %v1054 = vmul.f32 %v1050, 0.2
    %v1055 = vmul.f32 %v1051, 0.2
    %v1056 = vmul.f32 %v1052, 0.2
    %v1057 = vmul.f32 %v1053, 0.2
    %v1058 = vmax.f32 %v1050, %v1054
    %v1059 = vmax.f32 %v1051, %v1055
    %v1060 = vmax.f32 %v1052, %v1056
    %v1061 = vmax.f32 %v1053, %v1057
    %v1062 = vpack.c.bf16 %v1058, %v1058
    %v1063 = vpack.c.bf16 %v1059, %v1059
    %v1064 = vpack.c.bf16 %v1060, %v1060
    %v1065 = vpack.c.bf16 %v1061, %v1061
    %v1066 = vld [vmem:[#allocation10] sm:$0xff]
    %v1067 = vld [vmem:[#allocation10 + $0x8] sm:$0xff]
    %v1068 = vld [vmem:[#allocation10 + $0x10] sm:$0xff]
    %v1069 = vld [vmem:[#allocation10 + $0x18] sm:$0xff]
    %v1070 = vld [vmem:[#allocation10 + $0x20] sm:$0xff]
    %v1071 = vld [vmem:[#allocation10 + $0x28] sm:$0xff]
    %v1072 = vld [vmem:[#allocation10 + $0x30] sm:$0xff]
    %v1073 = vld [vmem:[#allocation10 + $0x38] sm:$0xff]
    %v1074 = vld [vmem:[#allocation10 + $0x40] sm:$0xff]
    %v1075 = vld [vmem:[#allocation10 + $0x48] sm:$0xff]
    %v1076 = vld [vmem:[#allocation10 + $0x50] sm:$0xff]
    %v1077 = vld [vmem:[#allocation10 + $0x58] sm:$0xff]
    %v1078 = vld [vmem:[#allocation10 + $0x60] sm:$0xff]
    %v1079 = vld [vmem:[#allocation10 + $0x68] sm:$0xff]
    %v1080 = vld [vmem:[#allocation10 + $0x70] sm:$0xff]
    %v1081 = vld [vmem:[#allocation10 + $0x78] sm:$0xff]
    %v1082 = vld [vmem:[#allocation10 + $0x80] sm:$0xff]
    %v1083 = vld [vmem:[#allocation10 + $0x88] sm:$0xff]
    %v1084 = vld [vmem:[#allocation10 + $0x90] sm:$0xff]
    %v1085 = vld [vmem:[#allocation10 + $0x98] sm:$0xff]
    %v1086 = vld [vmem:[#allocation10 + $0xa0] sm:$0xff]
    %v1087 = vld [vmem:[#allocation10 + $0xa8] sm:$0xff]
    %v1088 = vld [vmem:[#allocation10 + $0xb0] sm:$0xff]
    %v1089 = vld [vmem:[#allocation10 + $0xb8] sm:$0xff]
    %v1090 = vld [vmem:[#allocation10 + $0xc0] sm:$0xff]
    %v1091 = vld [vmem:[#allocation10 + $0xc8] sm:$0xff]
    %v1092 = vld [vmem:[#allocation10 + $0xd0] sm:$0xff]
    %v1093 = vld [vmem:[#allocation10 + $0xd8] sm:$0xff]
    %v1094 = vld [vmem:[#allocation10 + $0xe0] sm:$0xff]
    %v1095 = vld [vmem:[#allocation10 + $0xe8] sm:$0xff]
    %v1096 = vld [vmem:[#allocation10 + $0xf0] sm:$0xff]
    %v1097 = vld [vmem:[#allocation10 + $0xf8] sm:$0xff]
    %v1098 = vld [vmem:[#allocation10 + $0x100] sm:$0xff]
    %v1099 = vld [vmem:[#allocation10 + $0x108] sm:$0xff]
    %v1100 = vld [vmem:[#allocation10 + $0x110] sm:$0xff]
    %v1101 = vld [vmem:[#allocation10 + $0x118] sm:$0xff]
    %v1102 = vld [vmem:[#allocation10 + $0x120] sm:$0xff]
    %v1103 = vld [vmem:[#allocation10 + $0x128] sm:$0xff]
    %v1104 = vld [vmem:[#allocation10 + $0x130] sm:$0xff]
    %v1105 = vld [vmem:[#allocation10 + $0x138] sm:$0xff]
    %v1106 = vld [vmem:[#allocation10 + $0x140] sm:$0xff]
    %v1107 = vld [vmem:[#allocation10 + $0x148] sm:$0xff]
    %v1108 = vld [vmem:[#allocation10 + $0x150] sm:$0xff]
    %v1109 = vld [vmem:[#allocation10 + $0x158] sm:$0xff]
    %v1110 = vld [vmem:[#allocation10 + $0x160] sm:$0xff]
    %v1111 = vld [vmem:[#allocation10 + $0x168] sm:$0xff]
    %v1112 = vld [vmem:[#allocation10 + $0x170] sm:$0xff]
    %v1113 = vld [vmem:[#allocation10 + $0x178] sm:$0xff]
    %v1114 = vld [vmem:[#allocation10 + $0x180] sm:$0xff]
    %v1115 = vld [vmem:[#allocation10 + $0x188] sm:$0xff]
    %v1116 = vld [vmem:[#allocation10 + $0x190] sm:$0xff]
    %v1117 = vld [vmem:[#allocation10 + $0x198] sm:$0xff]
    %v1118 = vld [vmem:[#allocation10 + $0x1a0] sm:$0xff]
    %v1119 = vld [vmem:[#allocation10 + $0x1a8] sm:$0xff]
    %v1120 = vld [vmem:[#allocation10 + $0x1b0] sm:$0xff]
    %v1121 = vld [vmem:[#allocation10 + $0x1b8] sm:$0xff]
    %v1122 = vld [vmem:[#allocation10 + $0x1c0] sm:$0xff]
    %v1123 = vld [vmem:[#allocation10 + $0x1c8] sm:$0xff]
    %v1124 = vld [vmem:[#allocation10 + $0x1d0] sm:$0xff]
    %v1125 = vld [vmem:[#allocation10 + $0x1d8] sm:$0xff]
    %v1126 = vld [vmem:[#allocation10 + $0x1e0] sm:$0xff]
    %v1127 = vld [vmem:[#allocation10 + $0x1e8] sm:$0xff]
    %v1128 = vld [vmem:[#allocation10 + $0x1f0] sm:$0xff]
    %v1129 = vld [vmem:[#allocation10 + $0x1f8] sm:$0xff]
    %v1130 = vld [vmem:[#allocation10 + $0x200] sm:$0xff]
    %v1131 = vld [vmem:[#allocation10 + $0x208] sm:$0xff]
    %v1132 = vld [vmem:[#allocation10 + $0x210] sm:$0xff]
    %v1133 = vld [vmem:[#allocation10 + $0x218] sm:$0xff]
    %v1134 = vld [vmem:[#allocation10 + $0x220] sm:$0xff]
    %v1135 = vld [vmem:[#allocation10 + $0x228] sm:$0xff]
    %v1136 = vld [vmem:[#allocation10 + $0x230] sm:$0xff]
    %v1137 = vld [vmem:[#allocation10 + $0x238] sm:$0xff]
    %v1138 = vld [vmem:[#allocation10 + $0x240] sm:$0xff]
    %v1139 = vld [vmem:[#allocation10 + $0x248] sm:$0xff]
    %v1140 = vld [vmem:[#allocation10 + $0x250] sm:$0xff]
    %v1141 = vld [vmem:[#allocation10 + $0x258] sm:$0xff]
    %v1142 = vld [vmem:[#allocation10 + $0x260] sm:$0xff]
    %v1143 = vld [vmem:[#allocation10 + $0x268] sm:$0xff]
    %v1144 = vld [vmem:[#allocation10 + $0x270] sm:$0xff]
    %v1145 = vld [vmem:[#allocation10 + $0x278] sm:$0xff]
    %v1146 = vld [vmem:[#allocation10 + $0x280] sm:$0xff]
    %v1147 = vld [vmem:[#allocation10 + $0x288] sm:$0xff]
    %v1148 = vld [vmem:[#allocation10 + $0x290] sm:$0xff]
    %v1149 = vld [vmem:[#allocation10 + $0x298] sm:$0xff]
    %v1150 = vld [vmem:[#allocation10 + $0x2a0] sm:$0xff]
    %v1151 = vld [vmem:[#allocation10 + $0x2a8] sm:$0xff]
    %v1152 = vld [vmem:[#allocation10 + $0x2b0] sm:$0xff]
    %v1153 = vld [vmem:[#allocation10 + $0x2b8] sm:$0xff]
    %v1154 = vld [vmem:[#allocation10 + $0x2c0] sm:$0xff]
    %v1155 = vld [vmem:[#allocation10 + $0x2c8] sm:$0xff]
    %v1156 = vld [vmem:[#allocation10 + $0x2d0] sm:$0xff]
    %v1157 = vld [vmem:[#allocation10 + $0x2d8] sm:$0xff]
    %v1158 = vld [vmem:[#allocation10 + $0x2e0] sm:$0xff]
    %v1159 = vld [vmem:[#allocation10 + $0x2e8] sm:$0xff]
    %v1160 = vld [vmem:[#allocation10 + $0x2f0] sm:$0xff]
    %v1161 = vld [vmem:[#allocation10 + $0x2f8] sm:$0xff]
    %v1162 = vld [vmem:[#allocation10 + $0x300] sm:$0xff]
    %v1163 = vld [vmem:[#allocation10 + $0x308] sm:$0xff]
    %v1164 = vld [vmem:[#allocation10 + $0x310] sm:$0xff]
    %v1165 = vld [vmem:[#allocation10 + $0x318] sm:$0xff]
    %v1166 = vld [vmem:[#allocation10 + $0x320] sm:$0xff]
    %v1167 = vld [vmem:[#allocation10 + $0x328] sm:$0xff]
    %v1168 = vld [vmem:[#allocation10 + $0x330] sm:$0xff]
    %v1169 = vld [vmem:[#allocation10 + $0x338] sm:$0xff]
    %v1170 = vld [vmem:[#allocation10 + $0x340] sm:$0xff]
    %v1171 = vld [vmem:[#allocation10 + $0x348] sm:$0xff]
    %v1172 = vld [vmem:[#allocation10 + $0x350] sm:$0xff]
    %v1173 = vld [vmem:[#allocation10 + $0x358] sm:$0xff]
    %v1174 = vld [vmem:[#allocation10 + $0x360] sm:$0xff]
    %v1175 = vld [vmem:[#allocation10 + $0x368] sm:$0xff]
    %v1176 = vld [vmem:[#allocation10 + $0x370] sm:$0xff]
    %v1177 = vld [vmem:[#allocation10 + $0x378] sm:$0xff]
    %v1178 = vld [vmem:[#allocation10 + $0x380] sm:$0xff]
    %v1179 = vld [vmem:[#allocation10 + $0x388] sm:$0xff]
    %v1180 = vld [vmem:[#allocation10 + $0x390] sm:$0xff]
    %v1181 = vld [vmem:[#allocation10 + $0x398] sm:$0xff]
    %v1182 = vld [vmem:[#allocation10 + $0x3a0] sm:$0xff]
    %v1183 = vld [vmem:[#allocation10 + $0x3a8] sm:$0xff]
    %v1184 = vld [vmem:[#allocation10 + $0x3b0] sm:$0xff]
    %v1185 = vld [vmem:[#allocation10 + $0x3b8] sm:$0xff]
    %v1186 = vld [vmem:[#allocation10 + $0x3c0] sm:$0xff]
    %v1187 = vld [vmem:[#allocation10 + $0x3c8] sm:$0xff]
    %v1188 = vld [vmem:[#allocation10 + $0x3d0] sm:$0xff]
    %v1189 = vld [vmem:[#allocation10 + $0x3d8] sm:$0xff]
    %v1190 = vld [vmem:[#allocation10 + $0x3e0] sm:$0xff]
    %v1191 = vld [vmem:[#allocation10 + $0x3e8] sm:$0xff]
    %v1192 = vld [vmem:[#allocation10 + $0x3f0] sm:$0xff]
    %v1193 = vld [vmem:[#allocation10 + $0x3f8] sm:$0xff]
    %v1194 = vld [vmem:[#allocation10 + $0x400] sm:$0xff]
    %v1195 = vld [vmem:[#allocation10 + $0x408] sm:$0xff]
    %v1196 = vld [vmem:[#allocation10 + $0x410] sm:$0xff]
    %v1197 = vld [vmem:[#allocation10 + $0x418] sm:$0xff]
    %v1198 = vld [vmem:[#allocation10 + $0x420] sm:$0xff]
    %v1199 = vld [vmem:[#allocation10 + $0x428] sm:$0xff]
    %v1200 = vld [vmem:[#allocation10 + $0x430] sm:$0xff]
    %v1201 = vld [vmem:[#allocation10 + $0x438] sm:$0xff]
    %v1202 = vld [vmem:[#allocation10 + $0x440] sm:$0xff]
    %v1203 = vld [vmem:[#allocation10 + $0x448] sm:$0xff]
    %v1204 = vld [vmem:[#allocation10 + $0x450] sm:$0xff]
    %v1205 = vld [vmem:[#allocation10 + $0x458] sm:$0xff]
    %v1206 = vld [vmem:[#allocation10 + $0x460] sm:$0xff]
    %v1207 = vld [vmem:[#allocation10 + $0x468] sm:$0xff]
    %v1208 = vld [vmem:[#allocation10 + $0x470] sm:$0xff]
    %v1209 = vld [vmem:[#allocation10 + $0x478] sm:$0xff]
    %v1210 = vld [vmem:[#allocation10 + $0x480] sm:$0xff]
    %v1211 = vld [vmem:[#allocation10 + $0x488] sm:$0xff]
    %v1212 = vld [vmem:[#allocation10 + $0x490] sm:$0xff]
    %v1213 = vld [vmem:[#allocation10 + $0x498] sm:$0xff]
    %v1214 = vld [vmem:[#allocation10 + $0x4a0] sm:$0xff]
    %v1215 = vld [vmem:[#allocation10 + $0x4a8] sm:$0xff]
    %v1216 = vld [vmem:[#allocation10 + $0x4b0] sm:$0xff]
    %v1217 = vld [vmem:[#allocation10 + $0x4b8] sm:$0xff]
    %v1218 = vld [vmem:[#allocation10 + $0x4c0] sm:$0xff]
    %v1219 = vld [vmem:[#allocation10 + $0x4c8] sm:$0xff]
    %v1220 = vld [vmem:[#allocation10 + $0x4d0] sm:$0xff]
    %v1221 = vld [vmem:[#allocation10 + $0x4d8] sm:$0xff]
    %v1222 = vld [vmem:[#allocation10 + $0x4e0] sm:$0xff]
    %v1223 = vld [vmem:[#allocation10 + $0x4e8] sm:$0xff]
    %v1224 = vld [vmem:[#allocation10 + $0x4f0] sm:$0xff]
    %v1225 = vld [vmem:[#allocation10 + $0x4f8] sm:$0xff]
    %v1226 = vld [vmem:[#allocation10 + $0x500] sm:$0xff]
    %v1227 = vld [vmem:[#allocation10 + $0x508] sm:$0xff]
    %v1228 = vld [vmem:[#allocation10 + $0x510] sm:$0xff]
    %v1229 = vld [vmem:[#allocation10 + $0x518] sm:$0xff]
    %v1230 = vld [vmem:[#allocation10 + $0x520] sm:$0xff]
    %v1231 = vld [vmem:[#allocation10 + $0x528] sm:$0xff]
    %v1232 = vld [vmem:[#allocation10 + $0x530] sm:$0xff]
    %v1233 = vld [vmem:[#allocation10 + $0x538] sm:$0xff]
    %v1234 = vld [vmem:[#allocation10 + $0x540] sm:$0xff]
    %v1235 = vld [vmem:[#allocation10 + $0x548] sm:$0xff]
    %v1236 = vld [vmem:[#allocation10 + $0x550] sm:$0xff]
    %v1237 = vld [vmem:[#allocation10 + $0x558] sm:$0xff]
    %v1238 = vld [vmem:[#allocation10 + $0x560] sm:$0xff]
    %v1239 = vld [vmem:[#allocation10 + $0x568] sm:$0xff]
    %v1240 = vld [vmem:[#allocation10 + $0x570] sm:$0xff]
    %v1241 = vld [vmem:[#allocation10 + $0x578] sm:$0xff]
    %v1242 = vld [vmem:[#allocation10 + $0x580] sm:$0xff]
    %v1243 = vld [vmem:[#allocation10 + $0x588] sm:$0xff]
    %v1244 = vld [vmem:[#allocation10 + $0x590] sm:$0xff]
    %v1245 = vld [vmem:[#allocation10 + $0x598] sm:$0xff]
    %v1246 = vld [vmem:[#allocation10 + $0x5a0] sm:$0xff]
    %v1247 = vld [vmem:[#allocation10 + $0x5a8] sm:$0xff]
    %v1248 = vld [vmem:[#allocation10 + $0x5b0] sm:$0xff]
    %v1249 = vld [vmem:[#allocation10 + $0x5b8] sm:$0xff]
    %v1250 = vld [vmem:[#allocation10 + $0x5c0] sm:$0xff]
    %v1251 = vld [vmem:[#allocation10 + $0x5c8] sm:$0xff]
    %v1252 = vld [vmem:[#allocation10 + $0x5d0] sm:$0xff]
    %v1253 = vld [vmem:[#allocation10 + $0x5d8] sm:$0xff]
    %v1254 = vld [vmem:[#allocation10 + $0x5e0] sm:$0xff]
    %v1255 = vld [vmem:[#allocation10 + $0x5e8] sm:$0xff]
    %v1256 = vld [vmem:[#allocation10 + $0x5f0] sm:$0xff]
    %v1257 = vld [vmem:[#allocation10 + $0x5f8] sm:$0xff]
    %v1258 = vld [vmem:[#allocation10 + $0x600] sm:$0xff]
    %v1259 = vld [vmem:[#allocation10 + $0x608] sm:$0xff]
    %v1260 = vld [vmem:[#allocation10 + $0x610] sm:$0xff]
    %v1261 = vld [vmem:[#allocation10 + $0x618] sm:$0xff]
    %v1262 = vld [vmem:[#allocation10 + $0x620] sm:$0xff]
    %v1263 = vld [vmem:[#allocation10 + $0x628] sm:$0xff]
    %v1264 = vld [vmem:[#allocation10 + $0x630] sm:$0xff]
    %v1265 = vld [vmem:[#allocation10 + $0x638] sm:$0xff]
    %v1266 = vld [vmem:[#allocation10 + $0x640] sm:$0xff]
    %v1267 = vld [vmem:[#allocation10 + $0x648] sm:$0xff]
    %v1268 = vld [vmem:[#allocation10 + $0x650] sm:$0xff]
    %v1269 = vld [vmem:[#allocation10 + $0x658] sm:$0xff]
    %v1270 = vld [vmem:[#allocation10 + $0x660] sm:$0xff]
    %v1271 = vld [vmem:[#allocation10 + $0x668] sm:$0xff]
    %v1272 = vld [vmem:[#allocation10 + $0x670] sm:$0xff]
    %v1273 = vld [vmem:[#allocation10 + $0x678] sm:$0xff]
    %v1274 = vld [vmem:[#allocation10 + $0x680] sm:$0xff]
    %v1275 = vld [vmem:[#allocation10 + $0x688] sm:$0xff]
    %v1276 = vld [vmem:[#allocation10 + $0x690] sm:$0xff]
    %v1277 = vld [vmem:[#allocation10 + $0x698] sm:$0xff]
    %v1278 = vld [vmem:[#allocation10 + $0x6a0] sm:$0xff]
    %v1279 = vld [vmem:[#allocation10 + $0x6a8] sm:$0xff]
    %v1280 = vld [vmem:[#allocation10 + $0x6b0] sm:$0xff]
    %v1281 = vld [vmem:[#allocation10 + $0x6b8] sm:$0xff]
    %v1282 = vld [vmem:[#allocation10 + $0x6c0] sm:$0xff]
    %v1283 = vld [vmem:[#allocation10 + $0x6c8] sm:$0xff]
    %v1284 = vld [vmem:[#allocation10 + $0x6d0] sm:$0xff]
    %v1285 = vld [vmem:[#allocation10 + $0x6d8] sm:$0xff]
    %v1286 = vld [vmem:[#allocation10 + $0x6e0] sm:$0xff]
    %v1287 = vld [vmem:[#allocation10 + $0x6e8] sm:$0xff]
    %v1288 = vld [vmem:[#allocation10 + $0x6f0] sm:$0xff]
    %v1289 = vld [vmem:[#allocation10 + $0x6f8] sm:$0xff]
    %v1290 = vld [vmem:[#allocation10 + $0x700] sm:$0xff]
    %v1291 = vld [vmem:[#allocation10 + $0x708] sm:$0xff]
    %v1292 = vld [vmem:[#allocation10 + $0x710] sm:$0xff]
    %v1293 = vld [vmem:[#allocation10 + $0x718] sm:$0xff]
    %v1294 = vld [vmem:[#allocation10 + $0x720] sm:$0xff]
    %v1295 = vld [vmem:[#allocation10 + $0x728] sm:$0xff]
    %v1296 = vld [vmem:[#allocation10 + $0x730] sm:$0xff]
    %v1297 = vld [vmem:[#allocation10 + $0x738] sm:$0xff]
    %v1298 = vld [vmem:[#allocation10 + $0x740] sm:$0xff]
    %v1299 = vld [vmem:[#allocation10 + $0x748] sm:$0xff]
    %v1300 = vld [vmem:[#allocation10 + $0x750] sm:$0xff]
    %v1301 = vld [vmem:[#allocation10 + $0x758] sm:$0xff]
    %v1302 = vld [vmem:[#allocation10 + $0x760] sm:$0xff]
    %v1303 = vld [vmem:[#allocation10 + $0x768] sm:$0xff]
    %v1304 = vld [vmem:[#allocation10 + $0x770] sm:$0xff]
    %v1305 = vld [vmem:[#allocation10 + $0x778] sm:$0xff]
    %v1306 = vld [vmem:[#allocation10 + $0x780] sm:$0xff]
    %v1307 = vld [vmem:[#allocation10 + $0x788] sm:$0xff]
    %v1308 = vld [vmem:[#allocation10 + $0x790] sm:$0xff]
    %v1309 = vld [vmem:[#allocation10 + $0x798] sm:$0xff]
    %v1310 = vld [vmem:[#allocation10 + $0x7a0] sm:$0xff]
    %v1311 = vld [vmem:[#allocation10 + $0x7a8] sm:$0xff]
    %v1312 = vld [vmem:[#allocation10 + $0x7b0] sm:$0xff]
    %v1313 = vld [vmem:[#allocation10 + $0x7b8] sm:$0xff]
    %v1314 = vld [vmem:[#allocation10 + $0x7c0] sm:$0xff]
    %v1315 = vld [vmem:[#allocation10 + $0x7c8] sm:$0xff]
    %v1316 = vld [vmem:[#allocation10 + $0x7d0] sm:$0xff]
    %v1317 = vld [vmem:[#allocation10 + $0x7d8] sm:$0xff]
    %v1318 = vld [vmem:[#allocation10 + $0x7e0] sm:$0xff]
    %v1319 = vld [vmem:[#allocation10 + $0x7e8] sm:$0xff]
    %v1320 = vld [vmem:[#allocation10 + $0x7f0] sm:$0xff]
    %v1321 = vld [vmem:[#allocation10 + $0x7f8] sm:$0xff]
    %v1578 = vunpack.c.l.b16 %v1066
    %v1579 = vunpack.c.h.b16 %v1066
    %v1580 = vunpack.c.l.b16 %v1067
    %v1581 = vunpack.c.h.b16 %v1067
    %v1582 = vunpack.c.l.b16 %v1068
    %v1583 = vunpack.c.h.b16 %v1068
    %v1584 = vunpack.c.l.b16 %v1069
    %v1585 = vunpack.c.h.b16 %v1069
    %v1586 = vunpack.c.l.b16 %v1070
    %v1587 = vunpack.c.h.b16 %v1070
    %v1588 = vunpack.c.l.b16 %v1071
    %v1589 = vunpack.c.h.b16 %v1071
    %v1590 = vunpack.c.l.b16 %v1072
    %v1591 = vunpack.c.h.b16 %v1072
    %v1592 = vunpack.c.l.b16 %v1073
    %v1593 = vunpack.c.h.b16 %v1073
    %v1594 = vunpack.c.l.b16 %v1074
    %v1595 = vunpack.c.h.b16 %v1074
    %v1596 = vunpack.c.l.b16 %v1075
    %v1597 = vunpack.c.h.b16 %v1075
    %v1598 = vunpack.c.l.b16 %v1076
    %v1599 = vunpack.c.h.b16 %v1076
    %v1600 = vunpack.c.l.b16 %v1077
    %v1601 = vunpack.c.h.b16 %v1077
    %v1602 = vunpack.c.l.b16 %v1078
    %v1603 = vunpack.c.h.b16 %v1078
    %v1604 = vunpack.c.l.b16 %v1079
    %v1605 = vunpack.c.h.b16 %v1079
    %v1606 = vunpack.c.l.b16 %v1080
    %v1607 = vunpack.c.h.b16 %v1080
    %v1608 = vunpack.c.l.b16 %v1081
    %v1609 = vunpack.c.h.b16 %v1081
    %v1610 = vunpack.c.l.b16 %v1082
    %v1611 = vunpack.c.h.b16 %v1082
    %v1612 = vunpack.c.l.b16 %v1083
    %v1613 = vunpack.c.h.b16 %v1083
    %v1614 = vunpack.c.l.b16 %v1084
    %v1615 = vunpack.c.h.b16 %v1084
    %v1616 = vunpack.c.l.b16 %v1085
    %v1617 = vunpack.c.h.b16 %v1085
    %v1618 = vunpack.c.l.b16 %v1086
    %v1619 = vunpack.c.h.b16 %v1086
    %v1620 = vunpack.c.l.b16 %v1087
    %v1621 = vunpack.c.h.b16 %v1087
    %v1622 = vunpack.c.l.b16 %v1088
    %v1623 = vunpack.c.h.b16 %v1088
    %v1624 = vunpack.c.l.b16 %v1089
    %v1625 = vunpack.c.h.b16 %v1089
    %v1626 = vunpack.c.l.b16 %v1090
    %v1627 = vunpack.c.h.b16 %v1090
    %v1628 = vunpack.c.l.b16 %v1091
    %v1629 = vunpack.c.h.b16 %v1091
    %v1630 = vunpack.c.l.b16 %v1092
    %v1631 = vunpack.c.h.b16 %v1092
    %v1632 = vunpack.c.l.b16 %v1093
    %v1633 = vunpack.c.h.b16 %v1093
    %v1634 = vunpack.c.l.b16 %v1094
    %v1635 = vunpack.c.h.b16 %v1094
    %v1636 = vunpack.c.l.b16 %v1095
    %v1637 = vunpack.c.h.b16 %v1095
    %v1638 = vunpack.c.l.b16 %v1096
    %v1639 = vunpack.c.h.b16 %v1096
    %v1640 = vunpack.c.l.b16 %v1097
    %v1641 = vunpack.c.h.b16 %v1097
    %v1642 = vunpack.c.l.b16 %v1098
    %v1643 = vunpack.c.h.b16 %v1098
    %v1644 = vunpack.c.l.b16 %v1099
    %v1645 = vunpack.c.h.b16 %v1099
    %v1646 = vunpack.c.l.b16 %v1100
    %v1647 = vunpack.c.h.b16 %v1100
    %v1648 = vunpack.c.l.b16 %v1101
    %v1649 = vunpack.c.h.b16 %v1101
    %v1650 = vunpack.c.l.b16 %v1102
    %v1651 = vunpack.c.h.b16 %v1102
    %v1652 = vunpack.c.l.b16 %v1103
    %v1653 = vunpack.c.h.b16 %v1103
    %v1654 = vunpack.c.l.b16 %v1104
    %v1655 = vunpack.c.h.b16 %v1104
    %v1656 = vunpack.c.l.b16 %v1105
    %v1657 = vunpack.c.h.b16 %v1105
    %v1658 = vunpack.c.l.b16 %v1106
    %v1659 = vunpack.c.h.b16 %v1106
    %v1660 = vunpack.c.l.b16 %v1107
    %v1661 = vunpack.c.h.b16 %v1107
    %v1662 = vunpack.c.l.b16 %v1108
    %v1663 = vunpack.c.h.b16 %v1108
    %v1664 = vunpack.c.l.b16 %v1109
    %v1665 = vunpack.c.h.b16 %v1109
    %v1666 = vunpack.c.l.b16 %v1110
    %v1667 = vunpack.c.h.b16 %v1110
    %v1668 = vunpack.c.l.b16 %v1111
    %v1669 = vunpack.c.h.b16 %v1111
    %v1670 = vunpack.c.l.b16 %v1112
    %v1671 = vunpack.c.h.b16 %v1112
    %v1672 = vunpack.c.l.b16 %v1113
    %v1673 = vunpack.c.h.b16 %v1113
    %v1674 = vunpack.c.l.b16 %v1114
    %v1675 = vunpack.c.h.b16 %v1114
    %v1676 = vunpack.c.l.b16 %v1115
    %v1677 = vunpack.c.h.b16 %v1115
    %v1678 = vunpack.c.l.b16 %v1116
    %v1679 = vunpack.c.h.b16 %v1116
    %v1680 = vunpack.c.l.b16 %v1117
    %v1681 = vunpack.c.h.b16 %v1117
    %v1682 = vunpack.c.l.b16 %v1118
    %v1683 = vunpack.c.h.b16 %v1118
    %v1684 = vunpack.c.l.b16 %v1119
    %v1685 = vunpack.c.h.b16 %v1119
    %v1686 = vunpack.c.l.b16 %v1120
    %v1687 = vunpack.c.h.b16 %v1120
    %v1688 = vunpack.c.l.b16 %v1121
    %v1689 = vunpack.c.h.b16 %v1121
    %v1690 = vunpack.c.l.b16 %v1122
    %v1691 = vunpack.c.h.b16 %v1122
    %v1692 = vunpack.c.l.b16 %v1123
    %v1693 = vunpack.c.h.b16 %v1123
    %v1694 = vunpack.c.l.b16 %v1124
    %v1695 = vunpack.c.h.b16 %v1124
    %v1696 = vunpack.c.l.b16 %v1125
    %v1697 = vunpack.c.h.b16 %v1125
    %v1698 = vunpack.c.l.b16 %v1126
    %v1699 = vunpack.c.h.b16 %v1126
    %v1700 = vunpack.c.l.b16 %v1127
    %v1701 = vunpack.c.h.b16 %v1127
    %v1702 = vunpack.c.l.b16 %v1128
    %v1703 = vunpack.c.h.b16 %v1128
    %v1704 = vunpack.c.l.b16 %v1129
    %v1705 = vunpack.c.h.b16 %v1129
    %v1706 = vunpack.c.l.b16 %v1130
    %v1707 = vunpack.c.h.b16 %v1130
    %v1708 = vunpack.c.l.b16 %v1131
    %v1709 = vunpack.c.h.b16 %v1131
    %v1710 = vunpack.c.l.b16 %v1132
    %v1711 = vunpack.c.h.b16 %v1132
    %v1712 = vunpack.c.l.b16 %v1133
    %v1713 = vunpack.c.h.b16 %v1133
    %v1714 = vunpack.c.l.b16 %v1134
    %v1715 = vunpack.c.h.b16 %v1134
    %v1716 = vunpack.c.l.b16 %v1135
    %v1717 = vunpack.c.h.b16 %v1135
    %v1718 = vunpack.c.l.b16 %v1136
    %v1719 = vunpack.c.h.b16 %v1136
    %v1720 = vunpack.c.l.b16 %v1137
    %v1721 = vunpack.c.h.b16 %v1137
    %v1722 = vunpack.c.l.b16 %v1138
    %v1723 = vunpack.c.h.b16 %v1138
    %v1724 = vunpack.c.l.b16 %v1139
    %v1725 = vunpack.c.h.b16 %v1139
    %v1726 = vunpack.c.l.b16 %v1140
    %v1727 = vunpack.c.h.b16 %v1140
    %v1728 = vunpack.c.l.b16 %v1141
    %v1729 = vunpack.c.h.b16 %v1141
    %v1730 = vunpack.c.l.b16 %v1142
    %v1731 = vunpack.c.h.b16 %v1142
    %v1732 = vunpack.c.l.b16 %v1143
    %v1733 = vunpack.c.h.b16 %v1143
    %v1734 = vunpack.c.l.b16 %v1144
    %v1735 = vunpack.c.h.b16 %v1144
    %v1736 = vunpack.c.l.b16 %v1145
    %v1737 = vunpack.c.h.b16 %v1145
    %v1738 = vunpack.c.l.b16 %v1146
    %v1739 = vunpack.c.h.b16 %v1146
    %v1740 = vunpack.c.l.b16 %v1147
    %v1741 = vunpack.c.h.b16 %v1147
    %v1742 = vunpack.c.l.b16 %v1148
    %v1743 = vunpack.c.h.b16 %v1148
    %v1744 = vunpack.c.l.b16 %v1149
    %v1745 = vunpack.c.h.b16 %v1149
    %v1746 = vunpack.c.l.b16 %v1150
    %v1747 = vunpack.c.h.b16 %v1150
    %v1748 = vunpack.c.l.b16 %v1151
    %v1749 = vunpack.c.h.b16 %v1151
    %v1750 = vunpack.c.l.b16 %v1152
    %v1751 = vunpack.c.h.b16 %v1152
    %v1752 = vunpack.c.l.b16 %v1153
    %v1753 = vunpack.c.h.b16 %v1153
    %v1754 = vunpack.c.l.b16 %v1154
    %v1755 = vunpack.c.h.b16 %v1154
    %v1756 = vunpack.c.l.b16 %v1155
    %v1757 = vunpack.c.h.b16 %v1155
    %v1758 = vunpack.c.l.b16 %v1156
    %v1759 = vunpack.c.h.b16 %v1156
    %v1760 = vunpack.c.l.b16 %v1157
    %v1761 = vunpack.c.h.b16 %v1157
    %v1762 = vunpack.c.l.b16 %v1158
    %v1763 = vunpack.c.h.b16 %v1158
    %v1764 = vunpack.c.l.b16 %v1159
    %v1765 = vunpack.c.h.b16 %v1159
    %v1766 = vunpack.c.l.b16 %v1160
    %v1767 = vunpack.c.h.b16 %v1160
    %v1768 = vunpack.c.l.b16 %v1161
    %v1769 = vunpack.c.h.b16 %v1161
    %v1770 = vunpack.c.l.b16 %v1162
    %v1771 = vunpack.c.h.b16 %v1162
    %v1772 = vunpack.c.l.b16 %v1163
    %v1773 = vunpack.c.h.b16 %v1163
    %v1774 = vunpack.c.l.b16 %v1164
    %v1775 = vunpack.c.h.b16 %v1164
    %v1776 = vunpack.c.l.b16 %v1165
    %v1777 = vunpack.c.h.b16 %v1165
    %v1778 = vunpack.c.l.b16 %v1166
    %v1779 = vunpack.c.h.b16 %v1166
    %v1780 = vunpack.c.l.b16 %v1167
    %v1781 = vunpack.c.h.b16 %v1167
    %v1782 = vunpack.c.l.b16 %v1168
    %v1783 = vunpack.c.h.b16 %v1168
    %v1784 = vunpack.c.l.b16 %v1169
    %v1785 = vunpack.c.h.b16 %v1169
    %v1786 = vunpack.c.l.b16 %v1170
    %v1787 = vunpack.c.h.b16 %v1170
    %v1788 = vunpack.c.l.b16 %v1171
    %v1789 = vunpack.c.h.b16 %v1171
    %v1790 = vunpack.c.l.b16 %v1172
    %v1791 = vunpack.c.h.b16 %v1172
    %v1792 = vunpack.c.l.b16 %v1173
    %v1793 = vunpack.c.h.b16 %v1173
    %v1794 = vunpack.c.l.b16 %v1174
    %v1795 = vunpack.c.h.b16 %v1174
    %v1796 = vunpack.c.l.b16 %v1175
    %v1797 = vunpack.c.h.b16 %v1175
    %v1798 = vunpack.c.l.b16 %v1176
    %v1799 = vunpack.c.h.b16 %v1176
    %v1800 = vunpack.c.l.b16 %v1177
    %v1801 = vunpack.c.h.b16 %v1177
    %v1802 = vunpack.c.l.b16 %v1178
    %v1803 = vunpack.c.h.b16 %v1178
    %v1804 = vunpack.c.l.b16 %v1179
    %v1805 = vunpack.c.h.b16 %v1179
    %v1806 = vunpack.c.l.b16 %v1180
    %v1807 = vunpack.c.h.b16 %v1180
    %v1808 = vunpack.c.l.b16 %v1181
    %v1809 = vunpack.c.h.b16 %v1181
    %v1810 = vunpack.c.l.b16 %v1182
    %v1811 = vunpack.c.h.b16 %v1182
    %v1812 = vunpack.c.l.b16 %v1183
    %v1813 = vunpack.c.h.b16 %v1183
    %v1814 = vunpack.c.l.b16 %v1184
    %v1815 = vunpack.c.h.b16 %v1184
    %v1816 = vunpack.c.l.b16 %v1185
    %v1817 = vunpack.c.h.b16 %v1185
    %v1818 = vunpack.c.l.b16 %v1186
    %v1819 = vunpack.c.h.b16 %v1186
    %v1820 = vunpack.c.l.b16 %v1187
    %v1821 = vunpack.c.h.b16 %v1187
    %v1822 = vunpack.c.l.b16 %v1188
    %v1823 = vunpack.c.h.b16 %v1188
    %v1824 = vunpack.c.l.b16 %v1189
    %v1825 = vunpack.c.h.b16 %v1189
    %v1826 = vunpack.c.l.b16 %v1190
    %v1827 = vunpack.c.h.b16 %v1190
    %v1828 = vunpack.c.l.b16 %v1191
    %v1829 = vunpack.c.h.b16 %v1191
    %v1830 = vunpack.c.l.b16 %v1192
    %v1831 = vunpack.c.h.b16 %v1192
    %v1832 = vunpack.c.l.b16 %v1193
    %v1833 = vunpack.c.h.b16 %v1193
    %v1834 = vunpack.c.l.b16 %v1194
    %v1835 = vunpack.c.h.b16 %v1194
    %v1836 = vunpack.c.l.b16 %v1195
    %v1837 = vunpack.c.h.b16 %v1195
    %v1838 = vunpack.c.l.b16 %v1196
    %v1839 = vunpack.c.h.b16 %v1196
    %v1840 = vunpack.c.l.b16 %v1197
    %v1841 = vunpack.c.h.b16 %v1197
    %v1842 = vunpack.c.l.b16 %v1198
    %v1843 = vunpack.c.h.b16 %v1198
    %v1844 = vunpack.c.l.b16 %v1199
    %v1845 = vunpack.c.h.b16 %v1199
    %v1846 = vunpack.c.l.b16 %v1200
    %v1847 = vunpack.c.h.b16 %v1200
    %v1848 = vunpack.c.l.b16 %v1201
    %v1849 = vunpack.c.h.b16 %v1201
    %v1850 = vunpack.c.l.b16 %v1202
    %v1851 = vunpack.c.h.b16 %v1202
    %v1852 = vunpack.c.l.b16 %v1203
    %v1853 = vunpack.c.h.b16 %v1203
    %v1854 = vunpack.c.l.b16 %v1204
    %v1855 = vunpack.c.h.b16 %v1204
    %v1856 = vunpack.c.l.b16 %v1205
    %v1857 = vunpack.c.h.b16 %v1205
    %v1858 = vunpack.c.l.b16 %v1206
    %v1859 = vunpack.c.h.b16 %v1206
    %v1860 = vunpack.c.l.b16 %v1207
    %v1861 = vunpack.c.h.b16 %v1207
    %v1862 = vunpack.c.l.b16 %v1208
    %v1863 = vunpack.c.h.b16 %v1208
    %v1864 = vunpack.c.l.b16 %v1209
    %v1865 = vunpack.c.h.b16 %v1209
    %v1866 = vunpack.c.l.b16 %v1210
    %v1867 = vunpack.c.h.b16 %v1210
    %v1868 = vunpack.c.l.b16 %v1211
    %v1869 = vunpack.c.h.b16 %v1211
    %v1870 = vunpack.c.l.b16 %v1212
    %v1871 = vunpack.c.h.b16 %v1212
    %v1872 = vunpack.c.l.b16 %v1213
    %v1873 = vunpack.c.h.b16 %v1213
    %v1874 = vunpack.c.l.b16 %v1214
    %v1875 = vunpack.c.h.b16 %v1214
    %v1876 = vunpack.c.l.b16 %v1215
    %v1877 = vunpack.c.h.b16 %v1215
    %v1878 = vunpack.c.l.b16 %v1216
    %v1879 = vunpack.c.h.b16 %v1216
    %v1880 = vunpack.c.l.b16 %v1217
    %v1881 = vunpack.c.h.b16 %v1217
    %v1882 = vunpack.c.l.b16 %v1218
    %v1883 = vunpack.c.h.b16 %v1218
    %v1884 = vunpack.c.l.b16 %v1219
    %v1885 = vunpack.c.h.b16 %v1219
    %v1886 = vunpack.c.l.b16 %v1220
    %v1887 = vunpack.c.h.b16 %v1220
    %v1888 = vunpack.c.l.b16 %v1221
    %v1889 = vunpack.c.h.b16 %v1221
    %v1890 = vunpack.c.l.b16 %v1222
    %v1891 = vunpack.c.h.b16 %v1222
    %v1892 = vunpack.c.l.b16 %v1223
    %v1893 = vunpack.c.h.b16 %v1223
    %v1894 = vunpack.c.l.b16 %v1224
    %v1895 = vunpack.c.h.b16 %v1224
    %v1896 = vunpack.c.l.b16 %v1225
    %v1897 = vunpack.c.h.b16 %v1225
    %v1898 = vunpack.c.l.b16 %v1226
    %v1899 = vunpack.c.h.b16 %v1226
    %v1900 = vunpack.c.l.b16 %v1227
    %v1901 = vunpack.c.h.b16 %v1227
    %v1902 = vunpack.c.l.b16 %v1228
    %v1903 = vunpack.c.h.b16 %v1228
    %v1904 = vunpack.c.l.b16 %v1229
    %v1905 = vunpack.c.h.b16 %v1229
    %v1906 = vunpack.c.l.b16 %v1230
    %v1907 = vunpack.c.h.b16 %v1230
    %v1908 = vunpack.c.l.b16 %v1231
    %v1909 = vunpack.c.h.b16 %v1231
    %v1910 = vunpack.c.l.b16 %v1232
    %v1911 = vunpack.c.h.b16 %v1232
    %v1912 = vunpack.c.l.b16 %v1233
    %v1913 = vunpack.c.h.b16 %v1233
    %v1914 = vunpack.c.l.b16 %v1234
    %v1915 = vunpack.c.h.b16 %v1234
    %v1916 = vunpack.c.l.b16 %v1235
    %v1917 = vunpack.c.h.b16 %v1235
    %v1918 = vunpack.c.l.b16 %v1236
    %v1919 = vunpack.c.h.b16 %v1236
    %v1920 = vunpack.c.l.b16 %v1237
    %v1921 = vunpack.c.h.b16 %v1237
    %v1922 = vunpack.c.l.b16 %v1238
    %v1923 = vunpack.c.h.b16 %v1238
    %v1924 = vunpack.c.l.b16 %v1239
    %v1925 = vunpack.c.h.b16 %v1239
    %v1926 = vunpack.c.l.b16 %v1240
    %v1927 = vunpack.c.h.b16 %v1240
    %v1928 = vunpack.c.l.b16 %v1241
    %v1929 = vunpack.c.h.b16 %v1241
    %v1930 = vunpack.c.l.b16 %v1242
    %v1931 = vunpack.c.h.b16 %v1242
    %v1932 = vunpack.c.l.b16 %v1243
    %v1933 = vunpack.c.h.b16 %v1243
    %v1934 = vunpack.c.l.b16 %v1244
    %v1935 = vunpack.c.h.b16 %v1244
    %v1936 = vunpack.c.l.b16 %v1245
    %v1937 = vunpack.c.h.b16 %v1245
    %v1938 = vunpack.c.l.b16 %v1246
    %v1939 = vunpack.c.h.b16 %v1246
    %v1940 = vunpack.c.l.b16 %v1247
    %v1941 = vunpack.c.h.b16 %v1247
    %v1942 = vunpack.c.l.b16 %v1248
    %v1943 = vunpack.c.h.b16 %v1248
    %v1944 = vunpack.c.l.b16 %v1249
    %v1945 = vunpack.c.h.b16 %v1249
    %v1946 = vunpack.c.l.b16 %v1250
    %v1947 = vunpack.c.h.b16 %v1250
    %v1948 = vunpack.c.l.b16 %v1251
    %v1949 = vunpack.c.h.b16 %v1251
    %v1950 = vunpack.c.l.b16 %v1252
    %v1951 = vunpack.c.h.b16 %v1252
    %v1952 = vunpack.c.l.b16 %v1253
    %v1953 = vunpack.c.h.b16 %v1253
    %v1954 = vunpack.c.l.b16 %v1254
    %v1955 = vunpack.c.h.b16 %v1254
    %v1956 = vunpack.c.l.b16 %v1255
    %v1957 = vunpack.c.h.b16 %v1255
    %v1958 = vunpack.c.l.b16 %v1256
    %v1959 = vunpack.c.h.b16 %v1256
    %v1960 = vunpack.c.l.b16 %v1257
    %v1961 = vunpack.c.h.b16 %v1257
    %v1962 = vunpack.c.l.b16 %v1258
    %v1963 = vunpack.c.h.b16 %v1258
    %v1964 = vunpack.c.l.b16 %v1259
    %v1965 = vunpack.c.h.b16 %v1259
    %v1966 = vunpack.c.l.b16 %v1260
    %v1967 = vunpack.c.h.b16 %v1260
    %v1968 = vunpack.c.l.b16 %v1261
    %v1969 = vunpack.c.h.b16 %v1261
    %v1970 = vunpack.c.l.b16 %v1262
    %v1971 = vunpack.c.h.b16 %v1262
    %v1972 = vunpack.c.l.b16 %v1263
    %v1973 = vunpack.c.h.b16 %v1263
    %v1974 = vunpack.c.l.b16 %v1264
    %v1975 = vunpack.c.h.b16 %v1264
    %v1976 = vunpack.c.l.b16 %v1265
    %v1977 = vunpack.c.h.b16 %v1265
    %v1978 = vunpack.c.l.b16 %v1266
    %v1979 = vunpack.c.h.b16 %v1266
    %v1980 = vunpack.c.l.b16 %v1267
    %v1981 = vunpack.c.h.b16 %v1267
    %v1982 = vunpack.c.l.b16 %v1268
    %v1983 = vunpack.c.h.b16 %v1268
    %v1984 = vunpack.c.l.b16 %v1269
    %v1985 = vunpack.c.h.b16 %v1269
    %v1986 = vunpack.c.l.b16 %v1270
    %v1987 = vunpack.c.h.b16 %v1270
    %v1988 = vunpack.c.l.b16 %v1271
    %v1989 = vunpack.c.h.b16 %v1271
    %v1990 = vunpack.c.l.b16 %v1272
    %v1991 = vunpack.c.h.b16 %v1272
    %v1992 = vunpack.c.l.b16 %v1273
    %v1993 = vunpack.c.h.b16 %v1273
    %v1994 = vunpack.c.l.b16 %v1274
    %v1995 = vunpack.c.h.b16 %v1274
    %v1996 = vunpack.c.l.b16 %v1275
    %v1997 = vunpack.c.h.b16 %v1275
    %v1998 = vunpack.c.l.b16 %v1276
    %v1999 = vunpack.c.h.b16 %v1276
    %v2000 = vunpack.c.l.b16 %v1277
    %v2001 = vunpack.c.h.b16 %v1277
    %v2002 = vunpack.c.l.b16 %v1278
    %v2003 = vunpack.c.h.b16 %v1278
    %v2004 = vunpack.c.l.b16 %v1279
    %v2005 = vunpack.c.h.b16 %v1279
    %v2006 = vunpack.c.l.b16 %v1280
    %v2007 = vunpack.c.h.b16 %v1280
    %v2008 = vunpack.c.l.b16 %v1281
    %v2009 = vunpack.c.h.b16 %v1281
    %v2010 = vunpack.c.l.b16 %v1282
    %v2011 = vunpack.c.h.b16 %v1282
    %v2012 = vunpack.c.l.b16 %v1283
    %v2013 = vunpack.c.h.b16 %v1283
    %v2014 = vunpack.c.l.b16 %v1284
    %v2015 = vunpack.c.h.b16 %v1284
    %v2016 = vunpack.c.l.b16 %v1285
    %v2017 = vunpack.c.h.b16 %v1285
    %v2018 = vunpack.c.l.b16 %v1286
    %v2019 = vunpack.c.h.b16 %v1286
    %v2020 = vunpack.c.l.b16 %v1287
    %v2021 = vunpack.c.h.b16 %v1287
    %v2022 = vunpack.c.l.b16 %v1288
    %v2023 = vunpack.c.h.b16 %v1288
    %v2024 = vunpack.c.l.b16 %v1289
    %v2025 = vunpack.c.h.b16 %v1289
    %v2026 = vunpack.c.l.b16 %v1290
    %v2027 = vunpack.c.h.b16 %v1290
    %v2028 = vunpack.c.l.b16 %v1291
    %v2029 = vunpack.c.h.b16 %v1291
    %v2030 = vunpack.c.l.b16 %v1292
    %v2031 = vunpack.c.h.b16 %v1292
    %v2032 = vunpack.c.l.b16 %v1293
    %v2033 = vunpack.c.h.b16 %v1293
    %v2034 = vunpack.c.l.b16 %v1294
    %v2035 = vunpack.c.h.b16 %v1294
    %v2036 = vunpack.c.l.b16 %v1295
    %v2037 = vunpack.c.h.b16 %v1295
    %v2038 = vunpack.c.l.b16 %v1296
    %v2039 = vunpack.c.h.b16 %v1296
    %v2040 = vunpack.c.l.b16 %v1297
    %v2041 = vunpack.c.h.b16 %v1297
    %v2042 = vunpack.c.l.b16 %v1298
    %v2043 = vunpack.c.h.b16 %v1298
    %v2044 = vunpack.c.l.b16 %v1299
    %v2045 = vunpack.c.h.b16 %v1299
    %v2046 = vunpack.c.l.b16 %v1300
    %v2047 = vunpack.c.h.b16 %v1300
    %v2048 = vunpack.c.l.b16 %v1301
    %v2049 = vunpack.c.h.b16 %v1301
    %v2050 = vunpack.c.l.b16 %v1302
    %v2051 = vunpack.c.h.b16 %v1302
    %v2052 = vunpack.c.l.b16 %v1303
    %v2053 = vunpack.c.h.b16 %v1303
    %v2054 = vunpack.c.l.b16 %v1304
    %v2055 = vunpack.c.h.b16 %v1304
    %v2056 = vunpack.c.l.b16 %v1305
    %v2057 = vunpack.c.h.b16 %v1305
    %v2058 = vunpack.c.l.b16 %v1306
    %v2059 = vunpack.c.h.b16 %v1306
    %v2060 = vunpack.c.l.b16 %v1307
    %v2061 = vunpack.c.h.b16 %v1307
    %v2062 = vunpack.c.l.b16 %v1308
    %v2063 = vunpack.c.h.b16 %v1308
    %v2064 = vunpack.c.l.b16 %v1309
    %v2065 = vunpack.c.h.b16 %v1309
    %v2066 = vunpack.c.l.b16 %v1310
    %v2067 = vunpack.c.h.b16 %v1310
    %v2068 = vunpack.c.l.b16 %v1311
    %v2069 = vunpack.c.h.b16 %v1311
    %v2070 = vunpack.c.l.b16 %v1312
    %v2071 = vunpack.c.h.b16 %v1312
    %v2072 = vunpack.c.l.b16 %v1313
    %v2073 = vunpack.c.h.b16 %v1313
    %v2074 = vunpack.c.l.b16 %v1314
    %v2075 = vunpack.c.h.b16 %v1314
    %v2076 = vunpack.c.l.b16 %v1315
    %v2077 = vunpack.c.h.b16 %v1315
    %v2078 = vunpack.c.l.b16 %v1316
    %v2079 = vunpack.c.h.b16 %v1316
    %v2080 = vunpack.c.l.b16 %v1317
    %v2081 = vunpack.c.h.b16 %v1317
    %v2082 = vunpack.c.l.b16 %v1318
    %v2083 = vunpack.c.h.b16 %v1318
    %v2084 = vunpack.c.l.b16 %v1319
    %v2085 = vunpack.c.h.b16 %v1319
    %v2086 = vunpack.c.l.b16 %v1320
    %v2087 = vunpack.c.h.b16 %v1320
    %v2088 = vunpack.c.l.b16 %v1321
    %v2089 = vunpack.c.h.b16 %v1321
    %v2090 = vpack.c.b16 %v1586, %v1578
    %v2091 = vpack.c.b16 %v1587, %v1579
    %v2092 = vpack.c.b16 %v1588, %v1580
    %v2093 = vpack.c.b16 %v1589, %v1581
    %v2094 = vpack.c.b16 %v1590, %v1582
    %v2095 = vpack.c.b16 %v1591, %v1583
    %v2096 = vpack.c.b16 %v1592, %v1584
    %v2097 = vpack.c.b16 %v1593, %v1585
    %v2098 = vpack.c.b16 %v1602, %v1594
    %v2099 = vpack.c.b16 %v1603, %v1595
    %v2100 = vpack.c.b16 %v1604, %v1596
    %v2101 = vpack.c.b16 %v1605, %v1597
    %v2102 = vpack.c.b16 %v1606, %v1598
    %v2103 = vpack.c.b16 %v1607, %v1599
    %v2104 = vpack.c.b16 %v1608, %v1600
    %v2105 = vpack.c.b16 %v1609, %v1601
    %v2106 = vpack.c.b16 %v1618, %v1610
    %v2107 = vpack.c.b16 %v1619, %v1611
    %v2108 = vpack.c.b16 %v1620, %v1612
    %v2109 = vpack.c.b16 %v1621, %v1613
    %v2110 = vpack.c.b16 %v1622, %v1614
    %v2111 = vpack.c.b16 %v1623, %v1615
    %v2112 = vpack.c.b16 %v1624, %v1616
    %v2113 = vpack.c.b16 %v1625, %v1617
    %v2114 = vpack.c.b16 %v1634, %v1626
    %v2115 = vpack.c.b16 %v1635, %v1627
    %v2116 = vpack.c.b16 %v1636, %v1628
    %v2117 = vpack.c.b16 %v1637, %v1629
    %v2118 = vpack.c.b16 %v1638, %v1630
    %v2119 = vpack.c.b16 %v1639, %v1631
    %v2120 = vpack.c.b16 %v1640, %v1632
    %v2121 = vpack.c.b16 %v1641, %v1633
    %v2122 = vpack.c.b16 %v1650, %v1642
    %v2123 = vpack.c.b16 %v1651, %v1643
    %v2124 = vpack.c.b16 %v1652, %v1644
    %v2125 = vpack.c.b16 %v1653, %v1645
    %v2126 = vpack.c.b16 %v1654, %v1646
    %v2127 = vpack.c.b16 %v1655, %v1647
    %v2128 = vpack.c.b16 %v1656, %v1648
    %v2129 = vpack.c.b16 %v1657, %v1649
    %v2130 = vpack.c.b16 %v1666, %v1658
    %v2131 = vpack.c.b16 %v1667, %v1659
    %v2132 = vpack.c.b16 %v1668, %v1660
    %v2133 = vpack.c.b16 %v1669, %v1661
    %v2134 = vpack.c.b16 %v1670, %v1662
    %v2135 = vpack.c.b16 %v1671, %v1663
    %v2136 = vpack.c.b16 %v1672, %v1664
    %v2137 = vpack.c.b16 %v1673, %v1665
    %v2138 = vpack.c.b16 %v1682, %v1674
    %v2139 = vpack.c.b16 %v1683, %v1675
    %v2140 = vpack.c.b16 %v1684, %v1676
    %v2141 = vpack.c.b16 %v1685, %v1677
    %v2142 = vpack.c.b16 %v1686, %v1678
    %v2143 = vpack.c.b16 %v1687, %v1679
    %v2144 = vpack.c.b16 %v1688, %v1680
    %v2145 = vpack.c.b16 %v1689, %v1681
    %v2146 = vpack.c.b16 %v1698, %v1690
    %v2147 = vpack.c.b16 %v1699, %v1691
    %v2148 = vpack.c.b16 %v1700, %v1692
    %v2149 = vpack.c.b16 %v1701, %v1693
    %v2150 = vpack.c.b16 %v1702, %v1694
    %v2151 = vpack.c.b16 %v1703, %v1695
    %v2152 = vpack.c.b16 %v1704, %v1696
    %v2153 = vpack.c.b16 %v1705, %v1697
    %v2154 = vpack.c.b16 %v1714, %v1706
    %v2155 = vpack.c.b16 %v1715, %v1707
    %v2156 = vpack.c.b16 %v1716, %v1708
    %v2157 = vpack.c.b16 %v1717, %v1709
    %v2158 = vpack.c.b16 %v1718, %v1710
    %v2159 = vpack.c.b16 %v1719, %v1711
    %v2160 = vpack.c.b16 %v1720, %v1712
    %v2161 = vpack.c.b16 %v1721, %v1713
    %v2162 = vpack.c.b16 %v1730, %v1722
    %v2163 = vpack.c.b16 %v1731, %v1723
    %v2164 = vpack.c.b16 %v1732, %v1724
    %v2165 = vpack.c.b16 %v1733, %v1725
    %v2166 = vpack.c.b16 %v1734, %v1726
    %v2167 = vpack.c.b16 %v1735, %v1727
    %v2168 = vpack.c.b16 %v1736, %v1728
    %v2169 = vpack.c.b16 %v1737, %v1729
    %v2170 = vpack.c.b16 %v1746, %v1738
    %v2171 = vpack.c.b16 %v1747, %v1739
    %v2172 = vpack.c.b16 %v1748, %v1740
    %v2173 = vpack.c.b16 %v1749, %v1741
    %v2174 = vpack.c.b16 %v1750, %v1742
    %v2175 = vpack.c.b16 %v1751, %v1743
    %v2176 = vpack.c.b16 %v1752, %v1744
    %v2177 = vpack.c.b16 %v1753, %v1745
    %v2178 = vpack.c.b16 %v1762, %v1754
    %v2179 = vpack.c.b16 %v1763, %v1755
    %v2180 = vpack.c.b16 %v1764, %v1756
    %v2181 = vpack.c.b16 %v1765, %v1757
    %v2182 = vpack.c.b16 %v1766, %v1758
    %v2183 = vpack.c.b16 %v1767, %v1759
    %v2184 = vpack.c.b16 %v1768, %v1760
    %v2185 = vpack.c.b16 %v1769, %v1761
    %v2186 = vpack.c.b16 %v1778, %v1770
    %v2187 = vpack.c.b16 %v1779, %v1771
    %v2188 = vpack.c.b16 %v1780, %v1772
    %v2189 = vpack.c.b16 %v1781, %v1773
    %v2190 = vpack.c.b16 %v1782, %v1774
    %v2191 = vpack.c.b16 %v1783, %v1775
    %v2192 = vpack.c.b16 %v1784, %v1776
    %v2193 = vpack.c.b16 %v1785, %v1777
    %v2194 = vpack.c.b16 %v1794, %v1786
    %v2195 = vpack.c.b16 %v1795, %v1787
    %v2196 = vpack.c.b16 %v1796, %v1788
    %v2197 = vpack.c.b16 %v1797, %v1789
    %v2198 = vpack.c.b16 %v1798, %v1790
    %v2199 = vpack.c.b16 %v1799, %v1791
    %v2200 = vpack.c.b16 %v1800, %v1792
    %v2201 = vpack.c.b16 %v1801, %v1793
    %v2202 = vpack.c.b16 %v1810, %v1802
    %v2203 = vpack.c.b16 %v1811, %v1803
    %v2204 = vpack.c.b16 %v1812, %v1804
    %v2205 = vpack.c.b16 %v1813, %v1805
    %v2206 = vpack.c.b16 %v1814, %v1806
    %v2207 = vpack.c.b16 %v1815, %v1807
    %v2208 = vpack.c.b16 %v1816, %v1808
    %v2209 = vpack.c.b16 %v1817, %v1809
    %v2210 = vpack.c.b16 %v1826, %v1818
    %v2211 = vpack.c.b16 %v1827, %v1819
    %v2212 = vpack.c.b16 %v1828, %v1820
    %v2213 = vpack.c.b16 %v1829, %v1821
    %v2214 = vpack.c.b16 %v1830, %v1822
    %v2215 = vpack.c.b16 %v1831, %v1823
    %v2216 = vpack.c.b16 %v1832, %v1824
    %v2217 = vpack.c.b16 %v1833, %v1825
    %v2218 = vpack.c.b16 %v1842, %v1834
    %v2219 = vpack.c.b16 %v1843, %v1835
    %v2220 = vpack.c.b16 %v1844, %v1836
    %v2221 = vpack.c.b16 %v1845, %v1837
    %v2222 = vpack.c.b16 %v1846, %v1838
    %v2223 = vpack.c.b16 %v1847, %v1839
    %v2224 = vpack.c.b16 %v1848, %v1840
    %v2225 = vpack.c.b16 %v1849, %v1841
    %v2226 = vpack.c.b16 %v1858, %v1850
    %v2227 = vpack.c.b16 %v1859, %v1851
    %v2228 = vpack.c.b16 %v1860, %v1852
    %v2229 = vpack.c.b16 %v1861, %v1853
    %v2230 = vpack.c.b16 %v1862, %v1854
    %v2231 = vpack.c.b16 %v1863, %v1855
    %v2232 = vpack.c.b16 %v1864, %v1856
    %v2233 = vpack.c.b16 %v1865, %v1857
    %v2234 = vpack.c.b16 %v1874, %v1866
    %v2235 = vpack.c.b16 %v1875, %v1867
    %v2236 = vpack.c.b16 %v1876, %v1868
    %v2237 = vpack.c.b16 %v1877, %v1869
    %v2238 = vpack.c.b16 %v1878, %v1870
    %v2239 = vpack.c.b16 %v1879, %v1871
    %v2240 = vpack.c.b16 %v1880, %v1872
    %v2241 = vpack.c.b16 %v1881, %v1873
    %v2242 = vpack.c.b16 %v1890, %v1882
    %v2243 = vpack.c.b16 %v1891, %v1883
    %v2244 = vpack.c.b16 %v1892, %v1884
    %v2245 = vpack.c.b16 %v1893, %v1885
    %v2246 = vpack.c.b16 %v1894, %v1886
    %v2247 = vpack.c.b16 %v1895, %v1887
    %v2248 = vpack.c.b16 %v1896, %v1888
    %v2249 = vpack.c.b16 %v1897, %v1889
    %v2250 = vpack.c.b16 %v1906, %v1898
    %v2251 = vpack.c.b16 %v1907, %v1899
    %v2252 = vpack.c.b16 %v1908, %v1900
    %v2253 = vpack.c.b16 %v1909, %v1901
    %v2254 = vpack.c.b16 %v1910, %v1902
    %v2255 = vpack.c.b16 %v1911, %v1903
    %v2256 = vpack.c.b16 %v1912, %v1904
    %v2257 = vpack.c.b16 %v1913, %v1905
    %v2258 = vpack.c.b16 %v1922, %v1914
    %v2259 = vpack.c.b16 %v1923, %v1915
    %v2260 = vpack.c.b16 %v1924, %v1916
    %v2261 = vpack.c.b16 %v1925, %v1917
    %v2262 = vpack.c.b16 %v1926, %v1918
    %v2263 = vpack.c.b16 %v1927, %v1919
    %v2264 = vpack.c.b16 %v1928, %v1920
    %v2265 = vpack.c.b16 %v1929, %v1921
    %v2266 = vpack.c.b16 %v1938, %v1930
    %v2267 = vpack.c.b16 %v1939, %v1931
    %v2268 = vpack.c.b16 %v1940, %v1932
    %v2269 = vpack.c.b16 %v1941, %v1933
    %v2270 = vpack.c.b16 %v1942, %v1934
    %v2271 = vpack.c.b16 %v1943, %v1935
    %v2272 = vpack.c.b16 %v1944, %v1936
    %v2273 = vpack.c.b16 %v1945, %v1937
    %v2274 = vpack.c.b16 %v1954, %v1946
    %v2275 = vpack.c.b16 %v1955, %v1947
    %v2276 = vpack.c.b16 %v1956, %v1948
    %v2277 = vpack.c.b16 %v1957, %v1949
    %v2278 = vpack.c.b16 %v1958, %v1950
    %v2279 = vpack.c.b16 %v1959, %v1951
    %v2280 = vpack.c.b16 %v1960, %v1952
    %v2281 = vpack.c.b16 %v1961, %v1953
    %v2282 = vpack.c.b16 %v1970, %v1962
    %v2283 = vpack.c.b16 %v1971, %v1963
    %v2284 = vpack.c.b16 %v1972, %v1964
    %v2285 = vpack.c.b16 %v1973, %v1965
    %v2286 = vpack.c.b16 %v1974, %v1966
    %v2287 = vpack.c.b16 %v1975, %v1967
    %v2288 = vpack.c.b16 %v1976, %v1968
    %v2289 = vpack.c.b16 %v1977, %v1969
    %v2290 = vpack.c.b16 %v1986, %v1978
    %v2291 = vpack.c.b16 %v1987, %v1979
    %v2292 = vpack.c.b16 %v1988, %v1980
    %v2293 = vpack.c.b16 %v1989, %v1981
    %v2294 = vpack.c.b16 %v1990, %v1982
    %v2295 = vpack.c.b16 %v1991, %v1983
    %v2296 = vpack.c.b16 %v1992, %v1984
    %v2297 = vpack.c.b16 %v1993, %v1985
    %v2298 = vpack.c.b16 %v2002, %v1994
    %v2299 = vpack.c.b16 %v2003, %v1995
    %v2300 = vpack.c.b16 %v2004, %v1996
    %v2301 = vpack.c.b16 %v2005, %v1997
    %v2302 = vpack.c.b16 %v2006, %v1998
    %v2303 = vpack.c.b16 %v2007, %v1999
    %v2304 = vpack.c.b16 %v2008, %v2000
    %v2305 = vpack.c.b16 %v2009, %v2001
    %v2306 = vpack.c.b16 %v2018, %v2010
    %v2307 = vpack.c.b16 %v2019, %v2011
    %v2308 = vpack.c.b16 %v2020, %v2012
    %v2309 = vpack.c.b16 %v2021, %v2013
    %v2310 = vpack.c.b16 %v2022, %v2014
    %v2311 = vpack.c.b16 %v2023, %v2015
    %v2312 = vpack.c.b16 %v2024, %v2016
    %v2313 = vpack.c.b16 %v2025, %v2017
    %v2314 = vpack.c.b16 %v2034, %v2026
    %v2315 = vpack.c.b16 %v2035, %v2027
    %v2316 = vpack.c.b16 %v2036, %v2028
    %v2317 = vpack.c.b16 %v2037, %v2029
    %v2318 = vpack.c.b16 %v2038, %v2030
    %v2319 = vpack.c.b16 %v2039, %v2031
    %v2320 = vpack.c.b16 %v2040, %v2032
    %v2321 = vpack.c.b16 %v2041, %v2033
    %v2322 = vpack.c.b16 %v2050, %v2042
    %v2323 = vpack.c.b16 %v2051, %v2043
    %v2324 = vpack.c.b16 %v2052, %v2044
    %v2325 = vpack.c.b16 %v2053, %v2045
    %v2326 = vpack.c.b16 %v2054, %v2046
    %v2327 = vpack.c.b16 %v2055, %v2047
    %v2328 = vpack.c.b16 %v2056, %v2048
    %v2329 = vpack.c.b16 %v2057, %v2049
    %v2330 = vpack.c.b16 %v2066, %v2058
    %v2331 = vpack.c.b16 %v2067, %v2059
    %v2332 = vpack.c.b16 %v2068, %v2060
    %v2333 = vpack.c.b16 %v2069, %v2061
    %v2334 = vpack.c.b16 %v2070, %v2062
    %v2335 = vpack.c.b16 %v2071, %v2063
    %v2336 = vpack.c.b16 %v2072, %v2064
    %v2337 = vpack.c.b16 %v2073, %v2065
    %v2338 = vpack.c.b16 %v2082, %v2074
    %v2339 = vpack.c.b16 %v2083, %v2075
    %v2340 = vpack.c.b16 %v2084, %v2076
    %v2341 = vpack.c.b16 %v2085, %v2077
    %v2342 = vpack.c.b16 %v2086, %v2078
    %v2343 = vpack.c.b16 %v2087, %v2079
    %v2344 = vpack.c.b16 %v2088, %v2080
    %v2345 = vpack.c.b16 %v2089, %v2081
    %2602 = vmatpush.bf16.msra.mxu0 %v2146
    %2603 = vmatpush.bf16.msra.mxu0 %v2138
    %2604 = vmatpush.bf16.msra.mxu0 %v2130
    %2605 = vmatpush.bf16.msra.mxu0 %v2122
    %2606 = vmatpush.bf16.msra.mxu0 %v2114
    %2607 = vmatpush.bf16.msra.mxu0 %v2106
    %2608 = vmatpush.bf16.msra.mxu0 %v2098
    %2609 = vmatpush.bf16.msra.mxu0 %v2090
    %2610 = vmatmul.bf16.gmra.mxu0 %v1062
    %v2611 = vpop.f32.mrf.mxu0
    %v2612 = vadd.f32 0.0, %v2611
    %v2613 = vpop.f32.mrf.mxu0
    %2614 = vdwg.mxu0
    %2615 = vmatpush.bf16.msra.mxu0 %v2210
    %2616 = vmatpush.bf16.msra.mxu0 %v2202
    %2617 = vmatpush.bf16.msra.mxu0 %v2194
    %2618 = vmatpush.bf16.msra.mxu0 %v2186
    %2619 = vmatpush.bf16.msra.mxu0 %v2178
    %2620 = vmatpush.bf16.msra.mxu0 %v2170
    %2621 = vmatpush.bf16.msra.mxu0 %v2162
    %2622 = vmatpush.bf16.msra.mxu0 %v2154
    %2623 = vmatmul.bf16.gmra.mxu0 %v1063
    %v2624 = vpop.f32.mrf.mxu0
    %v2625 = vadd.f32 %v2612, %v2624
    %v2626 = vpop.f32.mrf.mxu0
    %2627 = vdwg.mxu0
    %2628 = vmatpush.bf16.msra.mxu0 %v2274
    %2629 = vmatpush.bf16.msra.mxu0 %v2266
    %2630 = vmatpush.bf16.msra.mxu0 %v2258
    %2631 = vmatpush.bf16.msra.mxu0 %v2250
    %2632 = vmatpush.bf16.msra.mxu0 %v2242
    %2633 = vmatpush.bf16.msra.mxu0 %v2234
    %2634 = vmatpush.bf16.msra.mxu0 %v2226
    %2635 = vmatpush.bf16.msra.mxu0 %v2218
    %2636 = vmatmul.bf16.gmra.mxu0 %v1064
    %v2637 = vpop.f32.mrf.mxu0
    %v2638 = vadd.f32 %v2625, %v2637
    %v2639 = vpop.f32.mrf.mxu0
    %2640 = vdwg.mxu0
    %2641 = vmatpush.bf16.msra.mxu0 %v2338
    %2642 = vmatpush.bf16.msra.mxu0 %v2330
    %2643 = vmatpush.bf16.msra.mxu0 %v2322
    %2644 = vmatpush.bf16.msra.mxu0 %v2314
    %2645 = vmatpush.bf16.msra.mxu0 %v2306
    %2646 = vmatpush.bf16.msra.mxu0 %v2298
    %2647 = vmatpush.bf16.msra.mxu0 %v2290
    %2648 = vmatpush.bf16.msra.mxu0 %v2282
    %2649 = vmatmul.bf16.gmra.mxu0 %v1065
    %v2650 = vpop.f32.mrf.mxu0
    %v2651 = vadd.f32 %v2638, %v2650
    %v2652 = vpop.f32.mrf.mxu0
    %2653 = vdwg.mxu0
    %2654 = vmatpush.bf16.msra.mxu0 %v2147
    %2655 = vmatpush.bf16.msra.mxu0 %v2139
    %2656 = vmatpush.bf16.msra.mxu0 %v2131
    %2657 = vmatpush.bf16.msra.mxu0 %v2123
    %2658 = vmatpush.bf16.msra.mxu0 %v2115
    %2659 = vmatpush.bf16.msra.mxu0 %v2107
    %2660 = vmatpush.bf16.msra.mxu0 %v2099
    %2661 = vmatpush.bf16.msra.mxu0 %v2091
    %2662 = vmatmul.bf16.gmra.mxu0 %v1062
    %v2663 = vpop.f32.mrf.mxu0
    %v2664 = vadd.f32 0.0, %v2663
    %v2665 = vpop.f32.mrf.mxu0
    %2666 = vdwg.mxu0
    %2667 = vmatpush.bf16.msra.mxu0 %v2211
    %2668 = vmatpush.bf16.msra.mxu0 %v2203
    %2669 = vmatpush.bf16.msra.mxu0 %v2195
    %2670 = vmatpush.bf16.msra.mxu0 %v2187
    %2671 = vmatpush.bf16.msra.mxu0 %v2179
    %2672 = vmatpush.bf16.msra.mxu0 %v2171
    %2673 = vmatpush.bf16.msra.mxu0 %v2163
    %2674 = vmatpush.bf16.msra.mxu0 %v2155
    %2675 = vmatmul.bf16.gmra.mxu0 %v1063
    %v2676 = vpop.f32.mrf.mxu0
    %v2677 = vadd.f32 %v2664, %v2676
    %v2678 = vpop.f32.mrf.mxu0
    %2679 = vdwg.mxu0
    %2680 = vmatpush.bf16.msra.mxu0 %v2275
    %2681 = vmatpush.bf16.msra.mxu0 %v2267
    %2682 = vmatpush.bf16.msra.mxu0 %v2259
    %2683 = vmatpush.bf16.msra.mxu0 %v2251
    %2684 = vmatpush.bf16.msra.mxu0 %v2243
    %2685 = vmatpush.bf16.msra.mxu0 %v2235
    %2686 = vmatpush.bf16.msra.mxu0 %v2227
    %2687 = vmatpush.bf16.msra.mxu0 %v2219
    %2688 = vmatmul.bf16.gmra.mxu0 %v1064
    %v2689 = vpop.f32.mrf.mxu0
    %v2690 = vadd.f32 %v2677, %v2689
    %v2691 = vpop.f32.mrf.mxu0
    %2692 = vdwg.mxu0
    %2693 = vmatpush.bf16.msra.mxu0 %v2339
    %2694 = vmatpush.bf16.msra.mxu0 %v2331
    %2695 = vmatpush.bf16.msra.mxu0 %v2323
    %2696 = vmatpush.bf16.msra.mxu0 %v2315
    %2697 = vmatpush.bf16.msra.mxu0 %v2307
    %2698 = vmatpush.bf16.msra.mxu0 %v2299
    %2699 = vmatpush.bf16.msra.mxu0 %v2291
    %2700 = vmatpush.bf16.msra.mxu0 %v2283
    %2701 = vmatmul.bf16.gmra.mxu0 %v1065
    %v2702 = vpop.f32.mrf.mxu0
    %v2703 = vadd.f32 %v2690, %v2702
    %v2704 = vpop.f32.mrf.mxu0
    %2705 = vdwg.mxu0
    %2706 = vmatpush.bf16.msra.mxu0 %v2148
    %2707 = vmatpush.bf16.msra.mxu0 %v2140
    %2708 = vmatpush.bf16.msra.mxu0 %v2132
    %2709 = vmatpush.bf16.msra.mxu0 %v2124
    %2710 = vmatpush.bf16.msra.mxu0 %v2116
    %2711 = vmatpush.bf16.msra.mxu0 %v2108
    %2712 = vmatpush.bf16.msra.mxu0 %v2100
    %2713 = vmatpush.bf16.msra.mxu0 %v2092
    %2714 = vmatmul.bf16.gmra.mxu0 %v1062
    %v2715 = vpop.f32.mrf.mxu0
    %v2716 = vadd.f32 0.0, %v2715
    %v2717 = vpop.f32.mrf.mxu0
    %2718 = vdwg.mxu0
    %2719 = vmatpush.bf16.msra.mxu0 %v2212
    %2720 = vmatpush.bf16.msra.mxu0 %v2204
    %2721 = vmatpush.bf16.msra.mxu0 %v2196
    %2722 = vmatpush.bf16.msra.mxu0 %v2188
    %2723 = vmatpush.bf16.msra.mxu0 %v2180
    %2724 = vmatpush.bf16.msra.mxu0 %v2172
    %2725 = vmatpush.bf16.msra.mxu0 %v2164
    %2726 = vmatpush.bf16.msra.mxu0 %v2156
    %2727 = vmatmul.bf16.gmra.mxu0 %v1063
    %v2728 = vpop.f32.mrf.mxu0
    %v2729 = vadd.f32 %v2716, %v2728
    %v2730 = vpop.f32.mrf.mxu0
    %2731 = vdwg.mxu0
    %2732 = vmatpush.bf16.msra.mxu0 %v2276
    %2733 = vmatpush.bf16.msra.mxu0 %v2268
    %2734 = vmatpush.bf16.msra.mxu0 %v2260
    %2735 = vmatpush.bf16.msra.mxu0 %v2252
    %2736 = vmatpush.bf16.msra.mxu0 %v2244
    %2737 = vmatpush.bf16.msra.mxu0 %v2236
    %2738 = vmatpush.bf16.msra.mxu0 %v2228
    %2739 = vmatpush.bf16.msra.mxu0 %v2220
    %2740 = vmatmul.bf16.gmra.mxu0 %v1064
    %v2741 = vpop.f32.mrf.mxu0
    %v2742 = vadd.f32 %v2729, %v2741
    %v2743 = vpop.f32.mrf.mxu0
    %2744 = vdwg.mxu0
    %2745 = vmatpush.bf16.msra.mxu0 %v2340
    %2746 = vmatpush.bf16.msra.mxu0 %v2332
    %2747 = vmatpush.bf16.msra.mxu0 %v2324
    %2748 = vmatpush.bf16.msra.mxu0 %v2316
    %2749 = vmatpush.bf16.msra.mxu0 %v2308
    %2750 = vmatpush.bf16.msra.mxu0 %v2300
    %2751 = vmatpush.bf16.msra.mxu0 %v2292
    %2752 = vmatpush.bf16.msra.mxu0 %v2284
    %2753 = vmatmul.bf16.gmra.mxu0 %v1065
    %v2754 = vpop.f32.mrf.mxu0
    %v2755 = vadd.f32 %v2742, %v2754
    %v2756 = vpop.f32.mrf.mxu0
    %2757 = vdwg.mxu0
    %2758 = vmatpush.bf16.msra.mxu0 %v2149
    %2759 = vmatpush.bf16.msra.mxu0 %v2141
    %2760 = vmatpush.bf16.msra.mxu0 %v2133
    %2761 = vmatpush.bf16.msra.mxu0 %v2125
    %2762 = vmatpush.bf16.msra.mxu0 %v2117
    %2763 = vmatpush.bf16.msra.mxu0 %v2109
    %2764 = vmatpush.bf16.msra.mxu0 %v2101
    %2765 = vmatpush.bf16.msra.mxu0 %v2093
    %2766 = vmatmul.bf16.gmra.mxu0 %v1062
    %v2767 = vpop.f32.mrf.mxu0
    %v2768 = vadd.f32 0.0, %v2767
    %v2769 = vpop.f32.mrf.mxu0
    %2770 = vdwg.mxu0
    %2771 = vmatpush.bf16.msra.mxu0 %v2213
    %2772 = vmatpush.bf16.msra.mxu0 %v2205
    %2773 = vmatpush.bf16.msra.mxu0 %v2197
    %2774 = vmatpush.bf16.msra.mxu0 %v2189
    %2775 = vmatpush.bf16.msra.mxu0 %v2181
    %2776 = vmatpush.bf16.msra.mxu0 %v2173
    %2777 = vmatpush.bf16.msra.mxu0 %v2165
    %2778 = vmatpush.bf16.msra.mxu0 %v2157
    %2779 = vmatmul.bf16.gmra.mxu0 %v1063
    %v2780 = vpop.f32.mrf.mxu0
    %v2781 = vadd.f32 %v2768, %v2780
    %v2782 = vpop.f32.mrf.mxu0
    %2783 = vdwg.mxu0
    %2784 = vmatpush.bf16.msra.mxu0 %v2277
    %2785 = vmatpush.bf16.msra.mxu0 %v2269
    %2786 = vmatpush.bf16.msra.mxu0 %v2261
    %2787 = vmatpush.bf16.msra.mxu0 %v2253
    %2788 = vmatpush.bf16.msra.mxu0 %v2245
    %2789 = vmatpush.bf16.msra.mxu0 %v2237
    %2790 = vmatpush.bf16.msra.mxu0 %v2229
    %2791 = vmatpush.bf16.msra.mxu0 %v2221
    %2792 = vmatmul.bf16.gmra.mxu0 %v1064
    %v2793 = vpop.f32.mrf.mxu0
    %v2794 = vadd.f32 %v2781, %v2793
    %v2795 = vpop.f32.mrf.mxu0
    %2796 = vdwg.mxu0
    %2797 = vmatpush.bf16.msra.mxu0 %v2341
    %2798 = vmatpush.bf16.msra.mxu0 %v2333
    %2799 = vmatpush.bf16.msra.mxu0 %v2325
    %2800 = vmatpush.bf16.msra.mxu0 %v2317
    %2801 = vmatpush.bf16.msra.mxu0 %v2309
    %2802 = vmatpush.bf16.msra.mxu0 %v2301
    %2803 = vmatpush.bf16.msra.mxu0 %v2293
    %2804 = vmatpush.bf16.msra.mxu0 %v2285
    %2805 = vmatmul.bf16.gmra.mxu0 %v1065
    %v2806 = vpop.f32.mrf.mxu0
    %v2807 = vadd.f32 %v2794, %v2806
    %v2808 = vpop.f32.mrf.mxu0
    %2809 = vdwg.mxu0
    %2810 = vmatpush.bf16.msra.mxu0 %v2150
    %2811 = vmatpush.bf16.msra.mxu0 %v2142
    %2812 = vmatpush.bf16.msra.mxu0 %v2134
    %2813 = vmatpush.bf16.msra.mxu0 %v2126
    %2814 = vmatpush.bf16.msra.mxu0 %v2118
    %2815 = vmatpush.bf16.msra.mxu0 %v2110
    %2816 = vmatpush.bf16.msra.mxu0 %v2102
    %2817 = vmatpush.bf16.msra.mxu0 %v2094
    %2818 = vmatmul.bf16.gmra.mxu0 %v1062
    %v2819 = vpop.f32.mrf.mxu0
    %v2820 = vadd.f32 0.0, %v2819
    %v2821 = vpop.f32.mrf.mxu0
    %2822 = vdwg.mxu0
    %2823 = vmatpush.bf16.msra.mxu0 %v2214
    %2824 = vmatpush.bf16.msra.mxu0 %v2206
    %2825 = vmatpush.bf16.msra.mxu0 %v2198
    %2826 = vmatpush.bf16.msra.mxu0 %v2190
    %2827 = vmatpush.bf16.msra.mxu0 %v2182
    %2828 = vmatpush.bf16.msra.mxu0 %v2174
    %2829 = vmatpush.bf16.msra.mxu0 %v2166
    %2830 = vmatpush.bf16.msra.mxu0 %v2158
    %2831 = vmatmul.bf16.gmra.mxu0 %v1063
    %v2832 = vpop.f32.mrf.mxu0
    %v2833 = vadd.f32 %v2820, %v2832
    %v2834 = vpop.f32.mrf.mxu0
    %2835 = vdwg.mxu0
    %2836 = vmatpush.bf16.msra.mxu0 %v2278
    %2837 = vmatpush.bf16.msra.mxu0 %v2270
    %2838 = vmatpush.bf16.msra.mxu0 %v2262
    %2839 = vmatpush.bf16.msra.mxu0 %v2254
    %2840 = vmatpush.bf16.msra.mxu0 %v2246
    %2841 = vmatpush.bf16.msra.mxu0 %v2238
    %2842 = vmatpush.bf16.msra.mxu0 %v2230
    %2843 = vmatpush.bf16.msra.mxu0 %v2222
    %2844 = vmatmul.bf16.gmra.mxu0 %v1064
    %v2845 = vpop.f32.mrf.mxu0
    %v2846 = vadd.f32 %v2833, %v2845
    %v2847 = vpop.f32.mrf.mxu0
    %2848 = vdwg.mxu0
    %2849 = vmatpush.bf16.msra.mxu0 %v2342
    %2850 = vmatpush.bf16.msra.mxu0 %v2334
    %2851 = vmatpush.bf16.msra.mxu0 %v2326
    %2852 = vmatpush.bf16.msra.mxu0 %v2318
    %2853 = vmatpush.bf16.msra.mxu0 %v2310
    %2854 = vmatpush.bf16.msra.mxu0 %v2302
    %2855 = vmatpush.bf16.msra.mxu0 %v2294
    %2856 = vmatpush.bf16.msra.mxu0 %v2286
    %2857 = vmatmul.bf16.gmra.mxu0 %v1065
    %v2858 = vpop.f32.mrf.mxu0
    %v2859 = vadd.f32 %v2846, %v2858
    %v2860 = vpop.f32.mrf.mxu0
    %2861 = vdwg.mxu0
    %2862 = vmatpush.bf16.msra.mxu0 %v2151
    %2863 = vmatpush.bf16.msra.mxu0 %v2143
    %2864 = vmatpush.bf16.msra.mxu0 %v2135
    %2865 = vmatpush.bf16.msra.mxu0 %v2127
    %2866 = vmatpush.bf16.msra.mxu0 %v2119
    %2867 = vmatpush.bf16.msra.mxu0 %v2111
    %2868 = vmatpush.bf16.msra.mxu0 %v2103
    %2869 = vmatpush.bf16.msra.mxu0 %v2095
    %2870 = vmatmul.bf16.gmra.mxu0 %v1062
    %v2871 = vpop.f32.mrf.mxu0
    %v2872 = vadd.f32 0.0, %v2871
    %v2873 = vpop.f32.mrf.mxu0
    %2874 = vdwg.mxu0
    %2875 = vmatpush.bf16.msra.mxu0 %v2215
    %2876 = vmatpush.bf16.msra.mxu0 %v2207
    %2877 = vmatpush.bf16.msra.mxu0 %v2199
    %2878 = vmatpush.bf16.msra.mxu0 %v2191
    %2879 = vmatpush.bf16.msra.mxu0 %v2183
    %2880 = vmatpush.bf16.msra.mxu0 %v2175
    %2881 = vmatpush.bf16.msra.mxu0 %v2167
    %2882 = vmatpush.bf16.msra.mxu0 %v2159
    %2883 = vmatmul.bf16.gmra.mxu0 %v1063
    %v2884 = vpop.f32.mrf.mxu0
    %v2885 = vadd.f32 %v2872, %v2884
    %v2886 = vpop.f32.mrf.mxu0
    %2887 = vdwg.mxu0
    %2888 = vmatpush.bf16.msra.mxu0 %v2279
    %2889 = vmatpush.bf16.msra.mxu0 %v2271
    %2890 = vmatpush.bf16.msra.mxu0 %v2263
    %2891 = vmatpush.bf16.msra.mxu0 %v2255
    %2892 = vmatpush.bf16.msra.mxu0 %v2247
    %2893 = vmatpush.bf16.msra.mxu0 %v2239
    %2894 = vmatpush.bf16.msra.mxu0 %v2231
    %2895 = vmatpush.bf16.msra.mxu0 %v2223
    %2896 = vmatmul.bf16.gmra.mxu0 %v1064
    %v2897 = vpop.f32.mrf.mxu0
    %v2898 = vadd.f32 %v2885, %v2897
    %v2899 = vpop.f32.mrf.mxu0
    %2900 = vdwg.mxu0
    %2901 = vmatpush.bf16.msra.mxu0 %v2343
    %2902 = vmatpush.bf16.msra.mxu0 %v2335
    %2903 = vmatpush.bf16.msra.mxu0 %v2327
    %2904 = vmatpush.bf16.msra.mxu0 %v2319
    %2905 = vmatpush.bf16.msra.mxu0 %v2311
    %2906 = vmatpush.bf16.msra.mxu0 %v2303
    %2907 = vmatpush.bf16.msra.mxu0 %v2295
    %2908 = vmatpush.bf16.msra.mxu0 %v2287
    %2909 = vmatmul.bf16.gmra.mxu0 %v1065
    %v2910 = vpop.f32.mrf.mxu0
    %v2911 = vadd.f32 %v2898, %v2910
    %v2912 = vpop.f32.mrf.mxu0
    %2913 = vdwg.mxu0
    %2914 = vmatpush.bf16.msra.mxu0 %v2152
    %2915 = vmatpush.bf16.msra.mxu0 %v2144
    %2916 = vmatpush.bf16.msra.mxu0 %v2136
    %2917 = vmatpush.bf16.msra.mxu0 %v2128
    %2918 = vmatpush.bf16.msra.mxu0 %v2120
    %2919 = vmatpush.bf16.msra.mxu0 %v2112
    %2920 = vmatpush.bf16.msra.mxu0 %v2104
    %2921 = vmatpush.bf16.msra.mxu0 %v2096
    %2922 = vmatmul.bf16.gmra.mxu0 %v1062
    %v2923 = vpop.f32.mrf.mxu0
    %v2924 = vadd.f32 0.0, %v2923
    %v2925 = vpop.f32.mrf.mxu0
    %2926 = vdwg.mxu0
    %2927 = vmatpush.bf16.msra.mxu0 %v2216
    %2928 = vmatpush.bf16.msra.mxu0 %v2208
    %2929 = vmatpush.bf16.msra.mxu0 %v2200
    %2930 = vmatpush.bf16.msra.mxu0 %v2192
    %2931 = vmatpush.bf16.msra.mxu0 %v2184
    %2932 = vmatpush.bf16.msra.mxu0 %v2176
    %2933 = vmatpush.bf16.msra.mxu0 %v2168
    %2934 = vmatpush.bf16.msra.mxu0 %v2160
    %2935 = vmatmul.bf16.gmra.mxu0 %v1063
    %v2936 = vpop.f32.mrf.mxu0
    %v2937 = vadd.f32 %v2924, %v2936
    %v2938 = vpop.f32.mrf.mxu0
    %2939 = vdwg.mxu0
    %2940 = vmatpush.bf16.msra.mxu0 %v2280
    %2941 = vmatpush.bf16.msra.mxu0 %v2272
    %2942 = vmatpush.bf16.msra.mxu0 %v2264
    %2943 = vmatpush.bf16.msra.mxu0 %v2256
    %2944 = vmatpush.bf16.msra.mxu0 %v2248
    %2945 = vmatpush.bf16.msra.mxu0 %v2240
    %2946 = vmatpush.bf16.msra.mxu0 %v2232
    %2947 = vmatpush.bf16.msra.mxu0 %v2224
    %2948 = vmatmul.bf16.gmra.mxu0 %v1064
    %v2949 = vpop.f32.mrf.mxu0
    %v2950 = vadd.f32 %v2937, %v2949
    %v2951 = vpop.f32.mrf.mxu0
    %2952 = vdwg.mxu0
    %2953 = vmatpush.bf16.msra.mxu0 %v2344
    %2954 = vmatpush.bf16.msra.mxu0 %v2336
    %2955 = vmatpush.bf16.msra.mxu0 %v2328
    %2956 = vmatpush.bf16.msra.mxu0 %v2320
    %2957 = vmatpush.bf16.msra.mxu0 %v2312
    %2958 = vmatpush.bf16.msra.mxu0 %v2304
    %2959 = vmatpush.bf16.msra.mxu0 %v2296
    %2960 = vmatpush.bf16.msra.mxu0 %v2288
    %2961 = vmatmul.bf16.gmra.mxu0 %v1065
    %v2962 = vpop.f32.mrf.mxu0
    %v2963 = vadd.f32 %v2950, %v2962
    %v2964 = vpop.f32.mrf.mxu0
    %2965 = vdwg.mxu0
    %2966 = vmatpush.bf16.msra.mxu0 %v2153
    %2967 = vmatpush.bf16.msra.mxu0 %v2145
    %2968 = vmatpush.bf16.msra.mxu0 %v2137
    %2969 = vmatpush.bf16.msra.mxu0 %v2129
    %2970 = vmatpush.bf16.msra.mxu0 %v2121
    %2971 = vmatpush.bf16.msra.mxu0 %v2113
    %2972 = vmatpush.bf16.msra.mxu0 %v2105
    %2973 = vmatpush.bf16.msra.mxu0 %v2097
    %2974 = vmatmul.bf16.gmra.mxu0 %v1062
    %v2975 = vpop.f32.mrf.mxu0
    %v2976 = vadd.f32 0.0, %v2975
    %v2977 = vpop.f32.mrf.mxu0
    %2978 = vdwg.mxu0
    %2979 = vmatpush.bf16.msra.mxu0 %v2217
    %2980 = vmatpush.bf16.msra.mxu0 %v2209
    %2981 = vmatpush.bf16.msra.mxu0 %v2201
    %2982 = vmatpush.bf16.msra.mxu0 %v2193
    %2983 = vmatpush.bf16.msra.mxu0 %v2185
    %2984 = vmatpush.bf16.msra.mxu0 %v2177
    %2985 = vmatpush.bf16.msra.mxu0 %v2169
    %2986 = vmatpush.bf16.msra.mxu0 %v2161
    %2987 = vmatmul.bf16.gmra.mxu0 %v1063
    %v2988 = vpop.f32.mrf.mxu0
    %v2989 = vadd.f32 %v2976, %v2988
    %v2990 = vpop.f32.mrf.mxu0
    %2991 = vdwg.mxu0
    %2992 = vmatpush.bf16.msra.mxu0 %v2281
    %2993 = vmatpush.bf16.msra.mxu0 %v2273
    %2994 = vmatpush.bf16.msra.mxu0 %v2265
    %2995 = vmatpush.bf16.msra.mxu0 %v2257
    %2996 = vmatpush.bf16.msra.mxu0 %v2249
    %2997 = vmatpush.bf16.msra.mxu0 %v2241
    %2998 = vmatpush.bf16.msra.mxu0 %v2233
    %2999 = vmatpush.bf16.msra.mxu0 %v2225
    %3000 = vmatmul.bf16.gmra.mxu0 %v1064
    %v3001 = vpop.f32.mrf.mxu0
    %v3002 = vadd.f32 %v2989, %v3001
    %v3003 = vpop.f32.mrf.mxu0
    %3004 = vdwg.mxu0
    %3005 = vmatpush.bf16.msra.mxu0 %v2345
    %3006 = vmatpush.bf16.msra.mxu0 %v2337
    %3007 = vmatpush.bf16.msra.mxu0 %v2329
    %3008 = vmatpush.bf16.msra.mxu0 %v2321
    %3009 = vmatpush.bf16.msra.mxu0 %v2313
    %3010 = vmatpush.bf16.msra.mxu0 %v2305
    %3011 = vmatpush.bf16.msra.mxu0 %v2297
    %3012 = vmatpush.bf16.msra.mxu0 %v2289
    %3013 = vmatmul.bf16.gmra.mxu0 %v1065
    %v3014 = vpop.f32.mrf.mxu0
    %v3015 = vadd.f32 %v3002, %v3014
    %v3016 = vpop.f32.mrf.mxu0
    %3017 = vdwg.mxu0
    %v3018 = vrot.slane %v2651, 4
    %v3019 = vadd.f32 %v2651, %v3018
    %v3020 = vrot.slane %v3019, 2
    %v3021 = vadd.f32 %v3019, %v3020
    %v3022 = vrot.slane %v3021, 1
    %v3023 = vadd.f32 %v3021, %v3022
    %v3024 = vrot.slane %v2703, 4
    %v3025 = vadd.f32 %v2703, %v3024
    %v3026 = vrot.slane %v3025, 2
    %v3027 = vadd.f32 %v3025, %v3026
    %v3028 = vrot.slane %v3027, 1
    %v3029 = vadd.f32 %v3027, %v3028
    %v3030 = vrot.slane %v2755, 4
    %v3031 = vadd.f32 %v2755, %v3030
    %v3032 = vrot.slane %v3031, 2
    %v3033 = vadd.f32 %v3031, %v3032
    %v3034 = vrot.slane %v3033, 1
    %v3035 = vadd.f32 %v3033, %v3034
    %v3036 = vrot.slane %v2807, 4
    %v3037 = vadd.f32 %v2807, %v3036
    %v3038 = vrot.slane %v3037, 2
    %v3039 = vadd.f32 %v3037, %v3038
    %v3040 = vrot.slane %v3039, 1
    %v3041 = vadd.f32 %v3039, %v3040
    %v3042 = vrot.slane %v2859, 4
    %v3043 = vadd.f32 %v2859, %v3042
    %v3044 = vrot.slane %v3043, 2
    %v3045 = vadd.f32 %v3043, %v3044
    %v3046 = vrot.slane %v3045, 1
    %v3047 = vadd.f32 %v3045, %v3046
    %v3048 = vrot.slane %v2911, 4
    %v3049 = vadd.f32 %v2911, %v3048
    %v3050 = vrot.slane %v3049, 2
    %v3051 = vadd.f32 %v3049, %v3050
    %v3052 = vrot.slane %v3051, 1
    %v3053 = vadd.f32 %v3051, %v3052
    %v3054 = vrot.slane %v2963, 4
    %v3055 = vadd.f32 %v2963, %v3054
    %v3056 = vrot.slane %v3055, 2
    %v3057 = vadd.f32 %v3055, %v3056
    %v3058 = vrot.slane %v3057, 1
    %v3059 = vadd.f32 %v3057, %v3058
    %v3060 = vrot.slane %v3015, 4
    %v3061 = vadd.f32 %v3015, %v3060
    %v3062 = vrot.slane %v3061, 2
    %v3063 = vadd.f32 %v3061, %v3062
    %v3064 = vrot.slane %v3063, 1
    %v3065 = vadd.f32 %v3063, %v3064
    %v3066 = vmul.f32 %v3023, %v348
    %v3067 = vmul.f32 %v3029, %v348
    %v3068 = vmul.f32 %v3035, %v348
    %v3069 = vmul.f32 %v3041, %v348
    %v3070 = vmul.f32 %v3047, %v348
    %v3071 = vmul.f32 %v3053, %v348
    %v3072 = vmul.f32 %v3059, %v348
    %v3073 = vmul.f32 %v3065, %v348
    %v3074 = vsub.f32 %v2651, %v3066
    %v3075 = vsub.f32 %v2703, %v3067
    %v3076 = vsub.f32 %v2755, %v3068
    %v3077 = vsub.f32 %v2807, %v3069
    %v3078 = vsub.f32 %v2859, %v3070
    %v3079 = vsub.f32 %v2911, %v3071
    %v3080 = vsub.f32 %v2963, %v3072
    %v3081 = vsub.f32 %v3015, %v3073
    %v3082 = vmul.f32 %v3074, %v3074
    %v3083 = vmul.f32 %v3075, %v3075
    %v3084 = vmul.f32 %v3076, %v3076
    %v3085 = vmul.f32 %v3077, %v3077
    %v3086 = vmul.f32 %v3078, %v3078
    %v3087 = vmul.f32 %v3079, %v3079
    %v3088 = vmul.f32 %v3080, %v3080
    %v3089 = vmul.f32 %v3081, %v3081
    %v3090 = vrot.slane %v3082, 4
    %v3091 = vadd.f32 %v3082, %v3090
    %v3092 = vrot.slane %v3091, 2
    %v3093 = vadd.f32 %v3091, %v3092
    %v3094 = vrot.slane %v3093, 1
    %v3095 = vadd.f32 %v3093, %v3094
    %v3096 = vrot.slane %v3083, 4
    %v3097 = vadd.f32 %v3083, %v3096
    %v3098 = vrot.slane %v3097, 2
    %v3099 = vadd.f32 %v3097, %v3098
    %v3100 = vrot.slane %v3099, 1
    %v3101 = vadd.f32 %v3099, %v3100
    %v3102 = vrot.slane %v3084, 4
    %v3103 = vadd.f32 %v3084, %v3102
    %v3104 = vrot.slane %v3103, 2
    %v3105 = vadd.f32 %v3103, %v3104
    %v3106 = vrot.slane %v3105, 1
    %v3107 = vadd.f32 %v3105, %v3106
    %v3108 = vrot.slane %v3085, 4
    %v3109 = vadd.f32 %v3085, %v3108
    %v3110 = vrot.slane %v3109, 2
    %v3111 = vadd.f32 %v3109, %v3110
    %v3112 = vrot.slane %v3111, 1
    %v3113 = vadd.f32 %v3111, %v3112
    %v3114 = vrot.slane %v3086, 4
    %v3115 = vadd.f32 %v3086, %v3114
    %v3116 = vrot.slane %v3115, 2
    %v3117 = vadd.f32 %v3115, %v3116
    %v3118 = vrot.slane %v3117, 1
    %v3119 = vadd.f32 %v3117, %v3118
    %v3120 = vrot.slane %v3087, 4
    %v3121 = vadd.f32 %v3087, %v3120
    %v3122 = vrot.slane %v3121, 2
    %v3123 = vadd.f32 %v3121, %v3122
    %v3124 = vrot.slane %v3123, 1
    %v3125 = vadd.f32 %v3123, %v3124
    %v3126 = vrot.slane %v3088, 4
    %v3127 = vadd.f32 %v3088, %v3126
    %v3128 = vrot.slane %v3127, 2
    %v3129 = vadd.f32 %v3127, %v3128
    %v3130 = vrot.slane %v3129, 1
    %v3131 = vadd.f32 %v3129, %v3130
    %v3132 = vrot.slane %v3089, 4
    %v3133 = vadd.f32 %v3089, %v3132
    %v3134 = vrot.slane %v3133, 2
    %v3135 = vadd.f32 %v3133, %v3134
    %v3136 = vrot.slane %v3135, 1
    %v3137 = vadd.f32 %v3135, %v3136
    %v3138 = vmul.f32 %v3095, %v348
    %v3139 = vmul.f32 %v3101, %v348
    %v3140 = vmul.f32 %v3107, %v348
    %v3141 = vmul.f32 %v3113, %v348
    %v3142 = vmul.f32 %v3119, %v348
    %v3143 = vmul.f32 %v3125, %v348
    %v3144 = vmul.f32 %v3131, %v348
    %v3145 = vmul.f32 %v3137, %v348
    %v3146 = vadd.f32 %v3138, 1e-05
    %v3147 = vadd.f32 %v3139, 1e-05
    %v3148 = vadd.f32 %v3140, 1e-05
    %v3149 = vadd.f32 %v3141, 1e-05
    %v3150 = vadd.f32 %v3142, 1e-05
    %v3151 = vadd.f32 %v3143, 1e-05
    %v3152 = vadd.f32 %v3144, 1e-05
    %v3153 = vadd.f32 %v3145, 1e-05
    %v3154 = vrsqrt.pop %v3146
    %v3155 = vmul.f32 %v3154, %v3146
    %v3156 = vmul.f32 %v3155, %v3154
    %v3157 = vmul.f32 0.5, %v3156
    %v3158 = vsub.f32 1.5, %v3157
    %v3159 = vmul.f32 %v3154, %v3158
    %vm3160 = vweird.f32 %v3146
    %vm3161 = vweird.f32 %v3154
    %vm3162 = vmor %vm3160, %vm3161
    %v3163 = vsel %vm3162, %v3154, %v3159
    %v3164 = vrsqrt.pop %v3147
    %v3165 = vmul.f32 %v3164, %v3147
    %v3166 = vmul.f32 %v3165, %v3164
    %v3167 = vmul.f32 0.5, %v3166
    %v3168 = vsub.f32 1.5, %v3167
    %v3169 = vmul.f32 %v3164, %v3168
    %vm3170 = vweird.f32 %v3147
    %vm3171 = vweird.f32 %v3164
    %vm3172 = vmor %vm3170, %vm3171
    %v3173 = vsel %vm3172, %v3164, %v3169
    %v3174 = vrsqrt.pop %v3148
    %v3175 = vmul.f32 %v3174, %v3148
    %v3176 = vmul.f32 %v3175, %v3174
    %v3177 = vmul.f32 0.5, %v3176
    %v3178 = vsub.f32 1.5, %v3177
    %v3179 = vmul.f32 %v3174, %v3178
    %vm3180 = vweird.f32 %v3148
    %vm3181 = vweird.f32 %v3174
    %vm3182 = vmor %vm3180, %vm3181
    %v3183 = vsel %vm3182, %v3174, %v3179
    %v3184 = vrsqrt.pop %v3149
    %v3185 = vmul.f32 %v3184, %v3149
    %v3186 = vmul.f32 %v3185, %v3184
    %v3187 = vmul.f32 0.5, %v3186
    %v3188 = vsub.f32 1.5, %v3187
    %v3189 = vmul.f32 %v3184, %v3188
    %vm3190 = vweird.f32 %v3149
    %vm3191 = vweird.f32 %v3184
    %vm3192 = vmor %vm3190, %vm3191
    %v3193 = vsel %vm3192, %v3184, %v3189
    %v3194 = vrsqrt.pop %v3150
    %v3195 = vmul.f32 %v3194, %v3150
    %v3196 = vmul.f32 %v3195, %v3194
    %v3197 = vmul.f32 0.5, %v3196
    %v3198 = vsub.f32 1.5, %v3197
    %v3199 = vmul.f32 %v3194, %v3198
    %vm3200 = vweird.f32 %v3150
    %vm3201 = vweird.f32 %v3194
    %vm3202 = vmor %vm3200, %vm3201
    %v3203 = vsel %vm3202, %v3194, %v3199
    %v3204 = vrsqrt.pop %v3151
    %v3205 = vmul.f32 %v3204, %v3151
    %v3206 = vmul.f32 %v3205, %v3204
    %v3207 = vmul.f32 0.5, %v3206
    %v3208 = vsub.f32 1.5, %v3207
    %v3209 = vmul.f32 %v3204, %v3208
    %vm3210 = vweird.f32 %v3151
    %vm3211 = vweird.f32 %v3204
    %vm3212 = vmor %vm3210, %vm3211
    %v3213 = vsel %vm3212, %v3204, %v3209
    %v3214 = vrsqrt.pop %v3152
    %v3215 = vmul.f32 %v3214, %v3152
    %v3216 = vmul.f32 %v3215, %v3214
    %v3217 = vmul.f32 0.5, %v3216
    %v3218 = vsub.f32 1.5, %v3217
    %v3219 = vmul.f32 %v3214, %v3218
    %vm3220 = vweird.f32 %v3152
    %vm3221 = vweird.f32 %v3214
    %vm3222 = vmor %vm3220, %vm3221
    %v3223 = vsel %vm3222, %v3214, %v3219
    %v3224 = vrsqrt.pop %v3153
    %v3225 = vmul.f32 %v3224, %v3153
    %v3226 = vmul.f32 %v3225, %v3224
    %v3227 = vmul.f32 0.5, %v3226
    %v3228 = vsub.f32 1.5, %v3227
    %v3229 = vmul.f32 %v3224, %v3228
    %vm3230 = vweird.f32 %v3153
    %vm3231 = vweird.f32 %v3224
    %vm3232 = vmor %vm3230, %vm3231
    %v3233 = vsel %vm3232, %v3224, %v3229
    %v3242 = vrot.slane %v3173, 7
    %v3243 = vrot.slane %v3183, 6
    %v3244 = vrot.slane %v3193, 5
    %v3245 = vrot.slane %v3203, 4
    %v3246 = vrot.slane %v3213, 3
    %v3247 = vrot.slane %v3223, 2
    %v3248 = vrot.slane %v3233, 1
    %v3249 = vsel %vm394, %v3163, %v3242
    %v3250 = vsel %vm1022, %v3243, %v3244
    %v3251 = vsel %vm1024, %v3249, %v3250
    %vm3252 = vcmask 1044484
    %v3253 = vsel %vm3252, %v3245, %v3246
    %vm3254 = vcmask 1046534
    %v3255 = vsel %vm3254, %v3247, %v3248
    %vm3256 = vcmask 1045508
    %v3257 = vsel %vm3256, %v3253, %v3255
    %vm3258 = vcmask 1043456
    %v3259 = vsel %vm3258, %v3251, %v3257
    %v3261 = vmul.f32 %v145, %v3259
    %v3263 = vperm.slane %v3261, 0
    %v3264 = vperm.slane %v3261, 1
    %v3265 = vperm.slane %v3261, 2
    %v3266 = vperm.slane %v3261, 3
    %v3267 = vperm.slane %v3261, 4
    %v3268 = vperm.slane %v3261, 5
    %v3269 = vperm.slane %v3261, 6
    %v3270 = vperm.slane %v3261, 7
    %v3279 = vmul.f32 %v3074, %v3263
    %v3280 = vmul.f32 %v3075, %v3264
    %v3281 = vmul.f32 %v3076, %v3265
    %v3282 = vmul.f32 %v3077, %v3266
    %v3283 = vmul.f32 %v3078, %v3267
    %v3284 = vmul.f32 %v3079, %v3268
    %v3285 = vmul.f32 %v3080, %v3269
    %v3286 = vmul.f32 %v3081, %v3270
    %v3288 = vperm.slane %v149, 0
    %v3289 = vperm.slane %v149, 1
    %v3290 = vperm.slane %v149, 2
    %v3291 = vperm.slane %v149, 3
    %v3292 = vperm.slane %v149, 4
    %v3293 = vperm.slane %v149, 5
    %v3294 = vperm.slane %v149, 6
    %v3295 = vperm.slane %v149, 7
    %v3304 = vadd.f32 %v3279, %v3288
    %v3305 = vadd.f32 %v3280, %v3289
    %v3306 = vadd.f32 %v3281, %v3290
    %v3307 = vadd.f32 %v3282, %v3291
    %v3308 = vadd.f32 %v3283, %v3292
    %v3309 = vadd.f32 %v3284, %v3293
    %v3310 = vadd.f32 %v3285, %v3294
    %v3311 = vadd.f32 %v3286, %v3295
    %v3312 = vmul.f32 %v3304, 0.2
    %v3313 = vmul.f32 %v3305, 0.2
    %v3314 = vmul.f32 %v3306, 0.2
    %v3315 = vmul.f32 %v3307, 0.2
    %v3316 = vmul.f32 %v3308, 0.2
    %v3317 = vmul.f32 %v3309, 0.2
    %v3318 = vmul.f32 %v3310, 0.2
    %v3319 = vmul.f32 %v3311, 0.2
    %v3320 = vmax.f32 %v3304, %v3312
    %v3321 = vmax.f32 %v3305, %v3313
    %v3322 = vmax.f32 %v3306, %v3314
    %v3323 = vmax.f32 %v3307, %v3315
    %v3324 = vmax.f32 %v3308, %v3316
    %v3325 = vmax.f32 %v3309, %v3317
    %v3326 = vmax.f32 %v3310, %v3318
    %v3327 = vmax.f32 %v3311, %v3319
    %v3328 = vpack.c.bf16 %v3320, %v3320
    %v3329 = vpack.c.bf16 %v3321, %v3321
    %v3330 = vpack.c.bf16 %v3322, %v3322
    %v3331 = vpack.c.bf16 %v3323, %v3323
    %v3332 = vpack.c.bf16 %v3324, %v3324
    %v3333 = vpack.c.bf16 %v3325, %v3325
    %v3334 = vpack.c.bf16 %v3326, %v3326
    %v3335 = vpack.c.bf16 %v3327, %v3327
    %v3336 = vld [vmem:[#allocation11] sm:$0xff]
    %v3337 = vld [vmem:[#allocation11 + $0x8] sm:$0xff]
    %v3338 = vld [vmem:[#allocation11 + $0x10] sm:$0xff]
    %v3339 = vld [vmem:[#allocation11 + $0x18] sm:$0xf]
    %v3340 = vld [vmem:[#allocation11 + $0x1c] sm:$0xff]
    %v3341 = vld [vmem:[#allocation11 + $0x24] sm:$0xff]
    %v3342 = vld [vmem:[#allocation11 + $0x2c] sm:$0xff]
    %v3343 = vld [vmem:[#allocation11 + $0x34] sm:$0xf]
    %v3344 = vld [vmem:[#allocation11 + $0x38] sm:$0xff]
    %v3345 = vld [vmem:[#allocation11 + $0x40] sm:$0xff]
    %v3346 = vld [vmem:[#allocation11 + $0x48] sm:$0xff]
    %v3347 = vld [vmem:[#allocation11 + $0x50] sm:$0xf]
    %v3348 = vld [vmem:[#allocation11 + $0x54] sm:$0xff]
    %v3349 = vld [vmem:[#allocation11 + $0x5c] sm:$0xff]
    %v3350 = vld [vmem:[#allocation11 + $0x64] sm:$0xff]
    %v3351 = vld [vmem:[#allocation11 + $0x6c] sm:$0xf]
    %v3352 = vld [vmem:[#allocation11 + $0x70] sm:$0xff]
    %v3353 = vld [vmem:[#allocation11 + $0x78] sm:$0xff]
    %v3354 = vld [vmem:[#allocation11 + $0x80] sm:$0xff]
    %v3355 = vld [vmem:[#allocation11 + $0x88] sm:$0xf]
    %v3356 = vld [vmem:[#allocation11 + $0x8c] sm:$0xff]
    %v3357 = vld [vmem:[#allocation11 + $0x94] sm:$0xff]
    %v3358 = vld [vmem:[#allocation11 + $0x9c] sm:$0xff]
    %v3359 = vld [vmem:[#allocation11 + $0xa4] sm:$0xf]
    %v3360 = vld [vmem:[#allocation11 + $0xa8] sm:$0xff]
    %v3361 = vld [vmem:[#allocation11 + $0xb0] sm:$0xff]
    %v3362 = vld [vmem:[#allocation11 + $0xb8] sm:$0xff]
    %v3363 = vld [vmem:[#allocation11 + $0xc0] sm:$0xf]
    %v3364 = vld [vmem:[#allocation11 + $0xc4] sm:$0xff]
    %v3365 = vld [vmem:[#allocation11 + $0xcc] sm:$0xff]
    %v3366 = vld [vmem:[#allocation11 + $0xd4] sm:$0xff]
    %v3367 = vld [vmem:[#allocation11 + $0xdc] sm:$0xf]
    %v3368 = vld [vmem:[#allocation11 + $0xe0] sm:$0xff]
    %v3369 = vld [vmem:[#allocation11 + $0xe8] sm:$0xff]
    %v3370 = vld [vmem:[#allocation11 + $0xf0] sm:$0xff]
    %v3371 = vld [vmem:[#allocation11 + $0xf8] sm:$0xf]
    %v3372 = vld [vmem:[#allocation11 + $0xfc] sm:$0xff]
    %v3373 = vld [vmem:[#allocation11 + $0x104] sm:$0xff]
    %v3374 = vld [vmem:[#allocation11 + $0x10c] sm:$0xff]
    %v3375 = vld [vmem:[#allocation11 + $0x114] sm:$0xf]
    %v3376 = vld [vmem:[#allocation11 + $0x118] sm:$0xff]
    %v3377 = vld [vmem:[#allocation11 + $0x120] sm:$0xff]
    %v3378 = vld [vmem:[#allocation11 + $0x128] sm:$0xff]
    %v3379 = vld [vmem:[#allocation11 + $0x130] sm:$0xf]
    %v3380 = vld [vmem:[#allocation11 + $0x134] sm:$0xff]
    %v3381 = vld [vmem:[#allocation11 + $0x13c] sm:$0xff]
    %v3382 = vld [vmem:[#allocation11 + $0x144] sm:$0xff]
    %v3383 = vld [vmem:[#allocation11 + $0x14c] sm:$0xf]
    %v3384 = vld [vmem:[#allocation11 + $0x150] sm:$0xff]
    %v3385 = vld [vmem:[#allocation11 + $0x158] sm:$0xff]
    %v3386 = vld [vmem:[#allocation11 + $0x160] sm:$0xff]
    %v3387 = vld [vmem:[#allocation11 + $0x168] sm:$0xf]
    %v3388 = vld [vmem:[#allocation11 + $0x16c] sm:$0xff]
    %v3389 = vld [vmem:[#allocation11 + $0x174] sm:$0xff]
    %v3390 = vld [vmem:[#allocation11 + $0x17c] sm:$0xff]
    %v3391 = vld [vmem:[#allocation11 + $0x184] sm:$0xf]
    %v3392 = vld [vmem:[#allocation11 + $0x188] sm:$0xff]
    %v3393 = vld [vmem:[#allocation11 + $0x190] sm:$0xff]
    %v3394 = vld [vmem:[#allocation11 + $0x198] sm:$0xff]
    %v3395 = vld [vmem:[#allocation11 + $0x1a0] sm:$0xf]
    %v3396 = vld [vmem:[#allocation11 + $0x1a4] sm:$0xff]
    %v3397 = vld [vmem:[#allocation11 + $0x1ac] sm:$0xff]
    %v3398 = vld [vmem:[#allocation11 + $0x1b4] sm:$0xff]
    %v3399 = vld [vmem:[#allocation11 + $0x1bc] sm:$0xf]
    %v3400 = vld [vmem:[#allocation11 + $0x1c0] sm:$0xff]
    %v3401 = vld [vmem:[#allocation11 + $0x1c8] sm:$0xff]
    %v3402 = vld [vmem:[#allocation11 + $0x1d0] sm:$0xff]
    %v3403 = vld [vmem:[#allocation11 + $0x1d8] sm:$0xf]
    %v3404 = vld [vmem:[#allocation11 + $0x1dc] sm:$0xff]
    %v3405 = vld [vmem:[#allocation11 + $0x1e4] sm:$0xff]
    %v3406 = vld [vmem:[#allocation11 + $0x1ec] sm:$0xff]
    %v3407 = vld [vmem:[#allocation11 + $0x1f4] sm:$0xf]
    %v3408 = vld [vmem:[#allocation11 + $0x1f8] sm:$0xff]
    %v3409 = vld [vmem:[#allocation11 + $0x200] sm:$0xff]
    %v3410 = vld [vmem:[#allocation11 + $0x208] sm:$0xff]
    %v3411 = vld [vmem:[#allocation11 + $0x210] sm:$0xf]
    %v3412 = vld [vmem:[#allocation11 + $0x214] sm:$0xff]
    %v3413 = vld [vmem:[#allocation11 + $0x21c] sm:$0xff]
    %v3414 = vld [vmem:[#allocation11 + $0x224] sm:$0xff]
    %v3415 = vld [vmem:[#allocation11 + $0x22c] sm:$0xf]
    %v3416 = vld [vmem:[#allocation11 + $0x230] sm:$0xff]
    %v3417 = vld [vmem:[#allocation11 + $0x238] sm:$0xff]
    %v3418 = vld [vmem:[#allocation11 + $0x240] sm:$0xff]
    %v3419 = vld [vmem:[#allocation11 + $0x248] sm:$0xf]
    %v3420 = vld [vmem:[#allocation11 + $0x24c] sm:$0xff]
    %v3421 = vld [vmem:[#allocation11 + $0x254] sm:$0xff]
    %v3422 = vld [vmem:[#allocation11 + $0x25c] sm:$0xff]
    %v3423 = vld [vmem:[#allocation11 + $0x264] sm:$0xf]
    %v3424 = vld [vmem:[#allocation11 + $0x268] sm:$0xff]
    %v3425 = vld [vmem:[#allocation11 + $0x270] sm:$0xff]
    %v3426 = vld [vmem:[#allocation11 + $0x278] sm:$0xff]
    %v3427 = vld [vmem:[#allocation11 + $0x280] sm:$0xf]
    %v3428 = vld [vmem:[#allocation11 + $0x284] sm:$0xff]
    %v3429 = vld [vmem:[#allocation11 + $0x28c] sm:$0xff]
    %v3430 = vld [vmem:[#allocation11 + $0x294] sm:$0xff]
    %v3431 = vld [vmem:[#allocation11 + $0x29c] sm:$0xf]
    %v3432 = vld [vmem:[#allocation11 + $0x2a0] sm:$0xff]
    %v3433 = vld [vmem:[#allocation11 + $0x2a8] sm:$0xff]
    %v3434 = vld [vmem:[#allocation11 + $0x2b0] sm:$0xff]
    %v3435 = vld [vmem:[#allocation11 + $0x2b8] sm:$0xf]
    %v3436 = vld [vmem:[#allocation11 + $0x2bc] sm:$0xff]
    %v3437 = vld [vmem:[#allocation11 + $0x2c4] sm:$0xff]
    %v3438 = vld [vmem:[#allocation11 + $0x2cc] sm:$0xff]
    %v3439 = vld [vmem:[#allocation11 + $0x2d4] sm:$0xf]
    %v3440 = vld [vmem:[#allocation11 + $0x2d8] sm:$0xff]
    %v3441 = vld [vmem:[#allocation11 + $0x2e0] sm:$0xff]
    %v3442 = vld [vmem:[#allocation11 + $0x2e8] sm:$0xff]
    %v3443 = vld [vmem:[#allocation11 + $0x2f0] sm:$0xf]
    %v3444 = vld [vmem:[#allocation11 + $0x2f4] sm:$0xff]
    %v3445 = vld [vmem:[#allocation11 + $0x2fc] sm:$0xff]
    %v3446 = vld [vmem:[#allocation11 + $0x304] sm:$0xff]
    %v3447 = vld [vmem:[#allocation11 + $0x30c] sm:$0xf]
    %v3448 = vld [vmem:[#allocation11 + $0x310] sm:$0xff]
    %v3449 = vld [vmem:[#allocation11 + $0x318] sm:$0xff]
    %v3450 = vld [vmem:[#allocation11 + $0x320] sm:$0xff]
    %v3451 = vld [vmem:[#allocation11 + $0x328] sm:$0xf]
    %v3452 = vld [vmem:[#allocation11 + $0x32c] sm:$0xff]
    %v3453 = vld [vmem:[#allocation11 + $0x334] sm:$0xff]
    %v3454 = vld [vmem:[#allocation11 + $0x33c] sm:$0xff]
    %v3455 = vld [vmem:[#allocation11 + $0x344] sm:$0xf]
    %v3456 = vld [vmem:[#allocation11 + $0x348] sm:$0xff]
    %v3457 = vld [vmem:[#allocation11 + $0x350] sm:$0xff]
    %v3458 = vld [vmem:[#allocation11 + $0x358] sm:$0xff]
    %v3459 = vld [vmem:[#allocation11 + $0x360] sm:$0xf]
    %v3460 = vld [vmem:[#allocation11 + $0x364] sm:$0xff]
    %v3461 = vld [vmem:[#allocation11 + $0x36c] sm:$0xff]
    %v3462 = vld [vmem:[#allocation11 + $0x374] sm:$0xff]
    %v3463 = vld [vmem:[#allocation11 + $0x37c] sm:$0xf]
    %v3464 = vld [vmem:[#allocation11 + $0x380] sm:$0xff]
    %v3465 = vld [vmem:[#allocation11 + $0x388] sm:$0xff]
    %v3466 = vld [vmem:[#allocation11 + $0x390] sm:$0xff]
    %v3467 = vld [vmem:[#allocation11 + $0x398] sm:$0xf]
    %v3468 = vld [vmem:[#allocation11 + $0x39c] sm:$0xff]
    %v3469 = vld [vmem:[#allocation11 + $0x3a4] sm:$0xff]
    %v3470 = vld [vmem:[#allocation11 + $0x3ac] sm:$0xff]
    %v3471 = vld [vmem:[#allocation11 + $0x3b4] sm:$0xf]
    %v3472 = vld [vmem:[#allocation11 + $0x3b8] sm:$0xff]
    %v3473 = vld [vmem:[#allocation11 + $0x3c0] sm:$0xff]
    %v3474 = vld [vmem:[#allocation11 + $0x3c8] sm:$0xff]
    %v3475 = vld [vmem:[#allocation11 + $0x3d0] sm:$0xf]
    %v3476 = vld [vmem:[#allocation11 + $0x3d4] sm:$0xff]
    %v3477 = vld [vmem:[#allocation11 + $0x3dc] sm:$0xff]
    %v3478 = vld [vmem:[#allocation11 + $0x3e4] sm:$0xff]
    %v3479 = vld [vmem:[#allocation11 + $0x3ec] sm:$0xf]
    %v3480 = vld [vmem:[#allocation11 + $0x3f0] sm:$0xff]
    %v3481 = vld [vmem:[#allocation11 + $0x3f8] sm:$0xff]
    %v3482 = vld [vmem:[#allocation11 + $0x400] sm:$0xff]
    %v3483 = vld [vmem:[#allocation11 + $0x408] sm:$0xf]
    %v3484 = vld [vmem:[#allocation11 + $0x40c] sm:$0xff]
    %v3485 = vld [vmem:[#allocation11 + $0x414] sm:$0xff]
    %v3486 = vld [vmem:[#allocation11 + $0x41c] sm:$0xff]
    %v3487 = vld [vmem:[#allocation11 + $0x424] sm:$0xf]
    %v3488 = vld [vmem:[#allocation11 + $0x428] sm:$0xff]
    %v3489 = vld [vmem:[#allocation11 + $0x430] sm:$0xff]
    %v3490 = vld [vmem:[#allocation11 + $0x438] sm:$0xff]
    %v3491 = vld [vmem:[#allocation11 + $0x440] sm:$0xf]
    %v3492 = vld [vmem:[#allocation11 + $0x444] sm:$0xff]
    %v3493 = vld [vmem:[#allocation11 + $0x44c] sm:$0xff]
    %v3494 = vld [vmem:[#allocation11 + $0x454] sm:$0xff]
    %v3495 = vld [vmem:[#allocation11 + $0x45c] sm:$0xf]
    %v3496 = vld [vmem:[#allocation11 + $0x460] sm:$0xff]
    %v3497 = vld [vmem:[#allocation11 + $0x468] sm:$0xff]
    %v3498 = vld [vmem:[#allocation11 + $0x470] sm:$0xff]
    %v3499 = vld [vmem:[#allocation11 + $0x478] sm:$0xf]
    %v3500 = vld [vmem:[#allocation11 + $0x47c] sm:$0xff]
    %v3501 = vld [vmem:[#allocation11 + $0x484] sm:$0xff]
    %v3502 = vld [vmem:[#allocation11 + $0x48c] sm:$0xff]
    %v3503 = vld [vmem:[#allocation11 + $0x494] sm:$0xf]
    %v3504 = vld [vmem:[#allocation11 + $0x498] sm:$0xff]
    %v3505 = vld [vmem:[#allocation11 + $0x4a0] sm:$0xff]
    %v3506 = vld [vmem:[#allocation11 + $0x4a8] sm:$0xff]
    %v3507 = vld [vmem:[#allocation11 + $0x4b0] sm:$0xf]
    %v3508 = vld [vmem:[#allocation11 + $0x4b4] sm:$0xff]
    %v3509 = vld [vmem:[#allocation11 + $0x4bc] sm:$0xff]
    %v3510 = vld [vmem:[#allocation11 + $0x4c4] sm:$0xff]
    %v3511 = vld [vmem:[#allocation11 + $0x4cc] sm:$0xf]
    %v3512 = vld [vmem:[#allocation11 + $0x4d0] sm:$0xff]
    %v3513 = vld [vmem:[#allocation11 + $0x4d8] sm:$0xff]
    %v3514 = vld [vmem:[#allocation11 + $0x4e0] sm:$0xff]
    %v3515 = vld [vmem:[#allocation11 + $0x4e8] sm:$0xf]
    %v3516 = vld [vmem:[#allocation11 + $0x4ec] sm:$0xff]
    %v3517 = vld [vmem:[#allocation11 + $0x4f4] sm:$0xff]
    %v3518 = vld [vmem:[#allocation11 + $0x4fc] sm:$0xff]
    %v3519 = vld [vmem:[#allocation11 + $0x504] sm:$0xf]
    %v3520 = vld [vmem:[#allocation11 + $0x508] sm:$0xff]
    %v3521 = vld [vmem:[#allocation11 + $0x510] sm:$0xff]
    %v3522 = vld [vmem:[#allocation11 + $0x518] sm:$0xff]
    %v3523 = vld [vmem:[#allocation11 + $0x520] sm:$0xf]
    %v3524 = vld [vmem:[#allocation11 + $0x524] sm:$0xff]
    %v3525 = vld [vmem:[#allocation11 + $0x52c] sm:$0xff]
    %v3526 = vld [vmem:[#allocation11 + $0x534] sm:$0xff]
    %v3527 = vld [vmem:[#allocation11 + $0x53c] sm:$0xf]
    %v3528 = vld [vmem:[#allocation11 + $0x540] sm:$0xff]
    %v3529 = vld [vmem:[#allocation11 + $0x548] sm:$0xff]
    %v3530 = vld [vmem:[#allocation11 + $0x550] sm:$0xff]
    %v3531 = vld [vmem:[#allocation11 + $0x558] sm:$0xf]
    %v3532 = vld [vmem:[#allocation11 + $0x55c] sm:$0xff]
    %v3533 = vld [vmem:[#allocation11 + $0x564] sm:$0xff]
    %v3534 = vld [vmem:[#allocation11 + $0x56c] sm:$0xff]
    %v3535 = vld [vmem:[#allocation11 + $0x574] sm:$0xf]
    %v3536 = vld [vmem:[#allocation11 + $0x578] sm:$0xff]
    %v3537 = vld [vmem:[#allocation11 + $0x580] sm:$0xff]
    %v3538 = vld [vmem:[#allocation11 + $0x588] sm:$0xff]
    %v3539 = vld [vmem:[#allocation11 + $0x590] sm:$0xf]
    %v3540 = vld [vmem:[#allocation11 + $0x594] sm:$0xff]
    %v3541 = vld [vmem:[#allocation11 + $0x59c] sm:$0xff]
    %v3542 = vld [vmem:[#allocation11 + $0x5a4] sm:$0xff]
    %v3543 = vld [vmem:[#allocation11 + $0x5ac] sm:$0xf]
    %v3544 = vld [vmem:[#allocation11 + $0x5b0] sm:$0xff]
    %v3545 = vld [vmem:[#allocation11 + $0x5b8] sm:$0xff]
    %v3546 = vld [vmem:[#allocation11 + $0x5c0] sm:$0xff]
    %v3547 = vld [vmem:[#allocation11 + $0x5c8] sm:$0xf]
    %v3548 = vld [vmem:[#allocation11 + $0x5cc] sm:$0xff]
    %v3549 = vld [vmem:[#allocation11 + $0x5d4] sm:$0xff]
    %v3550 = vld [vmem:[#allocation11 + $0x5dc] sm:$0xff]
    %v3551 = vld [vmem:[#allocation11 + $0x5e4] sm:$0xf]
    %v3552 = vld [vmem:[#allocation11 + $0x5e8] sm:$0xff]
    %v3553 = vld [vmem:[#allocation11 + $0x5f0] sm:$0xff]
    %v3554 = vld [vmem:[#allocation11 + $0x5f8] sm:$0xff]
    %v3555 = vld [vmem:[#allocation11 + $0x600] sm:$0xf]
    %v3556 = vld [vmem:[#allocation11 + $0x604] sm:$0xff]
    %v3557 = vld [vmem:[#allocation11 + $0x60c] sm:$0xff]
    %v3558 = vld [vmem:[#allocation11 + $0x614] sm:$0xff]
    %v3559 = vld [vmem:[#allocation11 + $0x61c] sm:$0xf]
    %v3560 = vld [vmem:[#allocation11 + $0x620] sm:$0xff]
    %v3561 = vld [vmem:[#allocation11 + $0x628] sm:$0xff]
    %v3562 = vld [vmem:[#allocation11 + $0x630] sm:$0xff]
    %v3563 = vld [vmem:[#allocation11 + $0x638] sm:$0xf]
    %v3564 = vld [vmem:[#allocation11 + $0x63c] sm:$0xff]
    %v3565 = vld [vmem:[#allocation11 + $0x644] sm:$0xff]
    %v3566 = vld [vmem:[#allocation11 + $0x64c] sm:$0xff]
    %v3567 = vld [vmem:[#allocation11 + $0x654] sm:$0xf]
    %v3568 = vld [vmem:[#allocation11 + $0x658] sm:$0xff]
    %v3569 = vld [vmem:[#allocation11 + $0x660] sm:$0xff]
    %v3570 = vld [vmem:[#allocation11 + $0x668] sm:$0xff]
    %v3571 = vld [vmem:[#allocation11 + $0x670] sm:$0xf]
    %v3572 = vld [vmem:[#allocation11 + $0x674] sm:$0xff]
    %v3573 = vld [vmem:[#allocation11 + $0x67c] sm:$0xff]
    %v3574 = vld [vmem:[#allocation11 + $0x684] sm:$0xff]
    %v3575 = vld [vmem:[#allocation11 + $0x68c] sm:$0xf]
    %v3576 = vld [vmem:[#allocation11 + $0x690] sm:$0xff]
    %v3577 = vld [vmem:[#allocation11 + $0x698] sm:$0xff]
    %v3578 = vld [vmem:[#allocation11 + $0x6a0] sm:$0xff]
    %v3579 = vld [vmem:[#allocation11 + $0x6a8] sm:$0xf]
    %v3580 = vld [vmem:[#allocation11 + $0x6ac] sm:$0xff]
    %v3581 = vld [vmem:[#allocation11 + $0x6b4] sm:$0xff]
    %v3582 = vld [vmem:[#allocation11 + $0x6bc] sm:$0xff]
    %v3583 = vld [vmem:[#allocation11 + $0x6c4] sm:$0xf]
    %v3584 = vld [vmem:[#allocation11 + $0x6c8] sm:$0xff]
    %v3585 = vld [vmem:[#allocation11 + $0x6d0] sm:$0xff]
    %v3586 = vld [vmem:[#allocation11 + $0x6d8] sm:$0xff]
    %v3587 = vld [vmem:[#allocation11 + $0x6e0] sm:$0xf]
    %v3588 = vld [vmem:[#allocation11 + $0x6e4] sm:$0xff]
    %v3589 = vld [vmem:[#allocation11 + $0x6ec] sm:$0xff]
    %v3590 = vld [vmem:[#allocation11 + $0x6f4] sm:$0xff]
    %v3591 = vld [vmem:[#allocation11 + $0x6fc] sm:$0xf]
    %v3592 = vld [vmem:[#allocation11 + $0x700] sm:$0xff]
    %v3593 = vld [vmem:[#allocation11 + $0x708] sm:$0xff]
    %v3594 = vld [vmem:[#allocation11 + $0x710] sm:$0xff]
    %v3595 = vld [vmem:[#allocation11 + $0x718] sm:$0xf]
    %v3596 = vld [vmem:[#allocation11 + $0x71c] sm:$0xff]
    %v3597 = vld [vmem:[#allocation11 + $0x724] sm:$0xff]
    %v3598 = vld [vmem:[#allocation11 + $0x72c] sm:$0xff]
    %v3599 = vld [vmem:[#allocation11 + $0x734] sm:$0xf]
    %v3600 = vld [vmem:[#allocation11 + $0x738] sm:$0xff]
    %v3601 = vld [vmem:[#allocation11 + $0x740] sm:$0xff]
    %v3602 = vld [vmem:[#allocation11 + $0x748] sm:$0xff]
    %v3603 = vld [vmem:[#allocation11 + $0x750] sm:$0xf]
    %v3604 = vld [vmem:[#allocation11 + $0x754] sm:$0xff]
    %v3605 = vld [vmem:[#allocation11 + $0x75c] sm:$0xff]
    %v3606 = vld [vmem:[#allocation11 + $0x764] sm:$0xff]
    %v3607 = vld [vmem:[#allocation11 + $0x76c] sm:$0xf]
    %v3608 = vld [vmem:[#allocation11 + $0x770] sm:$0xff]
    %v3609 = vld [vmem:[#allocation11 + $0x778] sm:$0xff]
    %v3610 = vld [vmem:[#allocation11 + $0x780] sm:$0xff]
    %v3611 = vld [vmem:[#allocation11 + $0x788] sm:$0xf]
    %v3612 = vld [vmem:[#allocation11 + $0x78c] sm:$0xff]
    %v3613 = vld [vmem:[#allocation11 + $0x794] sm:$0xff]
    %v3614 = vld [vmem:[#allocation11 + $0x79c] sm:$0xff]
    %v3615 = vld [vmem:[#allocation11 + $0x7a4] sm:$0xf]
    %v3616 = vld [vmem:[#allocation11 + $0x7a8] sm:$0xff]
    %v3617 = vld [vmem:[#allocation11 + $0x7b0] sm:$0xff]
    %v3618 = vld [vmem:[#allocation11 + $0x7b8] sm:$0xff]
    %v3619 = vld [vmem:[#allocation11 + $0x7c0] sm:$0xf]
    %v3620 = vld [vmem:[#allocation11 + $0x7c4] sm:$0xff]
    %v3621 = vld [vmem:[#allocation11 + $0x7cc] sm:$0xff]
    %v3622 = vld [vmem:[#allocation11 + $0x7d4] sm:$0xff]
    %v3623 = vld [vmem:[#allocation11 + $0x7dc] sm:$0xf]
    %v3624 = vld [vmem:[#allocation11 + $0x7e0] sm:$0xff]
    %v3625 = vld [vmem:[#allocation11 + $0x7e8] sm:$0xff]
    %v3626 = vld [vmem:[#allocation11 + $0x7f0] sm:$0xff]
    %v3627 = vld [vmem:[#allocation11 + $0x7f8] sm:$0xf]
    %v3628 = vld [vmem:[#allocation11 + $0x7fc] sm:$0xff]
    %v3629 = vld [vmem:[#allocation11 + $0x804] sm:$0xff]
    %v3630 = vld [vmem:[#allocation11 + $0x80c] sm:$0xff]
    %v3631 = vld [vmem:[#allocation11 + $0x814] sm:$0xf]
    %v3632 = vld [vmem:[#allocation11 + $0x818] sm:$0xff]
    %v3633 = vld [vmem:[#allocation11 + $0x820] sm:$0xff]
    %v3634 = vld [vmem:[#allocation11 + $0x828] sm:$0xff]
    %v3635 = vld [vmem:[#allocation11 + $0x830] sm:$0xf]
    %v3636 = vld [vmem:[#allocation11 + $0x834] sm:$0xff]
    %v3637 = vld [vmem:[#allocation11 + $0x83c] sm:$0xff]
    %v3638 = vld [vmem:[#allocation11 + $0x844] sm:$0xff]
    %v3639 = vld [vmem:[#allocation11 + $0x84c] sm:$0xf]
    %v3640 = vld [vmem:[#allocation11 + $0x850] sm:$0xff]
    %v3641 = vld [vmem:[#allocation11 + $0x858] sm:$0xff]
    %v3642 = vld [vmem:[#allocation11 + $0x860] sm:$0xff]
    %v3643 = vld [vmem:[#allocation11 + $0x868] sm:$0xf]
    %v3644 = vld [vmem:[#allocation11 + $0x86c] sm:$0xff]
    %v3645 = vld [vmem:[#allocation11 + $0x874] sm:$0xff]
    %v3646 = vld [vmem:[#allocation11 + $0x87c] sm:$0xff]
    %v3647 = vld [vmem:[#allocation11 + $0x884] sm:$0xf]
    %v3648 = vld [vmem:[#allocation11 + $0x888] sm:$0xff]
    %v3649 = vld [vmem:[#allocation11 + $0x890] sm:$0xff]
    %v3650 = vld [vmem:[#allocation11 + $0x898] sm:$0xff]
    %v3651 = vld [vmem:[#allocation11 + $0x8a0] sm:$0xf]
    %v3652 = vld [vmem:[#allocation11 + $0x8a4] sm:$0xff]
    %v3653 = vld [vmem:[#allocation11 + $0x8ac] sm:$0xff]
    %v3654 = vld [vmem:[#allocation11 + $0x8b4] sm:$0xff]
    %v3655 = vld [vmem:[#allocation11 + $0x8bc] sm:$0xf]
    %v3656 = vld [vmem:[#allocation11 + $0x8c0] sm:$0xff]
    %v3657 = vld [vmem:[#allocation11 + $0x8c8] sm:$0xff]
    %v3658 = vld [vmem:[#allocation11 + $0x8d0] sm:$0xff]
    %v3659 = vld [vmem:[#allocation11 + $0x8d8] sm:$0xf]
    %v3660 = vld [vmem:[#allocation11 + $0x8dc] sm:$0xff]
    %v3661 = vld [vmem:[#allocation11 + $0x8e4] sm:$0xff]
    %v3662 = vld [vmem:[#allocation11 + $0x8ec] sm:$0xff]
    %v3663 = vld [vmem:[#allocation11 + $0x8f4] sm:$0xf]
    %v3664 = vld [vmem:[#allocation11 + $0x8f8] sm:$0xff]
    %v3665 = vld [vmem:[#allocation11 + $0x900] sm:$0xff]
    %v3666 = vld [vmem:[#allocation11 + $0x908] sm:$0xff]
    %v3667 = vld [vmem:[#allocation11 + $0x910] sm:$0xf]
    %v3668 = vld [vmem:[#allocation11 + $0x914] sm:$0xff]
    %v3669 = vld [vmem:[#allocation11 + $0x91c] sm:$0xff]
    %v3670 = vld [vmem:[#allocation11 + $0x924] sm:$0xff]
    %v3671 = vld [vmem:[#allocation11 + $0x92c] sm:$0xf]
    %v3672 = vld [vmem:[#allocation11 + $0x930] sm:$0xff]
    %v3673 = vld [vmem:[#allocation11 + $0x938] sm:$0xff]
    %v3674 = vld [vmem:[#allocation11 + $0x940] sm:$0xff]
    %v3675 = vld [vmem:[#allocation11 + $0x948] sm:$0xf]
    %v3676 = vld [vmem:[#allocation11 + $0x94c] sm:$0xff]
    %v3677 = vld [vmem:[#allocation11 + $0x954] sm:$0xff]
    %v3678 = vld [vmem:[#allocation11 + $0x95c] sm:$0xff]
    %v3679 = vld [vmem:[#allocation11 + $0x964] sm:$0xf]
    %v3680 = vld [vmem:[#allocation11 + $0x968] sm:$0xff]
    %v3681 = vld [vmem:[#allocation11 + $0x970] sm:$0xff]
    %v3682 = vld [vmem:[#allocation11 + $0x978] sm:$0xff]
    %v3683 = vld [vmem:[#allocation11 + $0x980] sm:$0xf]
    %v3684 = vld [vmem:[#allocation11 + $0x984] sm:$0xff]
    %v3685 = vld [vmem:[#allocation11 + $0x98c] sm:$0xff]
    %v3686 = vld [vmem:[#allocation11 + $0x994] sm:$0xff]
    %v3687 = vld [vmem:[#allocation11 + $0x99c] sm:$0xf]
    %v3688 = vld [vmem:[#allocation11 + $0x9a0] sm:$0xff]
    %v3689 = vld [vmem:[#allocation11 + $0x9a8] sm:$0xff]
    %v3690 = vld [vmem:[#allocation11 + $0x9b0] sm:$0xff]
    %v3691 = vld [vmem:[#allocation11 + $0x9b8] sm:$0xf]
    %v3692 = vld [vmem:[#allocation11 + $0x9bc] sm:$0xff]
    %v3693 = vld [vmem:[#allocation11 + $0x9c4] sm:$0xff]
    %v3694 = vld [vmem:[#allocation11 + $0x9cc] sm:$0xff]
    %v3695 = vld [vmem:[#allocation11 + $0x9d4] sm:$0xf]
    %v3696 = vld [vmem:[#allocation11 + $0x9d8] sm:$0xff]
    %v3697 = vld [vmem:[#allocation11 + $0x9e0] sm:$0xff]
    %v3698 = vld [vmem:[#allocation11 + $0x9e8] sm:$0xff]
    %v3699 = vld [vmem:[#allocation11 + $0x9f0] sm:$0xf]
    %v3700 = vld [vmem:[#allocation11 + $0x9f4] sm:$0xff]
    %v3701 = vld [vmem:[#allocation11 + $0x9fc] sm:$0xff]
    %v3702 = vld [vmem:[#allocation11 + $0xa04] sm:$0xff]
    %v3703 = vld [vmem:[#allocation11 + $0xa0c] sm:$0xf]
    %v3704 = vld [vmem:[#allocation11 + $0xa10] sm:$0xff]
    %v3705 = vld [vmem:[#allocation11 + $0xa18] sm:$0xff]
    %v3706 = vld [vmem:[#allocation11 + $0xa20] sm:$0xff]
    %v3707 = vld [vmem:[#allocation11 + $0xa28] sm:$0xf]
    %v3708 = vld [vmem:[#allocation11 + $0xa2c] sm:$0xff]
    %v3709 = vld [vmem:[#allocation11 + $0xa34] sm:$0xff]
    %v3710 = vld [vmem:[#allocation11 + $0xa3c] sm:$0xff]
    %v3711 = vld [vmem:[#allocation11 + $0xa44] sm:$0xf]
    %v3712 = vld [vmem:[#allocation11 + $0xa48] sm:$0xff]
    %v3713 = vld [vmem:[#allocation11 + $0xa50] sm:$0xff]
    %v3714 = vld [vmem:[#allocation11 + $0xa58] sm:$0xff]
    %v3715 = vld [vmem:[#allocation11 + $0xa60] sm:$0xf]
    %v3716 = vld [vmem:[#allocation11 + $0xa64] sm:$0xff]
    %v3717 = vld [vmem:[#allocation11 + $0xa6c] sm:$0xff]
    %v3718 = vld [vmem:[#allocation11 + $0xa74] sm:$0xff]
    %v3719 = vld [vmem:[#allocation11 + $0xa7c] sm:$0xf]
    %v3720 = vld [vmem:[#allocation11 + $0xa80] sm:$0xff]
    %v3721 = vld [vmem:[#allocation11 + $0xa88] sm:$0xff]
    %v3722 = vld [vmem:[#allocation11 + $0xa90] sm:$0xff]
    %v3723 = vld [vmem:[#allocation11 + $0xa98] sm:$0xf]
    %v3724 = vld [vmem:[#allocation11 + $0xa9c] sm:$0xff]
    %v3725 = vld [vmem:[#allocation11 + $0xaa4] sm:$0xff]
    %v3726 = vld [vmem:[#allocation11 + $0xaac] sm:$0xff]
    %v3727 = vld [vmem:[#allocation11 + $0xab4] sm:$0xf]
    %v3728 = vld [vmem:[#allocation11 + $0xab8] sm:$0xff]
    %v3729 = vld [vmem:[#allocation11 + $0xac0] sm:$0xff]
    %v3730 = vld [vmem:[#allocation11 + $0xac8] sm:$0xff]
    %v3731 = vld [vmem:[#allocation11 + $0xad0] sm:$0xf]
    %v3732 = vld [vmem:[#allocation11 + $0xad4] sm:$0xff]
    %v3733 = vld [vmem:[#allocation11 + $0xadc] sm:$0xff]
    %v3734 = vld [vmem:[#allocation11 + $0xae4] sm:$0xff]
    %v3735 = vld [vmem:[#allocation11 + $0xaec] sm:$0xf]
    %v3736 = vld [vmem:[#allocation11 + $0xaf0] sm:$0xff]
    %v3737 = vld [vmem:[#allocation11 + $0xaf8] sm:$0xff]
    %v3738 = vld [vmem:[#allocation11 + $0xb00] sm:$0xff]
    %v3739 = vld [vmem:[#allocation11 + $0xb08] sm:$0xf]
    %v3740 = vld [vmem:[#allocation11 + $0xb0c] sm:$0xff]
    %v3741 = vld [vmem:[#allocation11 + $0xb14] sm:$0xff]
    %v3742 = vld [vmem:[#allocation11 + $0xb1c] sm:$0xff]
    %v3743 = vld [vmem:[#allocation11 + $0xb24] sm:$0xf]
    %v3744 = vld [vmem:[#allocation11 + $0xb28] sm:$0xff]
    %v3745 = vld [vmem:[#allocation11 + $0xb30] sm:$0xff]
    %v3746 = vld [vmem:[#allocation11 + $0xb38] sm:$0xff]
    %v3747 = vld [vmem:[#allocation11 + $0xb40] sm:$0xf]
    %v3748 = vld [vmem:[#allocation11 + $0xb44] sm:$0xff]
    %v3749 = vld [vmem:[#allocation11 + $0xb4c] sm:$0xff]
    %v3750 = vld [vmem:[#allocation11 + $0xb54] sm:$0xff]
    %v3751 = vld [vmem:[#allocation11 + $0xb5c] sm:$0xf]
    %v3752 = vld [vmem:[#allocation11 + $0xb60] sm:$0xff]
    %v3753 = vld [vmem:[#allocation11 + $0xb68] sm:$0xff]
    %v3754 = vld [vmem:[#allocation11 + $0xb70] sm:$0xff]
    %v3755 = vld [vmem:[#allocation11 + $0xb78] sm:$0xf]
    %v3756 = vld [vmem:[#allocation11 + $0xb7c] sm:$0xff]
    %v3757 = vld [vmem:[#allocation11 + $0xb84] sm:$0xff]
    %v3758 = vld [vmem:[#allocation11 + $0xb8c] sm:$0xff]
    %v3759 = vld [vmem:[#allocation11 + $0xb94] sm:$0xf]
    %v3760 = vld [vmem:[#allocation11 + $0xb98] sm:$0xff]
    %v3761 = vld [vmem:[#allocation11 + $0xba0] sm:$0xff]
    %v3762 = vld [vmem:[#allocation11 + $0xba8] sm:$0xff]
    %v3763 = vld [vmem:[#allocation11 + $0xbb0] sm:$0xf]
    %v3764 = vld [vmem:[#allocation11 + $0xbb4] sm:$0xff]
    %v3765 = vld [vmem:[#allocation11 + $0xbbc] sm:$0xff]
    %v3766 = vld [vmem:[#allocation11 + $0xbc4] sm:$0xff]
    %v3767 = vld [vmem:[#allocation11 + $0xbcc] sm:$0xf]
    %v3768 = vld [vmem:[#allocation11 + $0xbd0] sm:$0xff]
    %v3769 = vld [vmem:[#allocation11 + $0xbd8] sm:$0xff]
    %v3770 = vld [vmem:[#allocation11 + $0xbe0] sm:$0xff]
    %v3771 = vld [vmem:[#allocation11 + $0xbe8] sm:$0xf]
    %v3772 = vld [vmem:[#allocation11 + $0xbec] sm:$0xff]
    %v3773 = vld [vmem:[#allocation11 + $0xbf4] sm:$0xff]
    %v3774 = vld [vmem:[#allocation11 + $0xbfc] sm:$0xff]
    %v3775 = vld [vmem:[#allocation11 + $0xc04] sm:$0xf]
    %v3776 = vld [vmem:[#allocation11 + $0xc08] sm:$0xff]
    %v3777 = vld [vmem:[#allocation11 + $0xc10] sm:$0xff]
    %v3778 = vld [vmem:[#allocation11 + $0xc18] sm:$0xff]
    %v3779 = vld [vmem:[#allocation11 + $0xc20] sm:$0xf]
    %v3780 = vld [vmem:[#allocation11 + $0xc24] sm:$0xff]
    %v3781 = vld [vmem:[#allocation11 + $0xc2c] sm:$0xff]
    %v3782 = vld [vmem:[#allocation11 + $0xc34] sm:$0xff]
    %v3783 = vld [vmem:[#allocation11 + $0xc3c] sm:$0xf]
    %v3784 = vld [vmem:[#allocation11 + $0xc40] sm:$0xff]
    %v3785 = vld [vmem:[#allocation11 + $0xc48] sm:$0xff]
    %v3786 = vld [vmem:[#allocation11 + $0xc50] sm:$0xff]
    %v3787 = vld [vmem:[#allocation11 + $0xc58] sm:$0xf]
    %v3788 = vld [vmem:[#allocation11 + $0xc5c] sm:$0xff]
    %v3789 = vld [vmem:[#allocation11 + $0xc64] sm:$0xff]
    %v3790 = vld [vmem:[#allocation11 + $0xc6c] sm:$0xff]
    %v3791 = vld [vmem:[#allocation11 + $0xc74] sm:$0xf]
    %v3792 = vld [vmem:[#allocation11 + $0xc78] sm:$0xff]
    %v3793 = vld [vmem:[#allocation11 + $0xc80] sm:$0xff]
    %v3794 = vld [vmem:[#allocation11 + $0xc88] sm:$0xff]
    %v3795 = vld [vmem:[#allocation11 + $0xc90] sm:$0xf]
    %v3796 = vld [vmem:[#allocation11 + $0xc94] sm:$0xff]
    %v3797 = vld [vmem:[#allocation11 + $0xc9c] sm:$0xff]
    %v3798 = vld [vmem:[#allocation11 + $0xca4] sm:$0xff]
    %v3799 = vld [vmem:[#allocation11 + $0xcac] sm:$0xf]
    %v3800 = vld [vmem:[#allocation11 + $0xcb0] sm:$0xff]
    %v3801 = vld [vmem:[#allocation11 + $0xcb8] sm:$0xff]
    %v3802 = vld [vmem:[#allocation11 + $0xcc0] sm:$0xff]
    %v3803 = vld [vmem:[#allocation11 + $0xcc8] sm:$0xf]
    %v3804 = vld [vmem:[#allocation11 + $0xccc] sm:$0xff]
    %v3805 = vld [vmem:[#allocation11 + $0xcd4] sm:$0xff]
    %v3806 = vld [vmem:[#allocation11 + $0xcdc] sm:$0xff]
    %v3807 = vld [vmem:[#allocation11 + $0xce4] sm:$0xf]
    %v3808 = vld [vmem:[#allocation11 + $0xce8] sm:$0xff]
    %v3809 = vld [vmem:[#allocation11 + $0xcf0] sm:$0xff]
    %v3810 = vld [vmem:[#allocation11 + $0xcf8] sm:$0xff]
    %v3811 = vld [vmem:[#allocation11 + $0xd00] sm:$0xf]
    %v3812 = vld [vmem:[#allocation11 + $0xd04] sm:$0xff]
    %v3813 = vld [vmem:[#allocation11 + $0xd0c] sm:$0xff]
    %v3814 = vld [vmem:[#allocation11 + $0xd14] sm:$0xff]
    %v3815 = vld [vmem:[#allocation11 + $0xd1c] sm:$0xf]
    %v3816 = vld [vmem:[#allocation11 + $0xd20] sm:$0xff]
    %v3817 = vld [vmem:[#allocation11 + $0xd28] sm:$0xff]
    %v3818 = vld [vmem:[#allocation11 + $0xd30] sm:$0xff]
    %v3819 = vld [vmem:[#allocation11 + $0xd38] sm:$0xf]
    %v3820 = vld [vmem:[#allocation11 + $0xd3c] sm:$0xff]
    %v3821 = vld [vmem:[#allocation11 + $0xd44] sm:$0xff]
    %v3822 = vld [vmem:[#allocation11 + $0xd4c] sm:$0xff]
    %v3823 = vld [vmem:[#allocation11 + $0xd54] sm:$0xf]
    %v3824 = vld [vmem:[#allocation11 + $0xd58] sm:$0xff]
    %v3825 = vld [vmem:[#allocation11 + $0xd60] sm:$0xff]
    %v3826 = vld [vmem:[#allocation11 + $0xd68] sm:$0xff]
    %v3827 = vld [vmem:[#allocation11 + $0xd70] sm:$0xf]
    %v3828 = vld [vmem:[#allocation11 + $0xd74] sm:$0xff]
    %v3829 = vld [vmem:[#allocation11 + $0xd7c] sm:$0xff]
    %v3830 = vld [vmem:[#allocation11 + $0xd84] sm:$0xff]
    %v3831 = vld [vmem:[#allocation11 + $0xd8c] sm:$0xf]
    %v3832 = vld [vmem:[#allocation11 + $0xd90] sm:$0xff]
    %v3833 = vld [vmem:[#allocation11 + $0xd98] sm:$0xff]
    %v3834 = vld [vmem:[#allocation11 + $0xda0] sm:$0xff]
    %v3835 = vld [vmem:[#allocation11 + $0xda8] sm:$0xf]
    %v3836 = vld [vmem:[#allocation11 + $0xdac] sm:$0xff]
    %v3837 = vld [vmem:[#allocation11 + $0xdb4] sm:$0xff]
    %v3838 = vld [vmem:[#allocation11 + $0xdbc] sm:$0xff]
    %v3839 = vld [vmem:[#allocation11 + $0xdc4] sm:$0xf]
    %v3840 = vld [vmem:[#allocation11 + $0xdc8] sm:$0xff]
    %v3841 = vld [vmem:[#allocation11 + $0xdd0] sm:$0xff]
    %v3842 = vld [vmem:[#allocation11 + $0xdd8] sm:$0xff]
    %v3843 = vld [vmem:[#allocation11 + $0xde0] sm:$0xf]
    %v3844 = vld [vmem:[#allocation11 + $0xde4] sm:$0xff]
    %v3845 = vld [vmem:[#allocation11 + $0xdec] sm:$0xff]
    %v3846 = vld [vmem:[#allocation11 + $0xdf4] sm:$0xff]
    %v3847 = vld [vmem:[#allocation11 + $0xdfc] sm:$0xf]
    %v3849 = vperm.slane %v153, 0
    %v3850 = vperm.slane %v153, 1
    %v3851 = vperm.slane %v153, 2
    %v3852 = vperm.slane %v153, 3
    %v3853 = vperm.slane %v153, 4
    %v3854 = vperm.slane %v153, 5
    %v3855 = vperm.slane %v153, 6
    %v4375 = vunpack.c.l.b16 %v3336
    %v4376 = vunpack.c.h.b16 %v3336
    %v4377 = vunpack.c.l.b16 %v3337
    %v4378 = vunpack.c.h.b16 %v3337
    %v4379 = vunpack.c.l.b16 %v3338
    %v4380 = vunpack.c.h.b16 %v3338
    %v4381 = vunpack.c.l.b16 %v3339
    %v4382 = vunpack.c.l.b16 %v3340
    %v4383 = vunpack.c.h.b16 %v3340
    %v4384 = vunpack.c.l.b16 %v3341
    %v4385 = vunpack.c.h.b16 %v3341
    %v4386 = vunpack.c.l.b16 %v3342
    %v4387 = vunpack.c.h.b16 %v3342
    %v4388 = vunpack.c.l.b16 %v3343
    %v4389 = vunpack.c.l.b16 %v3344
    %v4390 = vunpack.c.h.b16 %v3344
    %v4391 = vunpack.c.l.b16 %v3345
    %v4392 = vunpack.c.h.b16 %v3345
    %v4393 = vunpack.c.l.b16 %v3346
    %v4394 = vunpack.c.h.b16 %v3346
    %v4395 = vunpack.c.l.b16 %v3347
    %v4396 = vunpack.c.l.b16 %v3348
    %v4397 = vunpack.c.h.b16 %v3348
    %v4398 = vunpack.c.l.b16 %v3349
    %v4399 = vunpack.c.h.b16 %v3349
    %v4400 = vunpack.c.l.b16 %v3350
    %v4401 = vunpack.c.h.b16 %v3350
    %v4402 = vunpack.c.l.b16 %v3351
    %v4403 = vunpack.c.l.b16 %v3352
    %v4404 = vunpack.c.h.b16 %v3352
    %v4405 = vunpack.c.l.b16 %v3353
    %v4406 = vunpack.c.h.b16 %v3353
    %v4407 = vunpack.c.l.b16 %v3354
    %v4408 = vunpack.c.h.b16 %v3354
    %v4409 = vunpack.c.l.b16 %v3355
    %v4410 = vunpack.c.l.b16 %v3356
    %v4411 = vunpack.c.h.b16 %v3356
    %v4412 = vunpack.c.l.b16 %v3357
    %v4413 = vunpack.c.h.b16 %v3357
    %v4414 = vunpack.c.l.b16 %v3358
    %v4415 = vunpack.c.h.b16 %v3358
    %v4416 = vunpack.c.l.b16 %v3359
    %v4417 = vunpack.c.l.b16 %v3360
    %v4418 = vunpack.c.h.b16 %v3360
    %v4419 = vunpack.c.l.b16 %v3361
    %v4420 = vunpack.c.h.b16 %v3361
    %v4421 = vunpack.c.l.b16 %v3362
    %v4422 = vunpack.c.h.b16 %v3362
    %v4423 = vunpack.c.l.b16 %v3363
    %v4424 = vunpack.c.l.b16 %v3364
    %v4425 = vunpack.c.h.b16 %v3364
    %v4426 = vunpack.c.l.b16 %v3365
    %v4427 = vunpack.c.h.b16 %v3365
    %v4428 = vunpack.c.l.b16 %v3366
    %v4429 = vunpack.c.h.b16 %v3366
    %v4430 = vunpack.c.l.b16 %v3367
    %v4431 = vunpack.c.l.b16 %v3368
    %v4432 = vunpack.c.h.b16 %v3368
    %v4433 = vunpack.c.l.b16 %v3369
    %v4434 = vunpack.c.h.b16 %v3369
    %v4435 = vunpack.c.l.b16 %v3370
    %v4436 = vunpack.c.h.b16 %v3370
    %v4437 = vunpack.c.l.b16 %v3371
    %v4438 = vunpack.c.l.b16 %v3372
    %v4439 = vunpack.c.h.b16 %v3372
    %v4440 = vunpack.c.l.b16 %v3373
    %v4441 = vunpack.c.h.b16 %v3373
    %v4442 = vunpack.c.l.b16 %v3374
    %v4443 = vunpack.c.h.b16 %v3374
    %v4444 = vunpack.c.l.b16 %v3375
    %v4445 = vunpack.c.l.b16 %v3376
    %v4446 = vunpack.c.h.b16 %v3376
    %v4447 = vunpack.c.l.b16 %v3377
    %v4448 = vunpack.c.h.b16 %v3377
    %v4449 = vunpack.c.l.b16 %v3378
    %v4450 = vunpack.c.h.b16 %v3378
    %v4451 = vunpack.c.l.b16 %v3379
    %v4452 = vunpack.c.l.b16 %v3380
    %v4453 = vunpack.c.h.b16 %v3380
    %v4454 = vunpack.c.l.b16 %v3381
    %v4455 = vunpack.c.h.b16 %v3381
    %v4456 = vunpack.c.l.b16 %v3382
    %v4457 = vunpack.c.h.b16 %v3382
    %v4458 = vunpack.c.l.b16 %v3383
    %v4459 = vunpack.c.l.b16 %v3384
    %v4460 = vunpack.c.h.b16 %v3384
    %v4461 = vunpack.c.l.b16 %v3385
    %v4462 = vunpack.c.h.b16 %v3385
    %v4463 = vunpack.c.l.b16 %v3386
    %v4464 = vunpack.c.h.b16 %v3386
    %v4465 = vunpack.c.l.b16 %v3387
    %v4466 = vunpack.c.l.b16 %v3388
    %v4467 = vunpack.c.h.b16 %v3388
    %v4468 = vunpack.c.l.b16 %v3389
    %v4469 = vunpack.c.h.b16 %v3389
    %v4470 = vunpack.c.l.b16 %v3390
    %v4471 = vunpack.c.h.b16 %v3390
    %v4472 = vunpack.c.l.b16 %v3391
    %v4473 = vunpack.c.l.b16 %v3392
    %v4474 = vunpack.c.h.b16 %v3392
    %v4475 = vunpack.c.l.b16 %v3393
    %v4476 = vunpack.c.h.b16 %v3393
    %v4477 = vunpack.c.l.b16 %v3394
    %v4478 = vunpack.c.h.b16 %v3394
    %v4479 = vunpack.c.l.b16 %v3395
    %v4480 = vunpack.c.l.b16 %v3396
    %v4481 = vunpack.c.h.b16 %v3396
    %v4482 = vunpack.c.l.b16 %v3397
    %v4483 = vunpack.c.h.b16 %v3397
    %v4484 = vunpack.c.l.b16 %v3398
    %v4485 = vunpack.c.h.b16 %v3398
    %v4486 = vunpack.c.l.b16 %v3399
    %v4487 = vunpack.c.l.b16 %v3400
    %v4488 = vunpack.c.h.b16 %v3400
    %v4489 = vunpack.c.l.b16 %v3401
    %v4490 = vunpack.c.h.b16 %v3401
    %v4491 = vunpack.c.l.b16 %v3402
    %v4492 = vunpack.c.h.b16 %v3402
    %v4493 = vunpack.c.l.b16 %v3403
    %v4494 = vunpack.c.l.b16 %v3404
    %v4495 = vunpack.c.h.b16 %v3404
    %v4496 = vunpack.c.l.b16 %v3405
    %v4497 = vunpack.c.h.b16 %v3405
    %v4498 = vunpack.c.l.b16 %v3406
    %v4499 = vunpack.c.h.b16 %v3406
    %v4500 = vunpack.c.l.b16 %v3407
    %v4501 = vunpack.c.l.b16 %v3408
    %v4502 = vunpack.c.h.b16 %v3408
    %v4503 = vunpack.c.l.b16 %v3409
    %v4504 = vunpack.c.h.b16 %v3409
    %v4505 = vunpack.c.l.b16 %v3410
    %v4506 = vunpack.c.h.b16 %v3410
    %v4507 = vunpack.c.l.b16 %v3411
    %v4508 = vunpack.c.l.b16 %v3412
    %v4509 = vunpack.c.h.b16 %v3412
    %v4510 = vunpack.c.l.b16 %v3413
    %v4511 = vunpack.c.h.b16 %v3413
    %v4512 = vunpack.c.l.b16 %v3414
    %v4513 = vunpack.c.h.b16 %v3414
    %v4514 = vunpack.c.l.b16 %v3415
    %v4515 = vunpack.c.l.b16 %v3416
    %v4516 = vunpack.c.h.b16 %v3416
    %v4517 = vunpack.c.l.b16 %v3417
    %v4518 = vunpack.c.h.b16 %v3417
    %v4519 = vunpack.c.l.b16 %v3418
    %v4520 = vunpack.c.h.b16 %v3418
    %v4521 = vunpack.c.l.b16 %v3419
    %v4522 = vunpack.c.l.b16 %v3420
    %v4523 = vunpack.c.h.b16 %v3420
    %v4524 = vunpack.c.l.b16 %v3421
    %v4525 = vunpack.c.h.b16 %v3421
    %v4526 = vunpack.c.l.b16 %v3422
    %v4527 = vunpack.c.h.b16 %v3422
    %v4528 = vunpack.c.l.b16 %v3423
    %v4529 = vunpack.c.l.b16 %v3424
    %v4530 = vunpack.c.h.b16 %v3424
    %v4531 = vunpack.c.l.b16 %v3425
    %v4532 = vunpack.c.h.b16 %v3425
    %v4533 = vunpack.c.l.b16 %v3426
    %v4534 = vunpack.c.h.b16 %v3426
    %v4535 = vunpack.c.l.b16 %v3427
    %v4536 = vunpack.c.l.b16 %v3428
    %v4537 = vunpack.c.h.b16 %v3428
    %v4538 = vunpack.c.l.b16 %v3429
    %v4539 = vunpack.c.h.b16 %v3429
    %v4540 = vunpack.c.l.b16 %v3430
    %v4541 = vunpack.c.h.b16 %v3430
    %v4542 = vunpack.c.l.b16 %v3431
    %v4543 = vunpack.c.l.b16 %v3432
    %v4544 = vunpack.c.h.b16 %v3432
    %v4545 = vunpack.c.l.b16 %v3433
    %v4546 = vunpack.c.h.b16 %v3433
    %v4547 = vunpack.c.l.b16 %v3434
    %v4548 = vunpack.c.h.b16 %v3434
    %v4549 = vunpack.c.l.b16 %v3435
    %v4550 = vunpack.c.l.b16 %v3436
    %v4551 = vunpack.c.h.b16 %v3436
    %v4552 = vunpack.c.l.b16 %v3437
    %v4553 = vunpack.c.h.b16 %v3437
    %v4554 = vunpack.c.l.b16 %v3438
    %v4555 = vunpack.c.h.b16 %v3438
    %v4556 = vunpack.c.l.b16 %v3439
    %v4557 = vunpack.c.l.b16 %v3440
    %v4558 = vunpack.c.h.b16 %v3440
    %v4559 = vunpack.c.l.b16 %v3441
    %v4560 = vunpack.c.h.b16 %v3441
    %v4561 = vunpack.c.l.b16 %v3442
    %v4562 = vunpack.c.h.b16 %v3442
    %v4563 = vunpack.c.l.b16 %v3443
    %v4564 = vunpack.c.l.b16 %v3444
    %v4565 = vunpack.c.h.b16 %v3444
    %v4566 = vunpack.c.l.b16 %v3445
    %v4567 = vunpack.c.h.b16 %v3445
    %v4568 = vunpack.c.l.b16 %v3446
    %v4569 = vunpack.c.h.b16 %v3446
    %v4570 = vunpack.c.l.b16 %v3447
    %v4571 = vunpack.c.l.b16 %v3448
    %v4572 = vunpack.c.h.b16 %v3448
    %v4573 = vunpack.c.l.b16 %v3449
    %v4574 = vunpack.c.h.b16 %v3449
    %v4575 = vunpack.c.l.b16 %v3450
    %v4576 = vunpack.c.h.b16 %v3450
    %v4577 = vunpack.c.l.b16 %v3451
    %v4578 = vunpack.c.l.b16 %v3452
    %v4579 = vunpack.c.h.b16 %v3452
    %v4580 = vunpack.c.l.b16 %v3453
    %v4581 = vunpack.c.h.b16 %v3453
    %v4582 = vunpack.c.l.b16 %v3454
    %v4583 = vunpack.c.h.b16 %v3454
    %v4584 = vunpack.c.l.b16 %v3455
    %v4585 = vunpack.c.l.b16 %v3456
    %v4586 = vunpack.c.h.b16 %v3456
    %v4587 = vunpack.c.l.b16 %v3457
    %v4588 = vunpack.c.h.b16 %v3457
    %v4589 = vunpack.c.l.b16 %v3458
    %v4590 = vunpack.c.h.b16 %v3458
    %v4591 = vunpack.c.l.b16 %v3459
    %v4592 = vunpack.c.l.b16 %v3460
    %v4593 = vunpack.c.h.b16 %v3460
    %v4594 = vunpack.c.l.b16 %v3461
    %v4595 = vunpack.c.h.b16 %v3461
    %v4596 = vunpack.c.l.b16 %v3462
    %v4597 = vunpack.c.h.b16 %v3462
    %v4598 = vunpack.c.l.b16 %v3463
    %v4599 = vunpack.c.l.b16 %v3464
    %v4600 = vunpack.c.h.b16 %v3464
    %v4601 = vunpack.c.l.b16 %v3465
    %v4602 = vunpack.c.h.b16 %v3465
    %v4603 = vunpack.c.l.b16 %v3466
    %v4604 = vunpack.c.h.b16 %v3466
    %v4605 = vunpack.c.l.b16 %v3467
    %v4606 = vunpack.c.l.b16 %v3468
    %v4607 = vunpack.c.h.b16 %v3468
    %v4608 = vunpack.c.l.b16 %v3469
    %v4609 = vunpack.c.h.b16 %v3469
    %v4610 = vunpack.c.l.b16 %v3470
    %v4611 = vunpack.c.h.b16 %v3470
    %v4612 = vunpack.c.l.b16 %v3471
    %v4613 = vunpack.c.l.b16 %v3472
    %v4614 = vunpack.c.h.b16 %v3472
    %v4615 = vunpack.c.l.b16 %v3473
    %v4616 = vunpack.c.h.b16 %v3473
    %v4617 = vunpack.c.l.b16 %v3474
    %v4618 = vunpack.c.h.b16 %v3474
    %v4619 = vunpack.c.l.b16 %v3475
    %v4620 = vunpack.c.l.b16 %v3476
    %v4621 = vunpack.c.h.b16 %v3476
    %v4622 = vunpack.c.l.b16 %v3477
    %v4623 = vunpack.c.h.b16 %v3477
    %v4624 = vunpack.c.l.b16 %v3478
    %v4625 = vunpack.c.h.b16 %v3478
    %v4626 = vunpack.c.l.b16 %v3479
    %v4627 = vunpack.c.l.b16 %v3480
    %v4628 = vunpack.c.h.b16 %v3480
    %v4629 = vunpack.c.l.b16 %v3481
    %v4630 = vunpack.c.h.b16 %v3481
    %v4631 = vunpack.c.l.b16 %v3482
    %v4632 = vunpack.c.h.b16 %v3482
    %v4633 = vunpack.c.l.b16 %v3483
    %v4634 = vunpack.c.l.b16 %v3484
    %v4635 = vunpack.c.h.b16 %v3484
    %v4636 = vunpack.c.l.b16 %v3485
    %v4637 = vunpack.c.h.b16 %v3485
    %v4638 = vunpack.c.l.b16 %v3486
    %v4639 = vunpack.c.h.b16 %v3486
    %v4640 = vunpack.c.l.b16 %v3487
    %v4641 = vunpack.c.l.b16 %v3488
    %v4642 = vunpack.c.h.b16 %v3488
    %v4643 = vunpack.c.l.b16 %v3489
    %v4644 = vunpack.c.h.b16 %v3489
    %v4645 = vunpack.c.l.b16 %v3490
    %v4646 = vunpack.c.h.b16 %v3490
    %v4647 = vunpack.c.l.b16 %v3491
    %v4648 = vunpack.c.l.b16 %v3492
    %v4649 = vunpack.c.h.b16 %v3492
    %v4650 = vunpack.c.l.b16 %v3493
    %v4651 = vunpack.c.h.b16 %v3493
    %v4652 = vunpack.c.l.b16 %v3494
    %v4653 = vunpack.c.h.b16 %v3494
    %v4654 = vunpack.c.l.b16 %v3495
    %v4655 = vunpack.c.l.b16 %v3496
    %v4656 = vunpack.c.h.b16 %v3496
    %v4657 = vunpack.c.l.b16 %v3497
    %v4658 = vunpack.c.h.b16 %v3497
    %v4659 = vunpack.c.l.b16 %v3498
    %v4660 = vunpack.c.h.b16 %v3498
    %v4661 = vunpack.c.l.b16 %v3499
    %v4662 = vunpack.c.l.b16 %v3500
    %v4663 = vunpack.c.h.b16 %v3500
    %v4664 = vunpack.c.l.b16 %v3501
    %v4665 = vunpack.c.h.b16 %v3501
    %v4666 = vunpack.c.l.b16 %v3502
    %v4667 = vunpack.c.h.b16 %v3502
    %v4668 = vunpack.c.l.b16 %v3503
    %v4669 = vunpack.c.l.b16 %v3504
    %v4670 = vunpack.c.h.b16 %v3504
    %v4671 = vunpack.c.l.b16 %v3505
    %v4672 = vunpack.c.h.b16 %v3505
    %v4673 = vunpack.c.l.b16 %v3506
    %v4674 = vunpack.c.h.b16 %v3506
    %v4675 = vunpack.c.l.b16 %v3507
    %v4676 = vunpack.c.l.b16 %v3508
    %v4677 = vunpack.c.h.b16 %v3508
    %v4678 = vunpack.c.l.b16 %v3509
    %v4679 = vunpack.c.h.b16 %v3509
    %v4680 = vunpack.c.l.b16 %v3510
    %v4681 = vunpack.c.h.b16 %v3510
    %v4682 = vunpack.c.l.b16 %v3511
    %v4683 = vunpack.c.l.b16 %v3512
    %v4684 = vunpack.c.h.b16 %v3512
    %v4685 = vunpack.c.l.b16 %v3513
    %v4686 = vunpack.c.h.b16 %v3513
    %v4687 = vunpack.c.l.b16 %v3514
    %v4688 = vunpack.c.h.b16 %v3514
    %v4689 = vunpack.c.l.b16 %v3515
    %v4690 = vunpack.c.l.b16 %v3516
    %v4691 = vunpack.c.h.b16 %v3516
    %v4692 = vunpack.c.l.b16 %v3517
    %v4693 = vunpack.c.h.b16 %v3517
    %v4694 = vunpack.c.l.b16 %v3518
    %v4695 = vunpack.c.h.b16 %v3518
    %v4696 = vunpack.c.l.b16 %v3519
    %v4697 = vunpack.c.l.b16 %v3520
    %v4698 = vunpack.c.h.b16 %v3520
    %v4699 = vunpack.c.l.b16 %v3521
    %v4700 = vunpack.c.h.b16 %v3521
    %v4701 = vunpack.c.l.b16 %v3522
    %v4702 = vunpack.c.h.b16 %v3522
    %v4703 = vunpack.c.l.b16 %v3523
    %v4704 = vunpack.c.l.b16 %v3524
    %v4705 = vunpack.c.h.b16 %v3524
    %v4706 = vunpack.c.l.b16 %v3525
    %v4707 = vunpack.c.h.b16 %v3525
    %v4708 = vunpack.c.l.b16 %v3526
    %v4709 = vunpack.c.h.b16 %v3526
    %v4710 = vunpack.c.l.b16 %v3527
    %v4711 = vunpack.c.l.b16 %v3528
    %v4712 = vunpack.c.h.b16 %v3528
    %v4713 = vunpack.c.l.b16 %v3529
    %v4714 = vunpack.c.h.b16 %v3529
    %v4715 = vunpack.c.l.b16 %v3530
    %v4716 = vunpack.c.h.b16 %v3530
    %v4717 = vunpack.c.l.b16 %v3531
    %v4718 = vunpack.c.l.b16 %v3532
    %v4719 = vunpack.c.h.b16 %v3532
    %v4720 = vunpack.c.l.b16 %v3533
    %v4721 = vunpack.c.h.b16 %v3533
    %v4722 = vunpack.c.l.b16 %v3534
    %v4723 = vunpack.c.h.b16 %v3534
    %v4724 = vunpack.c.l.b16 %v3535
    %v4725 = vunpack.c.l.b16 %v3536
    %v4726 = vunpack.c.h.b16 %v3536
    %v4727 = vunpack.c.l.b16 %v3537
    %v4728 = vunpack.c.h.b16 %v3537
    %v4729 = vunpack.c.l.b16 %v3538
    %v4730 = vunpack.c.h.b16 %v3538
    %v4731 = vunpack.c.l.b16 %v3539
    %v4732 = vunpack.c.l.b16 %v3540
    %v4733 = vunpack.c.h.b16 %v3540
    %v4734 = vunpack.c.l.b16 %v3541
    %v4735 = vunpack.c.h.b16 %v3541
    %v4736 = vunpack.c.l.b16 %v3542
    %v4737 = vunpack.c.h.b16 %v3542
    %v4738 = vunpack.c.l.b16 %v3543
    %v4739 = vunpack.c.l.b16 %v3544
    %v4740 = vunpack.c.h.b16 %v3544
    %v4741 = vunpack.c.l.b16 %v3545
    %v4742 = vunpack.c.h.b16 %v3545
    %v4743 = vunpack.c.l.b16 %v3546
    %v4744 = vunpack.c.h.b16 %v3546
    %v4745 = vunpack.c.l.b16 %v3547
    %v4746 = vunpack.c.l.b16 %v3548
    %v4747 = vunpack.c.h.b16 %v3548
    %v4748 = vunpack.c.l.b16 %v3549
    %v4749 = vunpack.c.h.b16 %v3549
    %v4750 = vunpack.c.l.b16 %v3550
    %v4751 = vunpack.c.h.b16 %v3550
    %v4752 = vunpack.c.l.b16 %v3551
    %v4753 = vunpack.c.l.b16 %v3552
    %v4754 = vunpack.c.h.b16 %v3552
    %v4755 = vunpack.c.l.b16 %v3553
    %v4756 = vunpack.c.h.b16 %v3553
    %v4757 = vunpack.c.l.b16 %v3554
    %v4758 = vunpack.c.h.b16 %v3554
    %v4759 = vunpack.c.l.b16 %v3555
    %v4760 = vunpack.c.l.b16 %v3556
    %v4761 = vunpack.c.h.b16 %v3556
    %v4762 = vunpack.c.l.b16 %v3557
    %v4763 = vunpack.c.h.b16 %v3557
    %v4764 = vunpack.c.l.b16 %v3558
    %v4765 = vunpack.c.h.b16 %v3558
    %v4766 = vunpack.c.l.b16 %v3559
    %v4767 = vunpack.c.l.b16 %v3560
    %v4768 = vunpack.c.h.b16 %v3560
    %v4769 = vunpack.c.l.b16 %v3561
    %v4770 = vunpack.c.h.b16 %v3561
    %v4771 = vunpack.c.l.b16 %v3562
    %v4772 = vunpack.c.h.b16 %v3562
    %v4773 = vunpack.c.l.b16 %v3563
    %v4774 = vunpack.c.l.b16 %v3564
    %v4775 = vunpack.c.h.b16 %v3564
    %v4776 = vunpack.c.l.b16 %v3565
    %v4777 = vunpack.c.h.b16 %v3565
    %v4778 = vunpack.c.l.b16 %v3566
    %v4779 = vunpack.c.h.b16 %v3566
    %v4780 = vunpack.c.l.b16 %v3567
    %v4781 = vunpack.c.l.b16 %v3568
    %v4782 = vunpack.c.h.b16 %v3568
    %v4783 = vunpack.c.l.b16 %v3569
    %v4784 = vunpack.c.h.b16 %v3569
    %v4785 = vunpack.c.l.b16 %v3570
    %v4786 = vunpack.c.h.b16 %v3570
    %v4787 = vunpack.c.l.b16 %v3571
    %v4788 = vunpack.c.l.b16 %v3572
    %v4789 = vunpack.c.h.b16 %v3572
    %v4790 = vunpack.c.l.b16 %v3573
    %v4791 = vunpack.c.h.b16 %v3573
    %v4792 = vunpack.c.l.b16 %v3574
    %v4793 = vunpack.c.h.b16 %v3574
    %v4794 = vunpack.c.l.b16 %v3575
    %v4795 = vunpack.c.l.b16 %v3576
    %v4796 = vunpack.c.h.b16 %v3576
    %v4797 = vunpack.c.l.b16 %v3577
    %v4798 = vunpack.c.h.b16 %v3577
    %v4799 = vunpack.c.l.b16 %v3578
    %v4800 = vunpack.c.h.b16 %v3578
    %v4801 = vunpack.c.l.b16 %v3579
    %v4802 = vunpack.c.l.b16 %v3580
    %v4803 = vunpack.c.h.b16 %v3580
    %v4804 = vunpack.c.l.b16 %v3581
    %v4805 = vunpack.c.h.b16 %v3581
    %v4806 = vunpack.c.l.b16 %v3582
    %v4807 = vunpack.c.h.b16 %v3582
    %v4808 = vunpack.c.l.b16 %v3583
    %v4809 = vunpack.c.l.b16 %v3584
    %v4810 = vunpack.c.h.b16 %v3584
    %v4811 = vunpack.c.l.b16 %v3585
    %v4812 = vunpack.c.h.b16 %v3585
    %v4813 = vunpack.c.l.b16 %v3586
    %v4814 = vunpack.c.h.b16 %v3586
    %v4815 = vunpack.c.l.b16 %v3587
    %v4816 = vunpack.c.l.b16 %v3588
    %v4817 = vunpack.c.h.b16 %v3588
    %v4818 = vunpack.c.l.b16 %v3589
    %v4819 = vunpack.c.h.b16 %v3589
    %v4820 = vunpack.c.l.b16 %v3590
    %v4821 = vunpack.c.h.b16 %v3590
    %v4822 = vunpack.c.l.b16 %v3591
    %v4823 = vunpack.c.l.b16 %v3592
    %v4824 = vunpack.c.h.b16 %v3592
    %v4825 = vunpack.c.l.b16 %v3593
    %v4826 = vunpack.c.h.b16 %v3593
    %v4827 = vunpack.c.l.b16 %v3594
    %v4828 = vunpack.c.h.b16 %v3594
    %v4829 = vunpack.c.l.b16 %v3595
    %v4830 = vunpack.c.l.b16 %v3596
    %v4831 = vunpack.c.h.b16 %v3596
    %v4832 = vunpack.c.l.b16 %v3597
    %v4833 = vunpack.c.h.b16 %v3597
    %v4834 = vunpack.c.l.b16 %v3598
    %v4835 = vunpack.c.h.b16 %v3598
    %v4836 = vunpack.c.l.b16 %v3599
    %v4837 = vunpack.c.l.b16 %v3600
    %v4838 = vunpack.c.h.b16 %v3600
    %v4839 = vunpack.c.l.b16 %v3601
    %v4840 = vunpack.c.h.b16 %v3601
    %v4841 = vunpack.c.l.b16 %v3602
    %v4842 = vunpack.c.h.b16 %v3602
    %v4843 = vunpack.c.l.b16 %v3603
    %v4844 = vunpack.c.l.b16 %v3604
    %v4845 = vunpack.c.h.b16 %v3604
    %v4846 = vunpack.c.l.b16 %v3605
    %v4847 = vunpack.c.h.b16 %v3605
    %v4848 = vunpack.c.l.b16 %v3606
    %v4849 = vunpack.c.h.b16 %v3606
    %v4850 = vunpack.c.l.b16 %v3607
    %v4851 = vunpack.c.l.b16 %v3608
    %v4852 = vunpack.c.h.b16 %v3608
    %v4853 = vunpack.c.l.b16 %v3609
    %v4854 = vunpack.c.h.b16 %v3609
    %v4855 = vunpack.c.l.b16 %v3610
    %v4856 = vunpack.c.h.b16 %v3610
    %v4857 = vunpack.c.l.b16 %v3611
    %v4858 = vunpack.c.l.b16 %v3612
    %v4859 = vunpack.c.h.b16 %v3612
    %v4860 = vunpack.c.l.b16 %v3613
    %v4861 = vunpack.c.h.b16 %v3613
    %v4862 = vunpack.c.l.b16 %v3614
    %v4863 = vunpack.c.h.b16 %v3614
    %v4864 = vunpack.c.l.b16 %v3615
    %v4865 = vunpack.c.l.b16 %v3616
    %v4866 = vunpack.c.h.b16 %v3616
    %v4867 = vunpack.c.l.b16 %v3617
    %v4868 = vunpack.c.h.b16 %v3617
    %v4869 = vunpack.c.l.b16 %v3618
    %v4870 = vunpack.c.h.b16 %v3618
    %v4871 = vunpack.c.l.b16 %v3619
    %v4872 = vunpack.c.l.b16 %v3620
    %v4873 = vunpack.c.h.b16 %v3620
    %v4874 = vunpack.c.l.b16 %v3621
    %v4875 = vunpack.c.h.b16 %v3621
    %v4876 = vunpack.c.l.b16 %v3622
    %v4877 = vunpack.c.h.b16 %v3622
    %v4878 = vunpack.c.l.b16 %v3623
    %v4879 = vunpack.c.l.b16 %v3624
    %v4880 = vunpack.c.h.b16 %v3624
    %v4881 = vunpack.c.l.b16 %v3625
    %v4882 = vunpack.c.h.b16 %v3625
    %v4883 = vunpack.c.l.b16 %v3626
    %v4884 = vunpack.c.h.b16 %v3626
    %v4885 = vunpack.c.l.b16 %v3627
    %v4886 = vunpack.c.l.b16 %v3628
    %v4887 = vunpack.c.h.b16 %v3628
    %v4888 = vunpack.c.l.b16 %v3629
    %v4889 = vunpack.c.h.b16 %v3629
    %v4890 = vunpack.c.l.b16 %v3630
    %v4891 = vunpack.c.h.b16 %v3630
    %v4892 = vunpack.c.l.b16 %v3631
    %v4893 = vunpack.c.l.b16 %v3632
    %v4894 = vunpack.c.h.b16 %v3632
    %v4895 = vunpack.c.l.b16 %v3633
    %v4896 = vunpack.c.h.b16 %v3633
    %v4897 = vunpack.c.l.b16 %v3634
    %v4898 = vunpack.c.h.b16 %v3634
    %v4899 = vunpack.c.l.b16 %v3635
    %v4900 = vunpack.c.l.b16 %v3636
    %v4901 = vunpack.c.h.b16 %v3636
    %v4902 = vunpack.c.l.b16 %v3637
    %v4903 = vunpack.c.h.b16 %v3637
    %v4904 = vunpack.c.l.b16 %v3638
    %v4905 = vunpack.c.h.b16 %v3638
    %v4906 = vunpack.c.l.b16 %v3639
    %v4907 = vunpack.c.l.b16 %v3640
    %v4908 = vunpack.c.h.b16 %v3640
    %v4909 = vunpack.c.l.b16 %v3641
    %v4910 = vunpack.c.h.b16 %v3641
    %v4911 = vunpack.c.l.b16 %v3642
    %v4912 = vunpack.c.h.b16 %v3642
    %v4913 = vunpack.c.l.b16 %v3643
    %v4914 = vunpack.c.l.b16 %v3644
    %v4915 = vunpack.c.h.b16 %v3644
    %v4916 = vunpack.c.l.b16 %v3645
    %v4917 = vunpack.c.h.b16 %v3645
    %v4918 = vunpack.c.l.b16 %v3646
    %v4919 = vunpack.c.h.b16 %v3646
    %v4920 = vunpack.c.l.b16 %v3647
    %v4921 = vunpack.c.l.b16 %v3648
    %v4922 = vunpack.c.h.b16 %v3648
    %v4923 = vunpack.c.l.b16 %v3649
    %v4924 = vunpack.c.h.b16 %v3649
    %v4925 = vunpack.c.l.b16 %v3650
    %v4926 = vunpack.c.h.b16 %v3650
    %v4927 = vunpack.c.l.b16 %v3651
    %v4928 = vunpack.c.l.b16 %v3652
    %v4929 = vunpack.c.h.b16 %v3652
    %v4930 = vunpack.c.l.b16 %v3653
    %v4931 = vunpack.c.h.b16 %v3653
    %v4932 = vunpack.c.l.b16 %v3654
    %v4933 = vunpack.c.h.b16 %v3654
    %v4934 = vunpack.c.l.b16 %v3655
    %v4935 = vunpack.c.l.b16 %v3656
    %v4936 = vunpack.c.h.b16 %v3656
    %v4937 = vunpack.c.l.b16 %v3657
    %v4938 = vunpack.c.h.b16 %v3657
    %v4939 = vunpack.c.l.b16 %v3658
    %v4940 = vunpack.c.h.b16 %v3658
    %v4941 = vunpack.c.l.b16 %v3659
    %v4942 = vunpack.c.l.b16 %v3660
    %v4943 = vunpack.c.h.b16 %v3660
    %v4944 = vunpack.c.l.b16 %v3661
    %v4945 = vunpack.c.h.b16 %v3661
    %v4946 = vunpack.c.l.b16 %v3662
    %v4947 = vunpack.c.h.b16 %v3662
    %v4948 = vunpack.c.l.b16 %v3663
    %v4949 = vunpack.c.l.b16 %v3664
    %v4950 = vunpack.c.h.b16 %v3664
    %v4951 = vunpack.c.l.b16 %v3665
    %v4952 = vunpack.c.h.b16 %v3665
    %v4953 = vunpack.c.l.b16 %v3666
    %v4954 = vunpack.c.h.b16 %v3666
    %v4955 = vunpack.c.l.b16 %v3667
    %v4956 = vunpack.c.l.b16 %v3668
    %v4957 = vunpack.c.h.b16 %v3668
    %v4958 = vunpack.c.l.b16 %v3669
    %v4959 = vunpack.c.h.b16 %v3669
    %v4960 = vunpack.c.l.b16 %v3670
    %v4961 = vunpack.c.h.b16 %v3670
    %v4962 = vunpack.c.l.b16 %v3671
    %v4963 = vunpack.c.l.b16 %v3672
    %v4964 = vunpack.c.h.b16 %v3672
    %v4965 = vunpack.c.l.b16 %v3673
    %v4966 = vunpack.c.h.b16 %v3673
    %v4967 = vunpack.c.l.b16 %v3674
    %v4968 = vunpack.c.h.b16 %v3674
    %v4969 = vunpack.c.l.b16 %v3675
    %v4970 = vunpack.c.l.b16 %v3676
    %v4971 = vunpack.c.h.b16 %v3676
    %v4972 = vunpack.c.l.b16 %v3677
    %v4973 = vunpack.c.h.b16 %v3677
    %v4974 = vunpack.c.l.b16 %v3678
    %v4975 = vunpack.c.h.b16 %v3678
    %v4976 = vunpack.c.l.b16 %v3679
    %v4977 = vunpack.c.l.b16 %v3680
    %v4978 = vunpack.c.h.b16 %v3680
    %v4979 = vunpack.c.l.b16 %v3681
    %v4980 = vunpack.c.h.b16 %v3681
    %v4981 = vunpack.c.l.b16 %v3682
    %v4982 = vunpack.c.h.b16 %v3682
    %v4983 = vunpack.c.l.b16 %v3683
    %v4984 = vunpack.c.l.b16 %v3684
    %v4985 = vunpack.c.h.b16 %v3684
    %v4986 = vunpack.c.l.b16 %v3685
    %v4987 = vunpack.c.h.b16 %v3685
    %v4988 = vunpack.c.l.b16 %v3686
    %v4989 = vunpack.c.h.b16 %v3686
    %v4990 = vunpack.c.l.b16 %v3687
    %v4991 = vunpack.c.l.b16 %v3688
    %v4992 = vunpack.c.h.b16 %v3688
    %v4993 = vunpack.c.l.b16 %v3689
    %v4994 = vunpack.c.h.b16 %v3689
    %v4995 = vunpack.c.l.b16 %v3690
    %v4996 = vunpack.c.h.b16 %v3690
    %v4997 = vunpack.c.l.b16 %v3691
    %v4998 = vunpack.c.l.b16 %v3692
    %v4999 = vunpack.c.h.b16 %v3692
    %v5000 = vunpack.c.l.b16 %v3693
    %v5001 = vunpack.c.h.b16 %v3693
    %v5002 = vunpack.c.l.b16 %v3694
    %v5003 = vunpack.c.h.b16 %v3694
    %v5004 = vunpack.c.l.b16 %v3695
    %v5005 = vunpack.c.l.b16 %v3696
    %v5006 = vunpack.c.h.b16 %v3696
    %v5007 = vunpack.c.l.b16 %v3697
    %v5008 = vunpack.c.h.b16 %v3697
    %v5009 = vunpack.c.l.b16 %v3698
    %v5010 = vunpack.c.h.b16 %v3698
    %v5011 = vunpack.c.l.b16 %v3699
    %v5012 = vunpack.c.l.b16 %v3700
    %v5013 = vunpack.c.h.b16 %v3700
    %v5014 = vunpack.c.l.b16 %v3701
    %v5015 = vunpack.c.h.b16 %v3701
    %v5016 = vunpack.c.l.b16 %v3702
    %v5017 = vunpack.c.h.b16 %v3702
    %v5018 = vunpack.c.l.b16 %v3703
    %v5019 = vunpack.c.l.b16 %v3704
    %v5020 = vunpack.c.h.b16 %v3704
    %v5021 = vunpack.c.l.b16 %v3705
    %v5022 = vunpack.c.h.b16 %v3705
    %v5023 = vunpack.c.l.b16 %v3706
    %v5024 = vunpack.c.h.b16 %v3706
    %v5025 = vunpack.c.l.b16 %v3707
    %v5026 = vunpack.c.l.b16 %v3708
    %v5027 = vunpack.c.h.b16 %v3708
    %v5028 = vunpack.c.l.b16 %v3709
    %v5029 = vunpack.c.h.b16 %v3709
    %v5030 = vunpack.c.l.b16 %v3710
    %v5031 = vunpack.c.h.b16 %v3710
    %v5032 = vunpack.c.l.b16 %v3711
    %v5033 = vunpack.c.l.b16 %v3712
    %v5034 = vunpack.c.h.b16 %v3712
    %v5035 = vunpack.c.l.b16 %v3713
    %v5036 = vunpack.c.h.b16 %v3713
    %v5037 = vunpack.c.l.b16 %v3714
    %v5038 = vunpack.c.h.b16 %v3714
    %v5039 = vunpack.c.l.b16 %v3715
    %v5040 = vunpack.c.l.b16 %v3716
    %v5041 = vunpack.c.h.b16 %v3716
    %v5042 = vunpack.c.l.b16 %v3717
    %v5043 = vunpack.c.h.b16 %v3717
    %v5044 = vunpack.c.l.b16 %v3718
    %v5045 = vunpack.c.h.b16 %v3718
    %v5046 = vunpack.c.l.b16 %v3719
    %v5047 = vunpack.c.l.b16 %v3720
    %v5048 = vunpack.c.h.b16 %v3720
    %v5049 = vunpack.c.l.b16 %v3721
    %v5050 = vunpack.c.h.b16 %v3721
    %v5051 = vunpack.c.l.b16 %v3722
    %v5052 = vunpack.c.h.b16 %v3722
    %v5053 = vunpack.c.l.b16 %v3723
    %v5054 = vunpack.c.l.b16 %v3724
    %v5055 = vunpack.c.h.b16 %v3724
    %v5056 = vunpack.c.l.b16 %v3725
    %v5057 = vunpack.c.h.b16 %v3725
    %v5058 = vunpack.c.l.b16 %v3726
    %v5059 = vunpack.c.h.b16 %v3726
    %v5060 = vunpack.c.l.b16 %v3727
    %v5061 = vunpack.c.l.b16 %v3728
    %v5062 = vunpack.c.h.b16 %v3728
    %v5063 = vunpack.c.l.b16 %v3729
    %v5064 = vunpack.c.h.b16 %v3729
    %v5065 = vunpack.c.l.b16 %v3730
    %v5066 = vunpack.c.h.b16 %v3730
    %v5067 = vunpack.c.l.b16 %v3731
    %v5068 = vunpack.c.l.b16 %v3732
    %v5069 = vunpack.c.h.b16 %v3732
    %v5070 = vunpack.c.l.b16 %v3733
    %v5071 = vunpack.c.h.b16 %v3733
    %v5072 = vunpack.c.l.b16 %v3734
    %v5073 = vunpack.c.h.b16 %v3734
    %v5074 = vunpack.c.l.b16 %v3735
    %v5075 = vunpack.c.l.b16 %v3736
    %v5076 = vunpack.c.h.b16 %v3736
    %v5077 = vunpack.c.l.b16 %v3737
    %v5078 = vunpack.c.h.b16 %v3737
    %v5079 = vunpack.c.l.b16 %v3738
    %v5080 = vunpack.c.h.b16 %v3738
    %v5081 = vunpack.c.l.b16 %v3739
    %v5082 = vunpack.c.l.b16 %v3740
    %v5083 = vunpack.c.h.b16 %v3740
    %v5084 = vunpack.c.l.b16 %v3741
    %v5085 = vunpack.c.h.b16 %v3741
    %v5086 = vunpack.c.l.b16 %v3742
    %v5087 = vunpack.c.h.b16 %v3742
    %v5088 = vunpack.c.l.b16 %v3743
    %v5089 = vunpack.c.l.b16 %v3744
    %v5090 = vunpack.c.h.b16 %v3744
    %v5091 = vunpack.c.l.b16 %v3745
    %v5092 = vunpack.c.h.b16 %v3745
    %v5093 = vunpack.c.l.b16 %v3746
    %v5094 = vunpack.c.h.b16 %v3746
    %v5095 = vunpack.c.l.b16 %v3747
    %v5096 = vunpack.c.l.b16 %v3748
    %v5097 = vunpack.c.h.b16 %v3748
    %v5098 = vunpack.c.l.b16 %v3749
    %v5099 = vunpack.c.h.b16 %v3749
    %v5100 = vunpack.c.l.b16 %v3750
    %v5101 = vunpack.c.h.b16 %v3750
    %v5102 = vunpack.c.l.b16 %v3751
    %v5103 = vunpack.c.l.b16 %v3752
    %v5104 = vunpack.c.h.b16 %v3752
    %v5105 = vunpack.c.l.b16 %v3753
    %v5106 = vunpack.c.h.b16 %v3753
    %v5107 = vunpack.c.l.b16 %v3754
    %v5108 = vunpack.c.h.b16 %v3754
    %v5109 = vunpack.c.l.b16 %v3755
    %v5110 = vunpack.c.l.b16 %v3756
    %v5111 = vunpack.c.h.b16 %v3756
    %v5112 = vunpack.c.l.b16 %v3757
    %v5113 = vunpack.c.h.b16 %v3757
    %v5114 = vunpack.c.l.b16 %v3758
    %v5115 = vunpack.c.h.b16 %v3758
    %v5116 = vunpack.c.l.b16 %v3759
    %v5117 = vunpack.c.l.b16 %v3760
    %v5118 = vunpack.c.h.b16 %v3760
    %v5119 = vunpack.c.l.b16 %v3761
    %v5120 = vunpack.c.h.b16 %v3761
    %v5121 = vunpack.c.l.b16 %v3762
    %v5122 = vunpack.c.h.b16 %v3762
    %v5123 = vunpack.c.l.b16 %v3763
    %v5124 = vunpack.c.l.b16 %v3764
    %v5125 = vunpack.c.h.b16 %v3764
    %v5126 = vunpack.c.l.b16 %v3765
    %v5127 = vunpack.c.h.b16 %v3765
    %v5128 = vunpack.c.l.b16 %v3766
    %v5129 = vunpack.c.h.b16 %v3766
    %v5130 = vunpack.c.l.b16 %v3767
    %v5131 = vunpack.c.l.b16 %v3768
    %v5132 = vunpack.c.h.b16 %v3768
    %v5133 = vunpack.c.l.b16 %v3769
    %v5134 = vunpack.c.h.b16 %v3769
    %v5135 = vunpack.c.l.b16 %v3770
    %v5136 = vunpack.c.h.b16 %v3770
    %v5137 = vunpack.c.l.b16 %v3771
    %v5138 = vunpack.c.l.b16 %v3772
    %v5139 = vunpack.c.h.b16 %v3772
    %v5140 = vunpack.c.l.b16 %v3773
    %v5141 = vunpack.c.h.b16 %v3773
    %v5142 = vunpack.c.l.b16 %v3774
    %v5143 = vunpack.c.h.b16 %v3774
    %v5144 = vunpack.c.l.b16 %v3775
    %v5145 = vunpack.c.l.b16 %v3776
    %v5146 = vunpack.c.h.b16 %v3776
    %v5147 = vunpack.c.l.b16 %v3777
    %v5148 = vunpack.c.h.b16 %v3777
    %v5149 = vunpack.c.l.b16 %v3778
    %v5150 = vunpack.c.h.b16 %v3778
    %v5151 = vunpack.c.l.b16 %v3779
    %v5152 = vunpack.c.l.b16 %v3780
    %v5153 = vunpack.c.h.b16 %v3780
    %v5154 = vunpack.c.l.b16 %v3781
    %v5155 = vunpack.c.h.b16 %v3781
    %v5156 = vunpack.c.l.b16 %v3782
    %v5157 = vunpack.c.h.b16 %v3782
    %v5158 = vunpack.c.l.b16 %v3783
    %v5159 = vunpack.c.l.b16 %v3784
    %v5160 = vunpack.c.h.b16 %v3784
    %v5161 = vunpack.c.l.b16 %v3785
    %v5162 = vunpack.c.h.b16 %v3785
    %v5163 = vunpack.c.l.b16 %v3786
    %v5164 = vunpack.c.h.b16 %v3786
    %v5165 = vunpack.c.l.b16 %v3787
    %v5166 = vunpack.c.l.b16 %v3788
    %v5167 = vunpack.c.h.b16 %v3788
    %v5168 = vunpack.c.l.b16 %v3789
    %v5169 = vunpack.c.h.b16 %v3789
    %v5170 = vunpack.c.l.b16 %v3790
    %v5171 = vunpack.c.h.b16 %v3790
    %v5172 = vunpack.c.l.b16 %v3791
    %v5173 = vunpack.c.l.b16 %v3792
    %v5174 = vunpack.c.h.b16 %v3792
    %v5175 = vunpack.c.l.b16 %v3793
    %v5176 = vunpack.c.h.b16 %v3793
    %v5177 = vunpack.c.l.b16 %v3794
    %v5178 = vunpack.c.h.b16 %v3794
    %v5179 = vunpack.c.l.b16 %v3795
    %v5180 = vunpack.c.l.b16 %v3796
    %v5181 = vunpack.c.h.b16 %v3796
    %v5182 = vunpack.c.l.b16 %v3797
    %v5183 = vunpack.c.h.b16 %v3797
    %v5184 = vunpack.c.l.b16 %v3798
    %v5185 = vunpack.c.h.b16 %v3798
    %v5186 = vunpack.c.l.b16 %v3799
    %v5187 = vunpack.c.l.b16 %v3800
    %v5188 = vunpack.c.h.b16 %v3800
    %v5189 = vunpack.c.l.b16 %v3801
    %v5190 = vunpack.c.h.b16 %v3801
    %v5191 = vunpack.c.l.b16 %v3802
    %v5192 = vunpack.c.h.b16 %v3802
    %v5193 = vunpack.c.l.b16 %v3803
    %v5194 = vunpack.c.l.b16 %v3804
    %v5195 = vunpack.c.h.b16 %v3804
    %v5196 = vunpack.c.l.b16 %v3805
    %v5197 = vunpack.c.h.b16 %v3805
    %v5198 = vunpack.c.l.b16 %v3806
    %v5199 = vunpack.c.h.b16 %v3806
    %v5200 = vunpack.c.l.b16 %v3807
    %v5201 = vunpack.c.l.b16 %v3808
    %v5202 = vunpack.c.h.b16 %v3808
    %v5203 = vunpack.c.l.b16 %v3809
    %v5204 = vunpack.c.h.b16 %v3809
    %v5205 = vunpack.c.l.b16 %v3810
    %v5206 = vunpack.c.h.b16 %v3810
    %v5207 = vunpack.c.l.b16 %v3811
    %v5208 = vunpack.c.l.b16 %v3812
    %v5209 = vunpack.c.h.b16 %v3812
    %v5210 = vunpack.c.l.b16 %v3813
    %v5211 = vunpack.c.h.b16 %v3813
    %v5212 = vunpack.c.l.b16 %v3814
    %v5213 = vunpack.c.h.b16 %v3814
    %v5214 = vunpack.c.l.b16 %v3815
    %v5215 = vunpack.c.l.b16 %v3816
    %v5216 = vunpack.c.h.b16 %v3816
    %v5217 = vunpack.c.l.b16 %v3817
    %v5218 = vunpack.c.h.b16 %v3817
    %v5219 = vunpack.c.l.b16 %v3818
    %v5220 = vunpack.c.h.b16 %v3818
    %v5221 = vunpack.c.l.b16 %v3819
    %v5222 = vunpack.c.l.b16 %v3820
    %v5223 = vunpack.c.h.b16 %v3820
    %v5224 = vunpack.c.l.b16 %v3821
    %v5225 = vunpack.c.h.b16 %v3821
    %v5226 = vunpack.c.l.b16 %v3822
    %v5227 = vunpack.c.h.b16 %v3822
    %v5228 = vunpack.c.l.b16 %v3823
    %v5229 = vunpack.c.l.b16 %v3824
    %v5230 = vunpack.c.h.b16 %v3824
    %v5231 = vunpack.c.l.b16 %v3825
    %v5232 = vunpack.c.h.b16 %v3825
    %v5233 = vunpack.c.l.b16 %v3826
    %v5234 = vunpack.c.h.b16 %v3826
    %v5235 = vunpack.c.l.b16 %v3827
    %v5236 = vunpack.c.l.b16 %v3828
    %v5237 = vunpack.c.h.b16 %v3828
    %v5238 = vunpack.c.l.b16 %v3829
    %v5239 = vunpack.c.h.b16 %v3829
    %v5240 = vunpack.c.l.b16 %v3830
    %v5241 = vunpack.c.h.b16 %v3830
    %v5242 = vunpack.c.l.b16 %v3831
    %v5243 = vunpack.c.l.b16 %v3832
    %v5244 = vunpack.c.h.b16 %v3832
    %v5245 = vunpack.c.l.b16 %v3833
    %v5246 = vunpack.c.h.b16 %v3833
    %v5247 = vunpack.c.l.b16 %v3834
    %v5248 = vunpack.c.h.b16 %v3834
    %v5249 = vunpack.c.l.b16 %v3835
    %v5250 = vunpack.c.l.b16 %v3836
    %v5251 = vunpack.c.h.b16 %v3836
    %v5252 = vunpack.c.l.b16 %v3837
    %v5253 = vunpack.c.h.b16 %v3837
    %v5254 = vunpack.c.l.b16 %v3838
    %v5255 = vunpack.c.h.b16 %v3838
    %v5256 = vunpack.c.l.b16 %v3839
    %v5257 = vunpack.c.l.b16 %v3840
    %v5258 = vunpack.c.h.b16 %v3840
    %v5259 = vunpack.c.l.b16 %v3841
    %v5260 = vunpack.c.h.b16 %v3841
    %v5261 = vunpack.c.l.b16 %v3842
    %v5262 = vunpack.c.h.b16 %v3842
    %v5263 = vunpack.c.l.b16 %v3843
    %v5264 = vunpack.c.l.b16 %v3844
    %v5265 = vunpack.c.h.b16 %v3844
    %v5266 = vunpack.c.l.b16 %v3845
    %v5267 = vunpack.c.h.b16 %v3845
    %v5268 = vunpack.c.l.b16 %v3846
    %v5269 = vunpack.c.h.b16 %v3846
    %v5270 = vunpack.c.l.b16 %v3847
    %v5271 = vpack.c.b16 %v4382, %v4375
    %v5272 = vpack.c.b16 %v4383, %v4376
    %v5273 = vpack.c.b16 %v4384, %v4377
    %v5274 = vpack.c.b16 %v4385, %v4378
    %v5275 = vpack.c.b16 %v4386, %v4379
    %v5276 = vpack.c.b16 %v4387, %v4380
    %v5277 = vpack.c.b16 %v4388, %v4381
    %v5278 = vpack.c.b16 %v4396, %v4389
    %v5279 = vpack.c.b16 %v4397, %v4390
    %v5280 = vpack.c.b16 %v4398, %v4391
    %v5281 = vpack.c.b16 %v4399, %v4392
    %v5282 = vpack.c.b16 %v4400, %v4393
    %v5283 = vpack.c.b16 %v4401, %v4394
    %v5284 = vpack.c.b16 %v4402, %v4395
    %v5285 = vpack.c.b16 %v4410, %v4403
    %v5286 = vpack.c.b16 %v4411, %v4404
    %v5287 = vpack.c.b16 %v4412, %v4405
    %v5288 = vpack.c.b16 %v4413, %v4406
    %v5289 = vpack.c.b16 %v4414, %v4407
    %v5290 = vpack.c.b16 %v4415, %v4408
    %v5291 = vpack.c.b16 %v4416, %v4409
    %v5292 = vpack.c.b16 %v4424, %v4417
    %v5293 = vpack.c.b16 %v4425, %v4418
    %v5294 = vpack.c.b16 %v4426, %v4419
    %v5295 = vpack.c.b16 %v4427, %v4420
    %v5296 = vpack.c.b16 %v4428, %v4421
    %v5297 = vpack.c.b16 %v4429, %v4422
    %v5298 = vpack.c.b16 %v4430, %v4423
    %v5299 = vpack.c.b16 %v4438, %v4431
    %v5300 = vpack.c.b16 %v4439, %v4432
    %v5301 = vpack.c.b16 %v4440, %v4433
    %v5302 = vpack.c.b16 %v4441, %v4434
    %v5303 = vpack.c.b16 %v4442, %v4435
    %v5304 = vpack.c.b16 %v4443, %v4436
    %v5305 = vpack.c.b16 %v4444, %v4437
    %v5306 = vpack.c.b16 %v4452, %v4445
    %v5307 = vpack.c.b16 %v4453, %v4446
    %v5308 = vpack.c.b16 %v4454, %v4447
    %v5309 = vpack.c.b16 %v4455, %v4448
    %v5310 = vpack.c.b16 %v4456, %v4449
    %v5311 = vpack.c.b16 %v4457, %v4450
    %v5312 = vpack.c.b16 %v4458, %v4451
    %v5313 = vpack.c.b16 %v4466, %v4459
    %v5314 = vpack.c.b16 %v4467, %v4460
    %v5315 = vpack.c.b16 %v4468, %v4461
    %v5316 = vpack.c.b16 %v4469, %v4462
    %v5317 = vpack.c.b16 %v4470, %v4463
    %v5318 = vpack.c.b16 %v4471, %v4464
    %v5319 = vpack.c.b16 %v4472, %v4465
    %v5320 = vpack.c.b16 %v4480, %v4473
    %v5321 = vpack.c.b16 %v4481, %v4474
    %v5322 = vpack.c.b16 %v4482, %v4475
    %v5323 = vpack.c.b16 %v4483, %v4476
    %v5324 = vpack.c.b16 %v4484, %v4477
    %v5325 = vpack.c.b16 %v4485, %v4478
    %v5326 = vpack.c.b16 %v4486, %v4479
    %v5327 = vpack.c.b16 %v4494, %v4487
    %v5328 = vpack.c.b16 %v4495, %v4488
    %v5329 = vpack.c.b16 %v4496, %v4489
    %v5330 = vpack.c.b16 %v4497, %v4490
    %v5331 = vpack.c.b16 %v4498, %v4491
    %v5332 = vpack.c.b16 %v4499, %v4492
    %v5333 = vpack.c.b16 %v4500, %v4493
    %v5334 = vpack.c.b16 %v4508, %v4501
    %v5335 = vpack.c.b16 %v4509, %v4502
    %v5336 = vpack.c.b16 %v4510, %v4503
    %v5337 = vpack.c.b16 %v4511, %v4504
    %v5338 = vpack.c.b16 %v4512, %v4505
    %v5339 = vpack.c.b16 %v4513, %v4506
    %v5340 = vpack.c.b16 %v4514, %v4507
    %v5341 = vpack.c.b16 %v4522, %v4515
    %v5342 = vpack.c.b16 %v4523, %v4516
    %v5343 = vpack.c.b16 %v4524, %v4517
    %v5344 = vpack.c.b16 %v4525, %v4518
    %v5345 = vpack.c.b16 %v4526, %v4519
    %v5346 = vpack.c.b16 %v4527, %v4520
    %v5347 = vpack.c.b16 %v4528, %v4521
    %v5348 = vpack.c.b16 %v4536, %v4529
    %v5349 = vpack.c.b16 %v4537, %v4530
    %v5350 = vpack.c.b16 %v4538, %v4531
    %v5351 = vpack.c.b16 %v4539, %v4532
    %v5352 = vpack.c.b16 %v4540, %v4533
    %v5353 = vpack.c.b16 %v4541, %v4534
    %v5354 = vpack.c.b16 %v4542, %v4535
    %v5355 = vpack.c.b16 %v4550, %v4543
    %v5356 = vpack.c.b16 %v4551, %v4544
    %v5357 = vpack.c.b16 %v4552, %v4545
    %v5358 = vpack.c.b16 %v4553, %v4546
    %v5359 = vpack.c.b16 %v4554, %v4547
    %v5360 = vpack.c.b16 %v4555, %v4548
    %v5361 = vpack.c.b16 %v4556, %v4549
    %v5362 = vpack.c.b16 %v4564, %v4557
    %v5363 = vpack.c.b16 %v4565, %v4558
    %v5364 = vpack.c.b16 %v4566, %v4559
    %v5365 = vpack.c.b16 %v4567, %v4560
    %v5366 = vpack.c.b16 %v4568, %v4561
    %v5367 = vpack.c.b16 %v4569, %v4562
    %v5368 = vpack.c.b16 %v4570, %v4563
    %v5369 = vpack.c.b16 %v4578, %v4571
    %v5370 = vpack.c.b16 %v4579, %v4572
    %v5371 = vpack.c.b16 %v4580, %v4573
    %v5372 = vpack.c.b16 %v4581, %v4574
    %v5373 = vpack.c.b16 %v4582, %v4575
    %v5374 = vpack.c.b16 %v4583, %v4576
    %v5375 = vpack.c.b16 %v4584, %v4577
    %v5376 = vpack.c.b16 %v4592, %v4585
    %v5377 = vpack.c.b16 %v4593, %v4586
    %v5378 = vpack.c.b16 %v4594, %v4587
    %v5379 = vpack.c.b16 %v4595, %v4588
    %v5380 = vpack.c.b16 %v4596, %v4589
    %v5381 = vpack.c.b16 %v4597, %v4590
    %v5382 = vpack.c.b16 %v4598, %v4591
    %v5383 = vpack.c.b16 %v4606, %v4599
    %v5384 = vpack.c.b16 %v4607, %v4600
    %v5385 = vpack.c.b16 %v4608, %v4601
    %v5386 = vpack.c.b16 %v4609, %v4602
    %v5387 = vpack.c.b16 %v4610, %v4603
    %v5388 = vpack.c.b16 %v4611, %v4604
    %v5389 = vpack.c.b16 %v4612, %v4605
    %v5390 = vpack.c.b16 %v4620, %v4613
    %v5391 = vpack.c.b16 %v4621, %v4614
    %v5392 = vpack.c.b16 %v4622, %v4615
    %v5393 = vpack.c.b16 %v4623, %v4616
    %v5394 = vpack.c.b16 %v4624, %v4617
    %v5395 = vpack.c.b16 %v4625, %v4618
    %v5396 = vpack.c.b16 %v4626, %v4619
    %v5397 = vpack.c.b16 %v4634, %v4627
    %v5398 = vpack.c.b16 %v4635, %v4628
    %v5399 = vpack.c.b16 %v4636, %v4629
    %v5400 = vpack.c.b16 %v4637, %v4630
    %v5401 = vpack.c.b16 %v4638, %v4631
    %v5402 = vpack.c.b16 %v4639, %v4632
    %v5403 = vpack.c.b16 %v4640, %v4633
    %v5404 = vpack.c.b16 %v4648, %v4641
    %v5405 = vpack.c.b16 %v4649, %v4642
    %v5406 = vpack.c.b16 %v4650, %v4643
    %v5407 = vpack.c.b16 %v4651, %v4644
    %v5408 = vpack.c.b16 %v4652, %v4645
    %v5409 = vpack.c.b16 %v4653, %v4646
    %v5410 = vpack.c.b16 %v4654, %v4647
    %v5411 = vpack.c.b16 %v4662, %v4655
    %v5412 = vpack.c.b16 %v4663, %v4656
    %v5413 = vpack.c.b16 %v4664, %v4657
    %v5414 = vpack.c.b16 %v4665, %v4658
    %v5415 = vpack.c.b16 %v4666, %v4659
    %v5416 = vpack.c.b16 %v4667, %v4660
    %v5417 = vpack.c.b16 %v4668, %v4661
    %v5418 = vpack.c.b16 %v4676, %v4669
    %v5419 = vpack.c.b16 %v4677, %v4670
    %v5420 = vpack.c.b16 %v4678, %v4671
    %v5421 = vpack.c.b16 %v4679, %v4672
    %v5422 = vpack.c.b16 %v4680, %v4673
    %v5423 = vpack.c.b16 %v4681, %v4674
    %v5424 = vpack.c.b16 %v4682, %v4675
    %v5425 = vpack.c.b16 %v4690, %v4683
    %v5426 = vpack.c.b16 %v4691, %v4684
    %v5427 = vpack.c.b16 %v4692, %v4685
    %v5428 = vpack.c.b16 %v4693, %v4686
    %v5429 = vpack.c.b16 %v4694, %v4687
    %v5430 = vpack.c.b16 %v4695, %v4688
    %v5431 = vpack.c.b16 %v4696, %v4689
    %v5432 = vpack.c.b16 %v4704, %v4697
    %v5433 = vpack.c.b16 %v4705, %v4698
    %v5434 = vpack.c.b16 %v4706, %v4699
    %v5435 = vpack.c.b16 %v4707, %v4700
    %v5436 = vpack.c.b16 %v4708, %v4701
    %v5437 = vpack.c.b16 %v4709, %v4702
    %v5438 = vpack.c.b16 %v4710, %v4703
    %v5439 = vpack.c.b16 %v4718, %v4711
    %v5440 = vpack.c.b16 %v4719, %v4712
    %v5441 = vpack.c.b16 %v4720, %v4713
    %v5442 = vpack.c.b16 %v4721, %v4714
    %v5443 = vpack.c.b16 %v4722, %v4715
    %v5444 = vpack.c.b16 %v4723, %v4716
    %v5445 = vpack.c.b16 %v4724, %v4717
    %v5446 = vpack.c.b16 %v4732, %v4725
    %v5447 = vpack.c.b16 %v4733, %v4726
    %v5448 = vpack.c.b16 %v4734, %v4727
    %v5449 = vpack.c.b16 %v4735, %v4728
    %v5450 = vpack.c.b16 %v4736, %v4729
    %v5451 = vpack.c.b16 %v4737, %v4730
    %v5452 = vpack.c.b16 %v4738, %v4731
    %v5453 = vpack.c.b16 %v4746, %v4739
    %v5454 = vpack.c.b16 %v4747, %v4740
    %v5455 = vpack.c.b16 %v4748, %v4741
    %v5456 = vpack.c.b16 %v4749, %v4742
    %v5457 = vpack.c.b16 %v4750, %v4743
    %v5458 = vpack.c.b16 %v4751, %v4744
    %v5459 = vpack.c.b16 %v4752, %v4745
    %v5460 = vpack.c.b16 %v4760, %v4753
    %v5461 = vpack.c.b16 %v4761, %v4754
    %v5462 = vpack.c.b16 %v4762, %v4755
    %v5463 = vpack.c.b16 %v4763, %v4756
    %v5464 = vpack.c.b16 %v4764, %v4757
    %v5465 = vpack.c.b16 %v4765, %v4758
    %v5466 = vpack.c.b16 %v4766, %v4759
    %v5467 = vpack.c.b16 %v4774, %v4767
    %v5468 = vpack.c.b16 %v4775, %v4768
    %v5469 = vpack.c.b16 %v4776, %v4769
    %v5470 = vpack.c.b16 %v4777, %v4770
    %v5471 = vpack.c.b16 %v4778, %v4771
    %v5472 = vpack.c.b16 %v4779, %v4772
    %v5473 = vpack.c.b16 %v4780, %v4773
    %v5474 = vpack.c.b16 %v4788, %v4781
    %v5475 = vpack.c.b16 %v4789, %v4782
    %v5476 = vpack.c.b16 %v4790, %v4783
    %v5477 = vpack.c.b16 %v4791, %v4784
    %v5478 = vpack.c.b16 %v4792, %v4785
    %v5479 = vpack.c.b16 %v4793, %v4786
    %v5480 = vpack.c.b16 %v4794, %v4787
    %v5481 = vpack.c.b16 %v4802, %v4795
    %v5482 = vpack.c.b16 %v4803, %v4796
    %v5483 = vpack.c.b16 %v4804, %v4797
    %v5484 = vpack.c.b16 %v4805, %v4798
    %v5485 = vpack.c.b16 %v4806, %v4799
    %v5486 = vpack.c.b16 %v4807, %v4800
    %v5487 = vpack.c.b16 %v4808, %v4801
    %v5488 = vpack.c.b16 %v4816, %v4809
    %v5489 = vpack.c.b16 %v4817, %v4810
    %v5490 = vpack.c.b16 %v4818, %v4811
    %v5491 = vpack.c.b16 %v4819, %v4812
    %v5492 = vpack.c.b16 %v4820, %v4813
    %v5493 = vpack.c.b16 %v4821, %v4814
    %v5494 = vpack.c.b16 %v4822, %v4815
    %v5495 = vpack.c.b16 %v4830, %v4823
    %v5496 = vpack.c.b16 %v4831, %v4824
    %v5497 = vpack.c.b16 %v4832, %v4825
    %v5498 = vpack.c.b16 %v4833, %v4826
    %v5499 = vpack.c.b16 %v4834, %v4827
    %v5500 = vpack.c.b16 %v4835, %v4828
    %v5501 = vpack.c.b16 %v4836, %v4829
    %v5502 = vpack.c.b16 %v4844, %v4837
    %v5503 = vpack.c.b16 %v4845, %v4838
    %v5504 = vpack.c.b16 %v4846, %v4839
    %v5505 = vpack.c.b16 %v4847, %v4840
    %v5506 = vpack.c.b16 %v4848, %v4841
    %v5507 = vpack.c.b16 %v4849, %v4842
    %v5508 = vpack.c.b16 %v4850, %v4843
    %v5509 = vpack.c.b16 %v4858, %v4851
    %v5510 = vpack.c.b16 %v4859, %v4852
    %v5511 = vpack.c.b16 %v4860, %v4853
    %v5512 = vpack.c.b16 %v4861, %v4854
    %v5513 = vpack.c.b16 %v4862, %v4855
    %v5514 = vpack.c.b16 %v4863, %v4856
    %v5515 = vpack.c.b16 %v4864, %v4857
    %v5516 = vpack.c.b16 %v4872, %v4865
    %v5517 = vpack.c.b16 %v4873, %v4866
    %v5518 = vpack.c.b16 %v4874, %v4867
    %v5519 = vpack.c.b16 %v4875, %v4868
    %v5520 = vpack.c.b16 %v4876, %v4869
    %v5521 = vpack.c.b16 %v4877, %v4870
    %v5522 = vpack.c.b16 %v4878, %v4871
    %v5523 = vpack.c.b16 %v4886, %v4879
    %v5524 = vpack.c.b16 %v4887, %v4880
    %v5525 = vpack.c.b16 %v4888, %v4881
    %v5526 = vpack.c.b16 %v4889, %v4882
    %v5527 = vpack.c.b16 %v4890, %v4883
    %v5528 = vpack.c.b16 %v4891, %v4884
    %v5529 = vpack.c.b16 %v4892, %v4885
    %v5530 = vpack.c.b16 %v4900, %v4893
    %v5531 = vpack.c.b16 %v4901, %v4894
    %v5532 = vpack.c.b16 %v4902, %v4895
    %v5533 = vpack.c.b16 %v4903, %v4896
    %v5534 = vpack.c.b16 %v4904, %v4897
    %v5535 = vpack.c.b16 %v4905, %v4898
    %v5536 = vpack.c.b16 %v4906, %v4899
    %v5537 = vpack.c.b16 %v4914, %v4907
    %v5538 = vpack.c.b16 %v4915, %v4908
    %v5539 = vpack.c.b16 %v4916, %v4909
    %v5540 = vpack.c.b16 %v4917, %v4910
    %v5541 = vpack.c.b16 %v4918, %v4911
    %v5542 = vpack.c.b16 %v4919, %v4912
    %v5543 = vpack.c.b16 %v4920, %v4913
    %v5544 = vpack.c.b16 %v4928, %v4921
    %v5545 = vpack.c.b16 %v4929, %v4922
    %v5546 = vpack.c.b16 %v4930, %v4923
    %v5547 = vpack.c.b16 %v4931, %v4924
    %v5548 = vpack.c.b16 %v4932, %v4925
    %v5549 = vpack.c.b16 %v4933, %v4926
    %v5550 = vpack.c.b16 %v4934, %v4927
    %v5551 = vpack.c.b16 %v4942, %v4935
    %v5552 = vpack.c.b16 %v4943, %v4936
    %v5553 = vpack.c.b16 %v4944, %v4937
    %v5554 = vpack.c.b16 %v4945, %v4938
    %v5555 = vpack.c.b16 %v4946, %v4939
    %v5556 = vpack.c.b16 %v4947, %v4940
    %v5557 = vpack.c.b16 %v4948, %v4941
    %v5558 = vpack.c.b16 %v4956, %v4949
    %v5559 = vpack.c.b16 %v4957, %v4950
    %v5560 = vpack.c.b16 %v4958, %v4951
    %v5561 = vpack.c.b16 %v4959, %v4952
    %v5562 = vpack.c.b16 %v4960, %v4953
    %v5563 = vpack.c.b16 %v4961, %v4954
    %v5564 = vpack.c.b16 %v4962, %v4955
    %v5565 = vpack.c.b16 %v4970, %v4963
    %v5566 = vpack.c.b16 %v4971, %v4964
    %v5567 = vpack.c.b16 %v4972, %v4965
    %v5568 = vpack.c.b16 %v4973, %v4966
    %v5569 = vpack.c.b16 %v4974, %v4967
    %v5570 = vpack.c.b16 %v4975, %v4968
    %v5571 = vpack.c.b16 %v4976, %v4969
    %v5572 = vpack.c.b16 %v4984, %v4977
    %v5573 = vpack.c.b16 %v4985, %v4978
    %v5574 = vpack.c.b16 %v4986, %v4979
    %v5575 = vpack.c.b16 %v4987, %v4980
    %v5576 = vpack.c.b16 %v4988, %v4981
    %v5577 = vpack.c.b16 %v4989, %v4982
    %v5578 = vpack.c.b16 %v4990, %v4983
    %v5579 = vpack.c.b16 %v4998, %v4991
    %v5580 = vpack.c.b16 %v4999, %v4992
    %v5581 = vpack.c.b16 %v5000, %v4993
    %v5582 = vpack.c.b16 %v5001, %v4994
    %v5583 = vpack.c.b16 %v5002, %v4995
    %v5584 = vpack.c.b16 %v5003, %v4996
    %v5585 = vpack.c.b16 %v5004, %v4997
    %v5586 = vpack.c.b16 %v5012, %v5005
    %v5587 = vpack.c.b16 %v5013, %v5006
    %v5588 = vpack.c.b16 %v5014, %v5007
    %v5589 = vpack.c.b16 %v5015, %v5008
    %v5590 = vpack.c.b16 %v5016, %v5009
    %v5591 = vpack.c.b16 %v5017, %v5010
    %v5592 = vpack.c.b16 %v5018, %v5011
    %v5593 = vpack.c.b16 %v5026, %v5019
    %v5594 = vpack.c.b16 %v5027, %v5020
    %v5595 = vpack.c.b16 %v5028, %v5021
    %v5596 = vpack.c.b16 %v5029, %v5022
    %v5597 = vpack.c.b16 %v5030, %v5023
    %v5598 = vpack.c.b16 %v5031, %v5024
    %v5599 = vpack.c.b16 %v5032, %v5025
    %v5600 = vpack.c.b16 %v5040, %v5033
    %v5601 = vpack.c.b16 %v5041, %v5034
    %v5602 = vpack.c.b16 %v5042, %v5035
    %v5603 = vpack.c.b16 %v5043, %v5036
    %v5604 = vpack.c.b16 %v5044, %v5037
    %v5605 = vpack.c.b16 %v5045, %v5038
    %v5606 = vpack.c.b16 %v5046, %v5039
    %v5607 = vpack.c.b16 %v5054, %v5047
    %v5608 = vpack.c.b16 %v5055, %v5048
    %v5609 = vpack.c.b16 %v5056, %v5049
    %v5610 = vpack.c.b16 %v5057, %v5050
    %v5611 = vpack.c.b16 %v5058, %v5051
    %v5612 = vpack.c.b16 %v5059, %v5052
    %v5613 = vpack.c.b16 %v5060, %v5053
    %v5614 = vpack.c.b16 %v5068, %v5061
    %v5615 = vpack.c.b16 %v5069, %v5062
    %v5616 = vpack.c.b16 %v5070, %v5063
    %v5617 = vpack.c.b16 %v5071, %v5064
    %v5618 = vpack.c.b16 %v5072, %v5065
    %v5619 = vpack.c.b16 %v5073, %v5066
    %v5620 = vpack.c.b16 %v5074, %v5067
    %v5621 = vpack.c.b16 %v5082, %v5075
    %v5622 = vpack.c.b16 %v5083, %v5076
    %v5623 = vpack.c.b16 %v5084, %v5077
    %v5624 = vpack.c.b16 %v5085, %v5078
    %v5625 = vpack.c.b16 %v5086, %v5079
    %v5626 = vpack.c.b16 %v5087, %v5080
    %v5627 = vpack.c.b16 %v5088, %v5081
    %v5628 = vpack.c.b16 %v5096, %v5089
    %v5629 = vpack.c.b16 %v5097, %v5090
    %v5630 = vpack.c.b16 %v5098, %v5091
    %v5631 = vpack.c.b16 %v5099, %v5092
    %v5632 = vpack.c.b16 %v5100, %v5093
    %v5633 = vpack.c.b16 %v5101, %v5094
    %v5634 = vpack.c.b16 %v5102, %v5095
    %v5635 = vpack.c.b16 %v5110, %v5103
    %v5636 = vpack.c.b16 %v5111, %v5104
    %v5637 = vpack.c.b16 %v5112, %v5105
    %v5638 = vpack.c.b16 %v5113, %v5106
    %v5639 = vpack.c.b16 %v5114, %v5107
    %v5640 = vpack.c.b16 %v5115, %v5108
    %v5641 = vpack.c.b16 %v5116, %v5109
    %v5642 = vpack.c.b16 %v5124, %v5117
    %v5643 = vpack.c.b16 %v5125, %v5118
    %v5644 = vpack.c.b16 %v5126, %v5119
    %v5645 = vpack.c.b16 %v5127, %v5120
    %v5646 = vpack.c.b16 %v5128, %v5121
    %v5647 = vpack.c.b16 %v5129, %v5122
    %v5648 = vpack.c.b16 %v5130, %v5123
    %v5649 = vpack.c.b16 %v5138, %v5131
    %v5650 = vpack.c.b16 %v5139, %v5132
    %v5651 = vpack.c.b16 %v5140, %v5133
    %v5652 = vpack.c.b16 %v5141, %v5134
    %v5653 = vpack.c.b16 %v5142, %v5135
    %v5654 = vpack.c.b16 %v5143, %v5136
    %v5655 = vpack.c.b16 %v5144, %v5137
    %v5656 = vpack.c.b16 %v5152, %v5145
    %v5657 = vpack.c.b16 %v5153, %v5146
    %v5658 = vpack.c.b16 %v5154, %v5147
    %v5659 = vpack.c.b16 %v5155, %v5148
    %v5660 = vpack.c.b16 %v5156, %v5149
    %v5661 = vpack.c.b16 %v5157, %v5150
    %v5662 = vpack.c.b16 %v5158, %v5151
    %v5663 = vpack.c.b16 %v5166, %v5159
    %v5664 = vpack.c.b16 %v5167, %v5160
    %v5665 = vpack.c.b16 %v5168, %v5161
    %v5666 = vpack.c.b16 %v5169, %v5162
    %v5667 = vpack.c.b16 %v5170, %v5163
    %v5668 = vpack.c.b16 %v5171, %v5164
    %v5669 = vpack.c.b16 %v5172, %v5165
    %v5670 = vpack.c.b16 %v5180, %v5173
    %v5671 = vpack.c.b16 %v5181, %v5174
    %v5672 = vpack.c.b16 %v5182, %v5175
    %v5673 = vpack.c.b16 %v5183, %v5176
    %v5674 = vpack.c.b16 %v5184, %v5177
    %v5675 = vpack.c.b16 %v5185, %v5178
    %v5676 = vpack.c.b16 %v5186, %v5179
    %v5677 = vpack.c.b16 %v5194, %v5187
    %v5678 = vpack.c.b16 %v5195, %v5188
    %v5679 = vpack.c.b16 %v5196, %v5189
    %v5680 = vpack.c.b16 %v5197, %v5190
    %v5681 = vpack.c.b16 %v5198, %v5191
    %v5682 = vpack.c.b16 %v5199, %v5192
    %v5683 = vpack.c.b16 %v5200, %v5193
    %v5684 = vpack.c.b16 %v5208, %v5201
    %v5685 = vpack.c.b16 %v5209, %v5202
    %v5686 = vpack.c.b16 %v5210, %v5203
    %v5687 = vpack.c.b16 %v5211, %v5204
    %v5688 = vpack.c.b16 %v5212, %v5205
    %v5689 = vpack.c.b16 %v5213, %v5206
    %v5690 = vpack.c.b16 %v5214, %v5207
    %v5691 = vpack.c.b16 %v5222, %v5215
    %v5692 = vpack.c.b16 %v5223, %v5216
    %v5693 = vpack.c.b16 %v5224, %v5217
    %v5694 = vpack.c.b16 %v5225, %v5218
    %v5695 = vpack.c.b16 %v5226, %v5219
    %v5696 = vpack.c.b16 %v5227, %v5220
    %v5697 = vpack.c.b16 %v5228, %v5221
    %v5698 = vpack.c.b16 %v5236, %v5229
    %v5699 = vpack.c.b16 %v5237, %v5230
    %v5700 = vpack.c.b16 %v5238, %v5231
    %v5701 = vpack.c.b16 %v5239, %v5232
    %v5702 = vpack.c.b16 %v5240, %v5233
    %v5703 = vpack.c.b16 %v5241, %v5234
    %v5704 = vpack.c.b16 %v5242, %v5235
    %v5705 = vpack.c.b16 %v5250, %v5243
    %v5706 = vpack.c.b16 %v5251, %v5244
    %v5707 = vpack.c.b16 %v5252, %v5245
    %v5708 = vpack.c.b16 %v5253, %v5246
    %v5709 = vpack.c.b16 %v5254, %v5247
    %v5710 = vpack.c.b16 %v5255, %v5248
    %v5711 = vpack.c.b16 %v5256, %v5249
    %v5712 = vpack.c.b16 %v5264, %v5257
    %v5713 = vpack.c.b16 %v5265, %v5258
    %v5714 = vpack.c.b16 %v5266, %v5259
    %v5715 = vpack.c.b16 %v5267, %v5260
    %v5716 = vpack.c.b16 %v5268, %v5261
    %v5717 = vpack.c.b16 %v5269, %v5262
    %v5718 = vpack.c.b16 %v5270, %v5263
    %6167 = vmatpush.bf16.msra.mxu0 %v5320
    %6168 = vmatpush.bf16.msra.mxu0 %v5313
    %6169 = vmatpush.bf16.msra.mxu0 %v5306
    %6170 = vmatpush.bf16.msra.mxu0 %v5299
    %6171 = vmatpush.bf16.msra.mxu0 %v5292
    %6172 = vmatpush.bf16.msra.mxu0 %v5285
    %6173 = vmatpush.bf16.msra.mxu0 %v5278
    %6174 = vmatpush.bf16.msra.mxu0 %v5271
    %6175 = vmatmul.bf16.gmra.mxu0 %v3328
    %v6176 = vpop.f32.mrf.mxu0
    %v6177 = vadd.f32 %v3849, %v6176
    %v6178 = vpop.f32.mrf.mxu0
    %6179 = vdwg.mxu0
    %6180 = vmatpush.bf16.msra.mxu0 %v5376
    %6181 = vmatpush.bf16.msra.mxu0 %v5369
    %6182 = vmatpush.bf16.msra.mxu0 %v5362
    %6183 = vmatpush.bf16.msra.mxu0 %v5355
    %6184 = vmatpush.bf16.msra.mxu0 %v5348
    %6185 = vmatpush.bf16.msra.mxu0 %v5341
    %6186 = vmatpush.bf16.msra.mxu0 %v5334
    %6187 = vmatpush.bf16.msra.mxu0 %v5327
    %6188 = vmatmul.bf16.gmra.mxu0 %v3329
    %v6189 = vpop.f32.mrf.mxu0
    %v6190 = vadd.f32 %v6177, %v6189
    %v6191 = vpop.f32.mrf.mxu0
    %6192 = vdwg.mxu0
    %6193 = vmatpush.bf16.msra.mxu0 %v5432
    %6194 = vmatpush.bf16.msra.mxu0 %v5425
    %6195 = vmatpush.bf16.msra.mxu0 %v5418
    %6196 = vmatpush.bf16.msra.mxu0 %v5411
    %6197 = vmatpush.bf16.msra.mxu0 %v5404
    %6198 = vmatpush.bf16.msra.mxu0 %v5397
    %6199 = vmatpush.bf16.msra.mxu0 %v5390
    %6200 = vmatpush.bf16.msra.mxu0 %v5383
    %6201 = vmatmul.bf16.gmra.mxu0 %v3330
    %v6202 = vpop.f32.mrf.mxu0
    %v6203 = vadd.f32 %v6190, %v6202
    %v6204 = vpop.f32.mrf.mxu0
    %6205 = vdwg.mxu0
    %6206 = vmatpush.bf16.msra.mxu0 %v5488
    %6207 = vmatpush.bf16.msra.mxu0 %v5481
    %6208 = vmatpush.bf16.msra.mxu0 %v5474
    %6209 = vmatpush.bf16.msra.mxu0 %v5467
    %6210 = vmatpush.bf16.msra.mxu0 %v5460
    %6211 = vmatpush.bf16.msra.mxu0 %v5453
    %6212 = vmatpush.bf16.msra.mxu0 %v5446
    %6213 = vmatpush.bf16.msra.mxu0 %v5439
    %6214 = vmatmul.bf16.gmra.mxu0 %v3331
    %v6215 = vpop.f32.mrf.mxu0
    %v6216 = vadd.f32 %v6203, %v6215
    %v6217 = vpop.f32.mrf.mxu0
    %6218 = vdwg.mxu0
    %6219 = vmatpush.bf16.msra.mxu0 %v5544
    %6220 = vmatpush.bf16.msra.mxu0 %v5537
    %6221 = vmatpush.bf16.msra.mxu0 %v5530
    %6222 = vmatpush.bf16.msra.mxu0 %v5523
    %6223 = vmatpush.bf16.msra.mxu0 %v5516
    %6224 = vmatpush.bf16.msra.mxu0 %v5509
    %6225 = vmatpush.bf16.msra.mxu0 %v5502
    %6226 = vmatpush.bf16.msra.mxu0 %v5495
    %6227 = vmatmul.bf16.gmra.mxu0 %v3332
    %v6228 = vpop.f32.mrf.mxu0
    %v6229 = vadd.f32 %v6216, %v6228
    %v6230 = vpop.f32.mrf.mxu0
    %6231 = vdwg.mxu0
    %6232 = vmatpush.bf16.msra.mxu0 %v5600
    %6233 = vmatpush.bf16.msra.mxu0 %v5593
    %6234 = vmatpush.bf16.msra.mxu0 %v5586
    %6235 = vmatpush.bf16.msra.mxu0 %v5579
    %6236 = vmatpush.bf16.msra.mxu0 %v5572
    %6237 = vmatpush.bf16.msra.mxu0 %v5565
    %6238 = vmatpush.bf16.msra.mxu0 %v5558
    %6239 = vmatpush.bf16.msra.mxu0 %v5551
    %6240 = vmatmul.bf16.gmra.mxu0 %v3333
    %v6241 = vpop.f32.mrf.mxu0
    %v6242 = vadd.f32 %v6229, %v6241
    %v6243 = vpop.f32.mrf.mxu0
    %6244 = vdwg.mxu0
    %6245 = vmatpush.bf16.msra.mxu0 %v5656
    %6246 = vmatpush.bf16.msra.mxu0 %v5649
    %6247 = vmatpush.bf16.msra.mxu0 %v5642
    %6248 = vmatpush.bf16.msra.mxu0 %v5635
    %6249 = vmatpush.bf16.msra.mxu0 %v5628
    %6250 = vmatpush.bf16.msra.mxu0 %v5621
    %6251 = vmatpush.bf16.msra.mxu0 %v5614
    %6252 = vmatpush.bf16.msra.mxu0 %v5607
    %6253 = vmatmul.bf16.gmra.mxu0 %v3334
    %v6254 = vpop.f32.mrf.mxu0
    %v6255 = vadd.f32 %v6242, %v6254
    %v6256 = vpop.f32.mrf.mxu0
    %6257 = vdwg.mxu0
    %6258 = vmatpush.bf16.msra.mxu0 %v5712
    %6259 = vmatpush.bf16.msra.mxu0 %v5705
    %6260 = vmatpush.bf16.msra.mxu0 %v5698
    %6261 = vmatpush.bf16.msra.mxu0 %v5691
    %6262 = vmatpush.bf16.msra.mxu0 %v5684
    %6263 = vmatpush.bf16.msra.mxu0 %v5677
    %6264 = vmatpush.bf16.msra.mxu0 %v5670
    %6265 = vmatpush.bf16.msra.mxu0 %v5663
    %6266 = vmatmul.bf16.gmra.mxu0 %v3335
    %v6267 = vpop.f32.mrf.mxu0
    %v6268 = vadd.f32 %v6255, %v6267
    %v6269 = vpop.f32.mrf.mxu0
    %6270 = vdwg.mxu0
    %6271 = vmatpush.bf16.msra.mxu0 %v5321
    %6272 = vmatpush.bf16.msra.mxu0 %v5314
    %6273 = vmatpush.bf16.msra.mxu0 %v5307
    %6274 = vmatpush.bf16.msra.mxu0 %v5300
    %6275 = vmatpush.bf16.msra.mxu0 %v5293
    %6276 = vmatpush.bf16.msra.mxu0 %v5286
    %6277 = vmatpush.bf16.msra.mxu0 %v5279
    %6278 = vmatpush.bf16.msra.mxu0 %v5272
    %6279 = vmatmul.bf16.gmra.mxu0 %v3328
    %v6280 = vpop.f32.mrf.mxu0
    %v6281 = vadd.f32 %v3850, %v6280
    %v6282 = vpop.f32.mrf.mxu0
    %6283 = vdwg.mxu0
    %6284 = vmatpush.bf16.msra.mxu0 %v5377
    %6285 = vmatpush.bf16.msra.mxu0 %v5370
    %6286 = vmatpush.bf16.msra.mxu0 %v5363
    %6287 = vmatpush.bf16.msra.mxu0 %v5356
    %6288 = vmatpush.bf16.msra.mxu0 %v5349
    %6289 = vmatpush.bf16.msra.mxu0 %v5342
    %6290 = vmatpush.bf16.msra.mxu0 %v5335
    %6291 = vmatpush.bf16.msra.mxu0 %v5328
    %6292 = vmatmul.bf16.gmra.mxu0 %v3329
    %v6293 = vpop.f32.mrf.mxu0
    %v6294 = vadd.f32 %v6281, %v6293
    %v6295 = vpop.f32.mrf.mxu0
    %6296 = vdwg.mxu0
    %6297 = vmatpush.bf16.msra.mxu0 %v5433
    %6298 = vmatpush.bf16.msra.mxu0 %v5426
    %6299 = vmatpush.bf16.msra.mxu0 %v5419
    %6300 = vmatpush.bf16.msra.mxu0 %v5412
    %6301 = vmatpush.bf16.msra.mxu0 %v5405
    %6302 = vmatpush.bf16.msra.mxu0 %v5398
    %6303 = vmatpush.bf16.msra.mxu0 %v5391
    %6304 = vmatpush.bf16.msra.mxu0 %v5384
    %6305 = vmatmul.bf16.gmra.mxu0 %v3330
    %v6306 = vpop.f32.mrf.mxu0
    %v6307 = vadd.f32 %v6294, %v6306
    %v6308 = vpop.f32.mrf.mxu0
    %6309 = vdwg.mxu0
    %6310 = vmatpush.bf16.msra.mxu0 %v5489
    %6311 = vmatpush.bf16.msra.mxu0 %v5482
    %6312 = vmatpush.bf16.msra.mxu0 %v5475
    %6313 = vmatpush.bf16.msra.mxu0 %v5468
    %6314 = vmatpush.bf16.msra.mxu0 %v5461
    %6315 = vmatpush.bf16.msra.mxu0 %v5454
    %6316 = vmatpush.bf16.msra.mxu0 %v5447
    %6317 = vmatpush.bf16.msra.mxu0 %v5440
    %6318 = vmatmul.bf16.gmra.mxu0 %v3331
    %v6319 = vpop.f32.mrf.mxu0
    %v6320 = vadd.f32 %v6307, %v6319
    %v6321 = vpop.f32.mrf.mxu0
    %6322 = vdwg.mxu0
    %6323 = vmatpush.bf16.msra.mxu0 %v5545
    %6324 = vmatpush.bf16.msra.mxu0 %v5538
    %6325 = vmatpush.bf16.msra.mxu0 %v5531
    %6326 = vmatpush.bf16.msra.mxu0 %v5524
    %6327 = vmatpush.bf16.msra.mxu0 %v5517
    %6328 = vmatpush.bf16.msra.mxu0 %v5510
    %6329 = vmatpush.bf16.msra.mxu0 %v5503
    %6330 = vmatpush.bf16.msra.mxu0 %v5496
    %6331 = vmatmul.bf16.gmra.mxu0 %v3332
    %v6332 = vpop.f32.mrf.mxu0
    %v6333 = vadd.f32 %v6320, %v6332
    %v6334 = vpop.f32.mrf.mxu0
    %6335 = vdwg.mxu0
    %6336 = vmatpush.bf16.msra.mxu0 %v5601
    %6337 = vmatpush.bf16.msra.mxu0 %v5594
    %6338 = vmatpush.bf16.msra.mxu0 %v5587
    %6339 = vmatpush.bf16.msra.mxu0 %v5580
    %6340 = vmatpush.bf16.msra.mxu0 %v5573
    %6341 = vmatpush.bf16.msra.mxu0 %v5566
    %6342 = vmatpush.bf16.msra.mxu0 %v5559
    %6343 = vmatpush.bf16.msra.mxu0 %v5552
    %6344 = vmatmul.bf16.gmra.mxu0 %v3333
    %v6345 = vpop.f32.mrf.mxu0
    %v6346 = vadd.f32 %v6333, %v6345
    %v6347 = vpop.f32.mrf.mxu0
    %6348 = vdwg.mxu0
    %6349 = vmatpush.bf16.msra.mxu0 %v5657
    %6350 = vmatpush.bf16.msra.mxu0 %v5650
    %6351 = vmatpush.bf16.msra.mxu0 %v5643
    %6352 = vmatpush.bf16.msra.mxu0 %v5636
    %6353 = vmatpush.bf16.msra.mxu0 %v5629
    %6354 = vmatpush.bf16.msra.mxu0 %v5622
    %6355 = vmatpush.bf16.msra.mxu0 %v5615
    %6356 = vmatpush.bf16.msra.mxu0 %v5608
    %6357 = vmatmul.bf16.gmra.mxu0 %v3334
    %v6358 = vpop.f32.mrf.mxu0
    %v6359 = vadd.f32 %v6346, %v6358
    %v6360 = vpop.f32.mrf.mxu0
    %6361 = vdwg.mxu0
    %6362 = vmatpush.bf16.msra.mxu0 %v5713
    %6363 = vmatpush.bf16.msra.mxu0 %v5706
    %6364 = vmatpush.bf16.msra.mxu0 %v5699
    %6365 = vmatpush.bf16.msra.mxu0 %v5692
    %6366 = vmatpush.bf16.msra.mxu0 %v5685
    %6367 = vmatpush.bf16.msra.mxu0 %v5678
    %6368 = vmatpush.bf16.msra.mxu0 %v5671
    %6369 = vmatpush.bf16.msra.mxu0 %v5664
    %6370 = vmatmul.bf16.gmra.mxu0 %v3335
    %v6371 = vpop.f32.mrf.mxu0
    %v6372 = vadd.f32 %v6359, %v6371
    %v6373 = vpop.f32.mrf.mxu0
    %6374 = vdwg.mxu0
    %6375 = vmatpush.bf16.msra.mxu0 %v5322
    %6376 = vmatpush.bf16.msra.mxu0 %v5315
    %6377 = vmatpush.bf16.msra.mxu0 %v5308
    %6378 = vmatpush.bf16.msra.mxu0 %v5301
    %6379 = vmatpush.bf16.msra.mxu0 %v5294
    %6380 = vmatpush.bf16.msra.mxu0 %v5287
    %6381 = vmatpush.bf16.msra.mxu0 %v5280
    %6382 = vmatpush.bf16.msra.mxu0 %v5273
    %6383 = vmatmul.bf16.gmra.mxu0 %v3328
    %v6384 = vpop.f32.mrf.mxu0
    %v6385 = vadd.f32 %v3851, %v6384
    %v6386 = vpop.f32.mrf.mxu0
    %6387 = vdwg.mxu0
    %6388 = vmatpush.bf16.msra.mxu0 %v5378
    %6389 = vmatpush.bf16.msra.mxu0 %v5371
    %6390 = vmatpush.bf16.msra.mxu0 %v5364
    %6391 = vmatpush.bf16.msra.mxu0 %v5357
    %6392 = vmatpush.bf16.msra.mxu0 %v5350
    %6393 = vmatpush.bf16.msra.mxu0 %v5343
    %6394 = vmatpush.bf16.msra.mxu0 %v5336
    %6395 = vmatpush.bf16.msra.mxu0 %v5329
    %6396 = vmatmul.bf16.gmra.mxu0 %v3329
    %v6397 = vpop.f32.mrf.mxu0
    %v6398 = vadd.f32 %v6385, %v6397
    %v6399 = vpop.f32.mrf.mxu0
    %6400 = vdwg.mxu0
    %6401 = vmatpush.bf16.msra.mxu0 %v5434
    %6402 = vmatpush.bf16.msra.mxu0 %v5427
    %6403 = vmatpush.bf16.msra.mxu0 %v5420
    %6404 = vmatpush.bf16.msra.mxu0 %v5413
    %6405 = vmatpush.bf16.msra.mxu0 %v5406
    %6406 = vmatpush.bf16.msra.mxu0 %v5399
    %6407 = vmatpush.bf16.msra.mxu0 %v5392
    %6408 = vmatpush.bf16.msra.mxu0 %v5385
    %6409 = vmatmul.bf16.gmra.mxu0 %v3330
    %v6410 = vpop.f32.mrf.mxu0
    %v6411 = vadd.f32 %v6398, %v6410
    %v6412 = vpop.f32.mrf.mxu0
    %6413 = vdwg.mxu0
    %6414 = vmatpush.bf16.msra.mxu0 %v5490
    %6415 = vmatpush.bf16.msra.mxu0 %v5483
    %6416 = vmatpush.bf16.msra.mxu0 %v5476
    %6417 = vmatpush.bf16.msra.mxu0 %v5469
    %6418 = vmatpush.bf16.msra.mxu0 %v5462
    %6419 = vmatpush.bf16.msra.mxu0 %v5455
    %6420 = vmatpush.bf16.msra.mxu0 %v5448
    %6421 = vmatpush.bf16.msra.mxu0 %v5441
    %6422 = vmatmul.bf16.gmra.mxu0 %v3331
    %v6423 = vpop.f32.mrf.mxu0
    %v6424 = vadd.f32 %v6411, %v6423
    %v6425 = vpop.f32.mrf.mxu0
    %6426 = vdwg.mxu0
    %6427 = vmatpush.bf16.msra.mxu0 %v5546
    %6428 = vmatpush.bf16.msra.mxu0 %v5539
    %6429 = vmatpush.bf16.msra.mxu0 %v5532
    %6430 = vmatpush.bf16.msra.mxu0 %v5525
    %6431 = vmatpush.bf16.msra.mxu0 %v5518
    %6432 = vmatpush.bf16.msra.mxu0 %v5511
    %6433 = vmatpush.bf16.msra.mxu0 %v5504
    %6434 = vmatpush.bf16.msra.mxu0 %v5497
    %6435 = vmatmul.bf16.gmra.mxu0 %v3332
    %v6436 = vpop.f32.mrf.mxu0
    %v6437 = vadd.f32 %v6424, %v6436
    %v6438 = vpop.f32.mrf.mxu0
    %6439 = vdwg.mxu0
    %6440 = vmatpush.bf16.msra.mxu0 %v5602
    %6441 = vmatpush.bf16.msra.mxu0 %v5595
    %6442 = vmatpush.bf16.msra.mxu0 %v5588
    %6443 = vmatpush.bf16.msra.mxu0 %v5581
    %6444 = vmatpush.bf16.msra.mxu0 %v5574
    %6445 = vmatpush.bf16.msra.mxu0 %v5567
    %6446 = vmatpush.bf16.msra.mxu0 %v5560
    %6447 = vmatpush.bf16.msra.mxu0 %v5553
    %6448 = vmatmul.bf16.gmra.mxu0 %v3333
    %v6449 = vpop.f32.mrf.mxu0
    %v6450 = vadd.f32 %v6437, %v6449
    %v6451 = vpop.f32.mrf.mxu0
    %6452 = vdwg.mxu0
    %6453 = vmatpush.bf16.msra.mxu0 %v5658
    %6454 = vmatpush.bf16.msra.mxu0 %v5651
    %6455 = vmatpush.bf16.msra.mxu0 %v5644
    %6456 = vmatpush.bf16.msra.mxu0 %v5637
    %6457 = vmatpush.bf16.msra.mxu0 %v5630
    %6458 = vmatpush.bf16.msra.mxu0 %v5623
    %6459 = vmatpush.bf16.msra.mxu0 %v5616
    %6460 = vmatpush.bf16.msra.mxu0 %v5609
    %6461 = vmatmul.bf16.gmra.mxu0 %v3334
    %v6462 = vpop.f32.mrf.mxu0
    %v6463 = vadd.f32 %v6450, %v6462
    %v6464 = vpop.f32.mrf.mxu0
    %6465 = vdwg.mxu0
    %6466 = vmatpush.bf16.msra.mxu0 %v5714
    %6467 = vmatpush.bf16.msra.mxu0 %v5707
    %6468 = vmatpush.bf16.msra.mxu0 %v5700
    %6469 = vmatpush.bf16.msra.mxu0 %v5693
    %6470 = vmatpush.bf16.msra.mxu0 %v5686
    %6471 = vmatpush.bf16.msra.mxu0 %v5679
    %6472 = vmatpush.bf16.msra.mxu0 %v5672
    %6473 = vmatpush.bf16.msra.mxu0 %v5665
    %6474 = vmatmul.bf16.gmra.mxu0 %v3335
    %v6475 = vpop.f32.mrf.mxu0
    %v6476 = vadd.f32 %v6463, %v6475
    %v6477 = vpop.f32.mrf.mxu0
    %6478 = vdwg.mxu0
    %6479 = vmatpush.bf16.msra.mxu0 %v5323
    %6480 = vmatpush.bf16.msra.mxu0 %v5316
    %6481 = vmatpush.bf16.msra.mxu0 %v5309
    %6482 = vmatpush.bf16.msra.mxu0 %v5302
    %6483 = vmatpush.bf16.msra.mxu0 %v5295
    %6484 = vmatpush.bf16.msra.mxu0 %v5288
    %6485 = vmatpush.bf16.msra.mxu0 %v5281
    %6486 = vmatpush.bf16.msra.mxu0 %v5274
    %6487 = vmatmul.bf16.gmra.mxu0 %v3328
    %v6488 = vpop.f32.mrf.mxu0
    %v6489 = vadd.f32 %v3852, %v6488
    %v6490 = vpop.f32.mrf.mxu0
    %6491 = vdwg.mxu0
    %6492 = vmatpush.bf16.msra.mxu0 %v5379
    %6493 = vmatpush.bf16.msra.mxu0 %v5372
    %6494 = vmatpush.bf16.msra.mxu0 %v5365
    %6495 = vmatpush.bf16.msra.mxu0 %v5358
    %6496 = vmatpush.bf16.msra.mxu0 %v5351
    %6497 = vmatpush.bf16.msra.mxu0 %v5344
    %6498 = vmatpush.bf16.msra.mxu0 %v5337
    %6499 = vmatpush.bf16.msra.mxu0 %v5330
    %6500 = vmatmul.bf16.gmra.mxu0 %v3329
    %v6501 = vpop.f32.mrf.mxu0
    %v6502 = vadd.f32 %v6489, %v6501
    %v6503 = vpop.f32.mrf.mxu0
    %6504 = vdwg.mxu0
    %6505 = vmatpush.bf16.msra.mxu0 %v5435
    %6506 = vmatpush.bf16.msra.mxu0 %v5428
    %6507 = vmatpush.bf16.msra.mxu0 %v5421
    %6508 = vmatpush.bf16.msra.mxu0 %v5414
    %6509 = vmatpush.bf16.msra.mxu0 %v5407
    %6510 = vmatpush.bf16.msra.mxu0 %v5400
    %6511 = vmatpush.bf16.msra.mxu0 %v5393
    %6512 = vmatpush.bf16.msra.mxu0 %v5386
    %6513 = vmatmul.bf16.gmra.mxu0 %v3330
    %v6514 = vpop.f32.mrf.mxu0
    %v6515 = vadd.f32 %v6502, %v6514
    %v6516 = vpop.f32.mrf.mxu0
    %6517 = vdwg.mxu0
    %6518 = vmatpush.bf16.msra.mxu0 %v5491
    %6519 = vmatpush.bf16.msra.mxu0 %v5484
    %6520 = vmatpush.bf16.msra.mxu0 %v5477
    %6521 = vmatpush.bf16.msra.mxu0 %v5470
    %6522 = vmatpush.bf16.msra.mxu0 %v5463
    %6523 = vmatpush.bf16.msra.mxu0 %v5456
    %6524 = vmatpush.bf16.msra.mxu0 %v5449
    %6525 = vmatpush.bf16.msra.mxu0 %v5442
    %6526 = vmatmul.bf16.gmra.mxu0 %v3331
    %v6527 = vpop.f32.mrf.mxu0
    %v6528 = vadd.f32 %v6515, %v6527
    %v6529 = vpop.f32.mrf.mxu0
    %6530 = vdwg.mxu0
    %6531 = vmatpush.bf16.msra.mxu0 %v5547
    %6532 = vmatpush.bf16.msra.mxu0 %v5540
    %6533 = vmatpush.bf16.msra.mxu0 %v5533
    %6534 = vmatpush.bf16.msra.mxu0 %v5526
    %6535 = vmatpush.bf16.msra.mxu0 %v5519
    %6536 = vmatpush.bf16.msra.mxu0 %v5512
    %6537 = vmatpush.bf16.msra.mxu0 %v5505
    %6538 = vmatpush.bf16.msra.mxu0 %v5498
    %6539 = vmatmul.bf16.gmra.mxu0 %v3332
    %v6540 = vpop.f32.mrf.mxu0
    %v6541 = vadd.f32 %v6528, %v6540
    %v6542 = vpop.f32.mrf.mxu0
    %6543 = vdwg.mxu0
    %6544 = vmatpush.bf16.msra.mxu0 %v5603
    %6545 = vmatpush.bf16.msra.mxu0 %v5596
    %6546 = vmatpush.bf16.msra.mxu0 %v5589
    %6547 = vmatpush.bf16.msra.mxu0 %v5582
    %6548 = vmatpush.bf16.msra.mxu0 %v5575
    %6549 = vmatpush.bf16.msra.mxu0 %v5568
    %6550 = vmatpush.bf16.msra.mxu0 %v5561
    %6551 = vmatpush.bf16.msra.mxu0 %v5554
    %6552 = vmatmul.bf16.gmra.mxu0 %v3333
    %v6553 = vpop.f32.mrf.mxu0
    %v6554 = vadd.f32 %v6541, %v6553
    %v6555 = vpop.f32.mrf.mxu0
    %6556 = vdwg.mxu0
    %6557 = vmatpush.bf16.msra.mxu0 %v5659
    %6558 = vmatpush.bf16.msra.mxu0 %v5652
    %6559 = vmatpush.bf16.msra.mxu0 %v5645
    %6560 = vmatpush.bf16.msra.mxu0 %v5638
    %6561 = vmatpush.bf16.msra.mxu0 %v5631
    %6562 = vmatpush.bf16.msra.mxu0 %v5624
    %6563 = vmatpush.bf16.msra.mxu0 %v5617
    %6564 = vmatpush.bf16.msra.mxu0 %v5610
    %6565 = vmatmul.bf16.gmra.mxu0 %v3334
    %v6566 = vpop.f32.mrf.mxu0
    %v6567 = vadd.f32 %v6554, %v6566
    %v6568 = vpop.f32.mrf.mxu0
    %6569 = vdwg.mxu0
    %6570 = vmatpush.bf16.msra.mxu0 %v5715
    %6571 = vmatpush.bf16.msra.mxu0 %v5708
    %6572 = vmatpush.bf16.msra.mxu0 %v5701
    %6573 = vmatpush.bf16.msra.mxu0 %v5694
    %6574 = vmatpush.bf16.msra.mxu0 %v5687
    %6575 = vmatpush.bf16.msra.mxu0 %v5680
    %6576 = vmatpush.bf16.msra.mxu0 %v5673
    %6577 = vmatpush.bf16.msra.mxu0 %v5666
    %6578 = vmatmul.bf16.gmra.mxu0 %v3335
    %v6579 = vpop.f32.mrf.mxu0
    %v6580 = vadd.f32 %v6567, %v6579
    %v6581 = vpop.f32.mrf.mxu0
    %6582 = vdwg.mxu0
    %6583 = vmatpush.bf16.msra.mxu0 %v5324
    %6584 = vmatpush.bf16.msra.mxu0 %v5317
    %6585 = vmatpush.bf16.msra.mxu0 %v5310
    %6586 = vmatpush.bf16.msra.mxu0 %v5303
    %6587 = vmatpush.bf16.msra.mxu0 %v5296
    %6588 = vmatpush.bf16.msra.mxu0 %v5289
    %6589 = vmatpush.bf16.msra.mxu0 %v5282
    %6590 = vmatpush.bf16.msra.mxu0 %v5275
    %6591 = vmatmul.bf16.gmra.mxu0 %v3328
    %v6592 = vpop.f32.mrf.mxu0
    %v6593 = vadd.f32 %v3853, %v6592
    %v6594 = vpop.f32.mrf.mxu0
    %6595 = vdwg.mxu0
    %6596 = vmatpush.bf16.msra.mxu0 %v5380
    %6597 = vmatpush.bf16.msra.mxu0 %v5373
    %6598 = vmatpush.bf16.msra.mxu0 %v5366
    %6599 = vmatpush.bf16.msra.mxu0 %v5359
    %6600 = vmatpush.bf16.msra.mxu0 %v5352
    %6601 = vmatpush.bf16.msra.mxu0 %v5345
    %6602 = vmatpush.bf16.msra.mxu0 %v5338
    %6603 = vmatpush.bf16.msra.mxu0 %v5331
    %6604 = vmatmul.bf16.gmra.mxu0 %v3329
    %v6605 = vpop.f32.mrf.mxu0
    %v6606 = vadd.f32 %v6593, %v6605
    %v6607 = vpop.f32.mrf.mxu0
    %6608 = vdwg.mxu0
    %6609 = vmatpush.bf16.msra.mxu0 %v5436
    %6610 = vmatpush.bf16.msra.mxu0 %v5429
    %6611 = vmatpush.bf16.msra.mxu0 %v5422
    %6612 = vmatpush.bf16.msra.mxu0 %v5415
    %6613 = vmatpush.bf16.msra.mxu0 %v5408
    %6614 = vmatpush.bf16.msra.mxu0 %v5401
    %6615 = vmatpush.bf16.msra.mxu0 %v5394
    %6616 = vmatpush.bf16.msra.mxu0 %v5387
    %6617 = vmatmul.bf16.gmra.mxu0 %v3330
    %v6618 = vpop.f32.mrf.mxu0
    %v6619 = vadd.f32 %v6606, %v6618
    %v6620 = vpop.f32.mrf.mxu0
    %6621 = vdwg.mxu0
    %6622 = vmatpush.bf16.msra.mxu0 %v5492
    %6623 = vmatpush.bf16.msra.mxu0 %v5485
    %6624 = vmatpush.bf16.msra.mxu0 %v5478
    %6625 = vmatpush.bf16.msra.mxu0 %v5471
    %6626 = vmatpush.bf16.msra.mxu0 %v5464
    %6627 = vmatpush.bf16.msra.mxu0 %v5457
    %6628 = vmatpush.bf16.msra.mxu0 %v5450
    %6629 = vmatpush.bf16.msra.mxu0 %v5443
    %6630 = vmatmul.bf16.gmra.mxu0 %v3331
    %v6631 = vpop.f32.mrf.mxu0
    %v6632 = vadd.f32 %v6619, %v6631
    %v6633 = vpop.f32.mrf.mxu0
    %6634 = vdwg.mxu0
    %6635 = vmatpush.bf16.msra.mxu0 %v5548
    %6636 = vmatpush.bf16.msra.mxu0 %v5541
    %6637 = vmatpush.bf16.msra.mxu0 %v5534
    %6638 = vmatpush.bf16.msra.mxu0 %v5527
    %6639 = vmatpush.bf16.msra.mxu0 %v5520
    %6640 = vmatpush.bf16.msra.mxu0 %v5513
    %6641 = vmatpush.bf16.msra.mxu0 %v5506
    %6642 = vmatpush.bf16.msra.mxu0 %v5499
    %6643 = vmatmul.bf16.gmra.mxu0 %v3332
    %v6644 = vpop.f32.mrf.mxu0
    %v6645 = vadd.f32 %v6632, %v6644
    %v6646 = vpop.f32.mrf.mxu0
    %6647 = vdwg.mxu0
    %6648 = vmatpush.bf16.msra.mxu0 %v5604
    %6649 = vmatpush.bf16.msra.mxu0 %v5597
    %6650 = vmatpush.bf16.msra.mxu0 %v5590
    %6651 = vmatpush.bf16.msra.mxu0 %v5583
    %6652 = vmatpush.bf16.msra.mxu0 %v5576
    %6653 = vmatpush.bf16.msra.mxu0 %v5569
    %6654 = vmatpush.bf16.msra.mxu0 %v5562
    %6655 = vmatpush.bf16.msra.mxu0 %v5555
    %6656 = vmatmul.bf16.gmra.mxu0 %v3333
    %v6657 = vpop.f32.mrf.mxu0
    %v6658 = vadd.f32 %v6645, %v6657
    %v6659 = vpop.f32.mrf.mxu0
    %6660 = vdwg.mxu0
    %6661 = vmatpush.bf16.msra.mxu0 %v5660
    %6662 = vmatpush.bf16.msra.mxu0 %v5653
    %6663 = vmatpush.bf16.msra.mxu0 %v5646
    %6664 = vmatpush.bf16.msra.mxu0 %v5639
    %6665 = vmatpush.bf16.msra.mxu0 %v5632
    %6666 = vmatpush.bf16.msra.mxu0 %v5625
    %6667 = vmatpush.bf16.msra.mxu0 %v5618
    %6668 = vmatpush.bf16.msra.mxu0 %v5611
    %6669 = vmatmul.bf16.gmra.mxu0 %v3334
    %v6670 = vpop.f32.mrf.mxu0
    %v6671 = vadd.f32 %v6658, %v6670
    %v6672 = vpop.f32.mrf.mxu0
    %6673 = vdwg.mxu0
    %6674 = vmatpush.bf16.msra.mxu0 %v5716
    %6675 = vmatpush.bf16.msra.mxu0 %v5709
    %6676 = vmatpush.bf16.msra.mxu0 %v5702
    %6677 = vmatpush.bf16.msra.mxu0 %v5695
    %6678 = vmatpush.bf16.msra.mxu0 %v5688
    %6679 = vmatpush.bf16.msra.mxu0 %v5681
    %6680 = vmatpush.bf16.msra.mxu0 %v5674
    %6681 = vmatpush.bf16.msra.mxu0 %v5667
    %6682 = vmatmul.bf16.gmra.mxu0 %v3335
    %v6683 = vpop.f32.mrf.mxu0
    %v6684 = vadd.f32 %v6671, %v6683
    %v6685 = vpop.f32.mrf.mxu0
    %6686 = vdwg.mxu0
    %6687 = vmatpush.bf16.msra.mxu0 %v5325
    %6688 = vmatpush.bf16.msra.mxu0 %v5318
    %6689 = vmatpush.bf16.msra.mxu0 %v5311
    %6690 = vmatpush.bf16.msra.mxu0 %v5304
    %6691 = vmatpush.bf16.msra.mxu0 %v5297
    %6692 = vmatpush.bf16.msra.mxu0 %v5290
    %6693 = vmatpush.bf16.msra.mxu0 %v5283
    %6694 = vmatpush.bf16.msra.mxu0 %v5276
    %6695 = vmatmul.bf16.gmra.mxu0 %v3328
    %v6696 = vpop.f32.mrf.mxu0
    %v6697 = vadd.f32 %v3854, %v6696
    %v6698 = vpop.f32.mrf.mxu0
    %6699 = vdwg.mxu0
    %6700 = vmatpush.bf16.msra.mxu0 %v5381
    %6701 = vmatpush.bf16.msra.mxu0 %v5374
    %6702 = vmatpush.bf16.msra.mxu0 %v5367
    %6703 = vmatpush.bf16.msra.mxu0 %v5360
    %6704 = vmatpush.bf16.msra.mxu0 %v5353
    %6705 = vmatpush.bf16.msra.mxu0 %v5346
    %6706 = vmatpush.bf16.msra.mxu0 %v5339
    %6707 = vmatpush.bf16.msra.mxu0 %v5332
    %6708 = vmatmul.bf16.gmra.mxu0 %v3329
    %v6709 = vpop.f32.mrf.mxu0
    %v6710 = vadd.f32 %v6697, %v6709
    %v6711 = vpop.f32.mrf.mxu0
    %6712 = vdwg.mxu0
    %6713 = vmatpush.bf16.msra.mxu0 %v5437
    %6714 = vmatpush.bf16.msra.mxu0 %v5430
    %6715 = vmatpush.bf16.msra.mxu0 %v5423
    %6716 = vmatpush.bf16.msra.mxu0 %v5416
    %6717 = vmatpush.bf16.msra.mxu0 %v5409
    %6718 = vmatpush.bf16.msra.mxu0 %v5402
    %6719 = vmatpush.bf16.msra.mxu0 %v5395
    %6720 = vmatpush.bf16.msra.mxu0 %v5388
    %6721 = vmatmul.bf16.gmra.mxu0 %v3330
    %v6722 = vpop.f32.mrf.mxu0
    %v6723 = vadd.f32 %v6710, %v6722
    %v6724 = vpop.f32.mrf.mxu0
    %6725 = vdwg.mxu0
    %6726 = vmatpush.bf16.msra.mxu0 %v5493
    %6727 = vmatpush.bf16.msra.mxu0 %v5486
    %6728 = vmatpush.bf16.msra.mxu0 %v5479
    %6729 = vmatpush.bf16.msra.mxu0 %v5472
    %6730 = vmatpush.bf16.msra.mxu0 %v5465
    %6731 = vmatpush.bf16.msra.mxu0 %v5458
    %6732 = vmatpush.bf16.msra.mxu0 %v5451
    %6733 = vmatpush.bf16.msra.mxu0 %v5444
    %6734 = vmatmul.bf16.gmra.mxu0 %v3331
    %v6735 = vpop.f32.mrf.mxu0
    %v6736 = vadd.f32 %v6723, %v6735
    %v6737 = vpop.f32.mrf.mxu0
    %6738 = vdwg.mxu0
    %6739 = vmatpush.bf16.msra.mxu0 %v5549
    %6740 = vmatpush.bf16.msra.mxu0 %v5542
    %6741 = vmatpush.bf16.msra.mxu0 %v5535
    %6742 = vmatpush.bf16.msra.mxu0 %v5528
    %6743 = vmatpush.bf16.msra.mxu0 %v5521
    %6744 = vmatpush.bf16.msra.mxu0 %v5514
    %6745 = vmatpush.bf16.msra.mxu0 %v5507
    %6746 = vmatpush.bf16.msra.mxu0 %v5500
    %6747 = vmatmul.bf16.gmra.mxu0 %v3332
    %v6748 = vpop.f32.mrf.mxu0
    %v6749 = vadd.f32 %v6736, %v6748
    %v6750 = vpop.f32.mrf.mxu0
    %6751 = vdwg.mxu0
    %6752 = vmatpush.bf16.msra.mxu0 %v5605
    %6753 = vmatpush.bf16.msra.mxu0 %v5598
    %6754 = vmatpush.bf16.msra.mxu0 %v5591
    %6755 = vmatpush.bf16.msra.mxu0 %v5584
    %6756 = vmatpush.bf16.msra.mxu0 %v5577
    %6757 = vmatpush.bf16.msra.mxu0 %v5570
    %6758 = vmatpush.bf16.msra.mxu0 %v5563
    %6759 = vmatpush.bf16.msra.mxu0 %v5556
    %6760 = vmatmul.bf16.gmra.mxu0 %v3333
    %v6761 = vpop.f32.mrf.mxu0
    %v6762 = vadd.f32 %v6749, %v6761
    %v6763 = vpop.f32.mrf.mxu0
    %6764 = vdwg.mxu0
    %6765 = vmatpush.bf16.msra.mxu0 %v5661
    %6766 = vmatpush.bf16.msra.mxu0 %v5654
    %6767 = vmatpush.bf16.msra.mxu0 %v5647
    %6768 = vmatpush.bf16.msra.mxu0 %v5640
    %6769 = vmatpush.bf16.msra.mxu0 %v5633
    %6770 = vmatpush.bf16.msra.mxu0 %v5626
    %6771 = vmatpush.bf16.msra.mxu0 %v5619
    %6772 = vmatpush.bf16.msra.mxu0 %v5612
    %6773 = vmatmul.bf16.gmra.mxu0 %v3334
    %v6774 = vpop.f32.mrf.mxu0
    %v6775 = vadd.f32 %v6762, %v6774
    %v6776 = vpop.f32.mrf.mxu0
    %6777 = vdwg.mxu0
    %6778 = vmatpush.bf16.msra.mxu0 %v5717
    %6779 = vmatpush.bf16.msra.mxu0 %v5710
    %6780 = vmatpush.bf16.msra.mxu0 %v5703
    %6781 = vmatpush.bf16.msra.mxu0 %v5696
    %6782 = vmatpush.bf16.msra.mxu0 %v5689
    %6783 = vmatpush.bf16.msra.mxu0 %v5682
    %6784 = vmatpush.bf16.msra.mxu0 %v5675
    %6785 = vmatpush.bf16.msra.mxu0 %v5668
    %6786 = vmatmul.bf16.gmra.mxu0 %v3335
    %v6787 = vpop.f32.mrf.mxu0
    %v6788 = vadd.f32 %v6775, %v6787
    %v6789 = vpop.f32.mrf.mxu0
    %6790 = vdwg.mxu0
    %6791 = vmatpush.bf16.msra.mxu0 %v5326
    %6792 = vmatpush.bf16.msra.mxu0 %v5319
    %6793 = vmatpush.bf16.msra.mxu0 %v5312
    %6794 = vmatpush.bf16.msra.mxu0 %v5305
    %6795 = vmatpush.bf16.msra.mxu0 %v5298
    %6796 = vmatpush.bf16.msra.mxu0 %v5291
    %6797 = vmatpush.bf16.msra.mxu0 %v5284
    %6798 = vmatpush.bf16.msra.mxu0 %v5277
    %6799 = vmatmul.bf16.gmra.mxu0 %v3328
    %v6800 = vpop.f32.mrf.mxu0
    %v6801 = vadd.f32 %v3855, %v6800
    %v6802 = vpop.f32.mrf.mxu0
    %6803 = vdwg.mxu0
    %6804 = vmatpush.bf16.msra.mxu0 %v5382
    %6805 = vmatpush.bf16.msra.mxu0 %v5375
    %6806 = vmatpush.bf16.msra.mxu0 %v5368
    %6807 = vmatpush.bf16.msra.mxu0 %v5361
    %6808 = vmatpush.bf16.msra.mxu0 %v5354
    %6809 = vmatpush.bf16.msra.mxu0 %v5347
    %6810 = vmatpush.bf16.msra.mxu0 %v5340
    %6811 = vmatpush.bf16.msra.mxu0 %v5333
    %6812 = vmatmul.bf16.gmra.mxu0 %v3329
    %v6813 = vpop.f32.mrf.mxu0
    %v6814 = vadd.f32 %v6801, %v6813
    %v6815 = vpop.f32.mrf.mxu0
    %6816 = vdwg.mxu0
    %6817 = vmatpush.bf16.msra.mxu0 %v5438
    %6818 = vmatpush.bf16.msra.mxu0 %v5431
    %6819 = vmatpush.bf16.msra.mxu0 %v5424
    %6820 = vmatpush.bf16.msra.mxu0 %v5417
    %6821 = vmatpush.bf16.msra.mxu0 %v5410
    %6822 = vmatpush.bf16.msra.mxu0 %v5403
    %6823 = vmatpush.bf16.msra.mxu0 %v5396
    %6824 = vmatpush.bf16.msra.mxu0 %v5389
    %6825 = vmatmul.bf16.gmra.mxu0 %v3330
    %v6826 = vpop.f32.mrf.mxu0
    %v6827 = vadd.f32 %v6814, %v6826
    %v6828 = vpop.f32.mrf.mxu0
    %6829 = vdwg.mxu0
    %6830 = vmatpush.bf16.msra.mxu0 %v5494
    %6831 = vmatpush.bf16.msra.mxu0 %v5487
    %6832 = vmatpush.bf16.msra.mxu0 %v5480
    %6833 = vmatpush.bf16.msra.mxu0 %v5473
    %6834 = vmatpush.bf16.msra.mxu0 %v5466
    %6835 = vmatpush.bf16.msra.mxu0 %v5459
    %6836 = vmatpush.bf16.msra.mxu0 %v5452
    %6837 = vmatpush.bf16.msra.mxu0 %v5445
    %6838 = vmatmul.bf16.gmra.mxu0 %v3331
    %v6839 = vpop.f32.mrf.mxu0
    %v6840 = vadd.f32 %v6827, %v6839
    %v6841 = vpop.f32.mrf.mxu0
    %6842 = vdwg.mxu0
    %6843 = vmatpush.bf16.msra.mxu0 %v5550
    %6844 = vmatpush.bf16.msra.mxu0 %v5543
    %6845 = vmatpush.bf16.msra.mxu0 %v5536
    %6846 = vmatpush.bf16.msra.mxu0 %v5529
    %6847 = vmatpush.bf16.msra.mxu0 %v5522
    %6848 = vmatpush.bf16.msra.mxu0 %v5515
    %6849 = vmatpush.bf16.msra.mxu0 %v5508
    %6850 = vmatpush.bf16.msra.mxu0 %v5501
    %6851 = vmatmul.bf16.gmra.mxu0 %v3332
    %v6852 = vpop.f32.mrf.mxu0
    %v6853 = vadd.f32 %v6840, %v6852
    %v6854 = vpop.f32.mrf.mxu0
    %6855 = vdwg.mxu0
    %6856 = vmatpush.bf16.msra.mxu0 %v5606
    %6857 = vmatpush.bf16.msra.mxu0 %v5599
    %6858 = vmatpush.bf16.msra.mxu0 %v5592
    %6859 = vmatpush.bf16.msra.mxu0 %v5585
    %6860 = vmatpush.bf16.msra.mxu0 %v5578
    %6861 = vmatpush.bf16.msra.mxu0 %v5571
    %6862 = vmatpush.bf16.msra.mxu0 %v5564
    %6863 = vmatpush.bf16.msra.mxu0 %v5557
    %6864 = vmatmul.bf16.gmra.mxu0 %v3333
    %v6865 = vpop.f32.mrf.mxu0
    %v6866 = vadd.f32 %v6853, %v6865
    %v6867 = vpop.f32.mrf.mxu0
    %6868 = vdwg.mxu0
    %6869 = vmatpush.bf16.msra.mxu0 %v5662
    %6870 = vmatpush.bf16.msra.mxu0 %v5655
    %6871 = vmatpush.bf16.msra.mxu0 %v5648
    %6872 = vmatpush.bf16.msra.mxu0 %v5641
    %6873 = vmatpush.bf16.msra.mxu0 %v5634
    %6874 = vmatpush.bf16.msra.mxu0 %v5627
    %6875 = vmatpush.bf16.msra.mxu0 %v5620
    %6876 = vmatpush.bf16.msra.mxu0 %v5613
    %6877 = vmatmul.bf16.gmra.mxu0 %v3334
    %v6878 = vpop.f32.mrf.mxu0
    %v6879 = vadd.f32 %v6866, %v6878
    %v6880 = vpop.f32.mrf.mxu0
    %6881 = vdwg.mxu0
    %6882 = vmatpush.bf16.msra.mxu0 %v5718
    %6883 = vmatpush.bf16.msra.mxu0 %v5711
    %6884 = vmatpush.bf16.msra.mxu0 %v5704
    %6885 = vmatpush.bf16.msra.mxu0 %v5697
    %6886 = vmatpush.bf16.msra.mxu0 %v5690
    %6887 = vmatpush.bf16.msra.mxu0 %v5683
    %6888 = vmatpush.bf16.msra.mxu0 %v5676
    %6889 = vmatpush.bf16.msra.mxu0 %v5669
    %6890 = vmatmul.bf16.gmra.mxu0 %v3335
    %v6891 = vpop.f32.mrf.mxu0
    %v6892 = vadd.f32 %v6879, %v6891
    %v6893 = vpop.f32.mrf.mxu0
    %6894 = vdwg.mxu0
    %v6895 = vtanh.pop %v6268
    %v6896 = vtanh.pop %v6372
    %v6897 = vtanh.pop %v6476
    %v6898 = vtanh.pop %v6580
    %v6899 = vtanh.pop %v6684
    %v6900 = vtanh.pop %v6788
    %v6901 = vtanh.pop %v6892
    %6902 = vst [vmem:[#allocation14] sm:$0xff] %v6895
    %6903 = vst [vmem:[#allocation14 + $0x8] sm:$0xff] %v6896
    %6904 = vst [vmem:[#allocation14 + $0x10] sm:$0xff] %v6897
    %6905 = vst [vmem:[#allocation14 + $0x18] sm:$0xff] %v6898
    %6906 = vst [vmem:[#allocation14 + $0x20] sm:$0xff] %v6899
    %6907 = vst [vmem:[#allocation14 + $0x28] sm:$0xff] %v6900
    %6908 = vst [vmem:[#allocation14 + $0x30] sm:$0xff] %v6901
    // Predicated region
    $region58: #{generator_forward.1} parent=1 // pred_check
      _
    $region59: #{generator_forward.1} parent=1 // pred_check_branch
      %6910 = sbr.rel (0) target = $region61
    $region60: #{generator_forward.1} parent=1 // pred_region
      %6912 = vsyncadd [#allocation4], 0
      %s6914 = sshll.u32 [#allocation14], 4
      %s6915 = int_to_ptr.vmem [resolvable:$true] %s6914
      %s6916 = sshll.u32 %s7, 4
      %s6917 = int_to_ptr.hbm [resolvable:$true] %s6916
      %6919 = dma.vmem_to_hbm [thread:$0]  %s6915, 896, %s6917, [#allocation4]
    $region61: #{generator_forward.1} parent=1 // pred_fallthru
      _
    // Predicated region
    $region62: #{generator_forward.1} parent=1 // pred_check
      _
    $region63: #{generator_forward.1} parent=1 // pred_check_branch
      %6921 = sbr.rel (0) target = $region65
    $region64: #{generator_forward.1} parent=1 // pred_region
      %6923 = dma.done [#allocation4], 896
    $region65: #{generator_forward.1} parent=1 // pred_fallthru
      _
    %6924 = vsyncpa [#allocation3], 1
    %6925 = vsyncpa [#allocation6], 1
    %6926 = vsyncpa [#allocation9], 1
    %6927 = vsyncpa [#allocation12], 1
    %6928 = vsyncpa [#allocation4], 1

</llo_original>
